<compile_context>
chip_gen: v5e
topology: v5e:2x2
jax: 0.10.0
libtpu: 0.0.40
codegen_flags: <defaults>
</compile_context>

<pallas_src>
import functools

import jax
import jax.numpy as jnp
import numpy as np
from jax.experimental import pallas as pl
from jax.experimental.pallas import tpu as pltpu


# ----------------------------- Pallas kernel -------------------------------

def fused_cnn_kernel(p_ref, w1_ref, b1_ref, w2_ref, b2_ref, o_ref, flat_ref):
    """One batch tile of conv + bias + ReLU + maxpool + FC.

    p    : (49*TB, 64)   shared 6x6 input window per pool cell (36 taps,
                         zero-padded to 64 lanes); rows ordered r*TB + b
                         (r = pool cell, b = sample in tile).
    w1   : (64, 512)     conv weight expanded per pool offset: 4 groups of
                         128 lanes (channels 64..127 of each group are zero).
    b1   : (1, 128)      conv bias (lanes 64..127 zero).
    w2   : (6272, 10)    FC weight, row index r*128 + c (torch flatten order).
    b2   : (1, 10)
    o    : (TB, 10)      logits for this batch tile.
    flat : VMEM (TB, 6272) scratch for the pooled -> FC-operand re-layout.
    """
    tb = o_ref.shape[0]

    # Conv as ONE matmul producing all 4 pool-offset activations per cell.
    conv = jnp.dot(p_ref[...], w1_ref[...],
                   preferred_element_type=jnp.float32)            # (49*TB, 512)

    # 2x2 max-pool = max over the four 128-lane groups (vreg-aligned slices),
    # then bias + ReLU once (bias identical per group; ReLU/max commute).
    pooled = jnp.maximum(jnp.maximum(conv[:, 0:128], conv[:, 128:256]),
                         jnp.maximum(conv[:, 256:384], conv[:, 384:512]))
    pooled = jnp.maximum(pooled + b1_ref[...], 0.0)               # (49*TB, 128)

    # Re-layout (49*TB, 128) -> (TB, 49*128).  Rows are r-major within the
    # tile, so each pool cell r is a full sublane-tile slice: 49 bulk,
    # unmasked, 128-lane-aligned stores (constant in batch size).
    for r in range(49):
        flat_ref[:, r * 128:(r + 1) * 128] = pooled[r * tb:(r + 1) * tb, :]

    # FC: one MXU pass.  Padded channels are exactly 0 with 0 weights.
    o_ref[...] = (jnp.dot(flat_ref[...], w2_ref[...],
                          preferred_element_type=jnp.float32) + b2_ref[...])


# ------------------------- one-time parameter prep --------------------------

def prepare_params(W1, b1, W2, b2):
    """Hoisted weight re-layouts (run once, off the forward critical path)."""
    # Conv weight (64,1,5,5) -> (64, 4*128): for pool offset g = dy*2+dx and
    # channel c, tap (ky,kx) lives at 6x6-window row t = (ky+dy)*6 + (kx+dx).
    W1n = np.asarray(W1, np.float32)
    w1_big = np.zeros((64, 512), np.float32)          # rows: 36 taps, pad to 64
    for dy in range(2):
        for dx in range(2):
            g = dy * 2 + dx
            for ky in range(5):
                for kx in range(5):
                    t = (ky + dy) * 6 + (kx + dx)
                    w1_big[t, g * 128:g * 128 + 64] = W1n[:, 0, ky, kx]

    b1_p = np.zeros((1, 128), np.float32)
    b1_p[0, :64] = np.asarray(b1, np.float32)

    # FC weight (10, 3136); torch flatten index is c*49 + r (r = ph*7 + pw).
    # Kernel flatten lane index is r*128 + c  ->  w2_p[r*128 + c, n].
    W2n = np.asarray(W2, np.float32)
    w2_rcn = np.transpose(W2n.reshape(10, 64, 49), (2, 1, 0))     # (49, 64, 10)
    w2_p = np.zeros((49, 128, 10), np.float32)
    w2_p[:, :64, :] = w2_rcn
    w2_p = w2_p.reshape(49 * 128, 10)

    b2_p = np.asarray(b2, np.float32).reshape(1, 10)
    return (jnp.asarray(w1_big), jnp.asarray(b1_p),
            jnp.asarray(w2_p), jnp.asarray(b2_p))


# ------------------------------- JAX glue ----------------------------------

def im2col_pool_windows(x_pad, block_b):
    """(B_pad, 18, 18) -> (B_pad*49, 64) patches.

    Each pooled output pixel (ph, pw) needs the shared 6x6 padded-input window
    x_pad[:, 2ph:2ph+6, 2pw:2pw+6] (36 taps, zero-padded to 64 lanes).  Rows
    are ordered (batch_tile, pool_cell, sample_in_tile) to match the kernel.
    """
    B = x_pad.shape[0]
    taps = []
    for ty in range(6):
        for tx in range(6):
            taps.append(x_pad[:, ty:ty + 13:2, tx:tx + 13:2])     # (B, 7, 7)
    a = jnp.stack(taps, axis=-1)                                  # (B, 7, 7, 36)
    a = a.reshape(B // block_b, block_b, 49, 36)                  # (tiles,b,r,36)
    a = jnp.transpose(a, (0, 2, 1, 3))                            # (tiles,r,b,36)
    a = a.reshape(B * 49, 36)
    return jnp.pad(a, ((0, 0), (0, 64 - 36)))                     # taps 36 -> 64


@functools.partial(jax.jit, static_argnames=("block_b",))
def basic_cnn_forward(x, w1_p, b1_p, w2_p, b2_p, block_b=8):
    """x: (B, 1, 16, 16) float32 NCHW, prepped params. Returns (B, 10)."""
    assert block_b % 8 == 0                      # keep all slices tile-aligned
    B = x.shape[0]
    n_tiles = -(-B // block_b)
    B_pad = n_tiles * block_b
    rows = 49 * block_b

    xb = x[:, 0]
    if B_pad != B:
        xb = jnp.pad(xb, ((0, B_pad - B), (0, 0), (0, 0)))
    x_pad = jnp.pad(xb, ((0, 0), (1, 1), (1, 1)))                 # (B_pad,18,18)
    patches = im2col_pool_windows(x_pad, block_b)                 # (B_pad*49,64)

    cost = pl.CostEstimate(
        flops=2 * B_pad * 49 * 64 * 512 + 2 * B_pad * 6272 * 10,
        transcendentals=0,
        bytes_accessed=4 * (B_pad * 49 * 64 + 64 * 512 + 128
                            + 6272 * 10 + 10 + B_pad * 10))

    logits = pl.pallas_call(
        fused_cnn_kernel,
        out_shape=jax.ShapeDtypeStruct((B_pad, 10), jnp.float32),
        grid_spec=pltpu.PrefetchScalarGridSpec(
            num_scalar_prefetch=0,
            grid=(n_tiles,),
            in_specs=[
                pl.BlockSpec((rows, 64), lambda i: (i, 0)),       # patches tile
                pl.BlockSpec((64, 512), lambda i: (0, 0)),        # w1 (resident)
                pl.BlockSpec((1, 128), lambda i: (0, 0)),         # b1 (resident)
                pl.BlockSpec((49 * 128, 10), lambda i: (0, 0)),   # w2 (resident)
                pl.BlockSpec((1, 10), lambda i: (0, 0)),          # b2 (resident)
            ],
            out_specs=pl.BlockSpec((block_b, 10), lambda i: (i, 0)),
            scratch_shapes=[pltpu.VMEM((block_b, 49 * 128), jnp.float32)],
        ),
        compiler_params=pltpu.CompilerParams(
            dimension_semantics=("parallel",),    # v7x: shard tiles across 2 TCs
            vmem_limit_bytes=32 * 1024 * 1024),   # explicit (v5e default is 16MiB)
        cost_estimate=cost,
    )(patches, w1_p, b1_p, w2_p, b2_p)
    return logits[:B]


# --------------------------- pure-JAX reference -----------------------------

def torch_reference(x, W1, b1, W2, b2):
    y = jax.lax.conv_general_dilated(
        x, W1, window_strides=(1, 1), padding=((1, 1), (1, 1)),
        dimension_numbers=("NCHW", "OIHW", "NCHW"))
    y = jnp.maximum(y + b1[None, :, None, None], 0.0)
    y = jax.lax.reduce_window(y, -jnp.inf, jax.lax.max,
                              (1, 1, 2, 2), (1, 1, 2, 2), "VALID")
    y = y.reshape(y.shape[0], -1)     # PyTorch view(-1, flat): (C,H,W) order
    return y @ W2.T + b2


# ---------------------------------- main ------------------------------------

if __name__ == "__main__":
    key = jax.random.PRNGKey(0)
    k1, k2, k3, k4, kx = jax.random.split(key, 5)

    # Shapes from BasicCNN.__init__ with input_shape=(16,16):
    # conv out 14x14 -> pool 7x7 -> flat_features = 64*7*7 = 3136, classes 10.
    W1 = 0.1 * jax.random.normal(k1, (64, 1, 5, 5), jnp.float32)
    b1 = 0.1 * jax.random.normal(k2, (64,), jnp.float32)
    W2 = 0.02 * jax.random.normal(k3, (10, 3136), jnp.float32)
    b2 = 0.1 * jax.random.normal(k4, (10,), jnp.float32)

    x = jax.random.normal(kx, (2, 1, 16, 16), jnp.float32)

    params = prepare_params(W1, b1, W2, b2)                 # one-time prep
    out = jax.block_until_ready(basic_cnn_forward(x, *params))
    ref = jax.block_until_ready(torch_reference(x, W1, b1, W2, b2))

    assert out.shape == (2, 10), out.shape
    assert jnp.allclose(out, ref, atol=1e-3, rtol=1e-3), (out, ref)
    print("KERNEL_OK")
</pallas_src>

<mosaic_0001>
module attributes {stable_mosaic.version = 11 : i64} {
  func.func @fused_cnn_kernel(%arg0: i32, %arg1: memref<392x64xf32, #tpu.memory_space<vmem>>, %arg2: memref<64x512xf32, #tpu.memory_space<vmem>>, %arg3: memref<1x128xf32, #tpu.memory_space<vmem>>, %arg4: memref<6272x10xf32, #tpu.memory_space<vmem>>, %arg5: memref<1x10xf32, #tpu.memory_space<vmem>>, %arg6: memref<8x10xf32, #tpu.memory_space<vmem>>, %arg7: memref<8x6272xf32, #tpu.memory_space<vmem>>) attributes {dimension_semantics = [#tpu.dimension_semantics<parallel>], iteration_bounds = array<i64: 1>, scalar_prefetch = 0 : i64, scratch_operands = 1 : i64, tpu.core_type = #tpu.core_type<tc>, window_params = [{transform_indices = @transform_0, window_bounds = array<i64: 392, 64>}, {pipeline_mode = #tpu.pipeline_mode<synchronous>, transform_indices = @transform_1, window_bounds = array<i64: 64, 512>}, {pipeline_mode = #tpu.pipeline_mode<synchronous>, transform_indices = @transform_2, window_bounds = array<i64: 1, 128>}, {pipeline_mode = #tpu.pipeline_mode<synchronous>, transform_indices = @transform_3, window_bounds = array<i64: 6272, 10>}, {pipeline_mode = #tpu.pipeline_mode<synchronous>, transform_indices = @transform_4, window_bounds = array<i64: 1, 10>}, {transform_indices = @transform_5, window_bounds = array<i64: 8, 10>}]} {
    %c0 = arith.constant 0 : index
    %c0_0 = arith.constant 0 : index
    %0 = vector.load %arg1[%c0, %c0_0] : memref<392x64xf32, #tpu.memory_space<vmem>>, vector<392x64xf32>
    %c0_1 = arith.constant 0 : index
    %c0_2 = arith.constant 0 : index
    %1 = vector.load %arg2[%c0_1, %c0_2] : memref<64x512xf32, #tpu.memory_space<vmem>>, vector<64x512xf32>
    %cst = arith.constant dense<0.000000e+00> : vector<392x512xf32>
    %2 = tpu.matmul %0, %1, %cst {dimension_numbers = #tpu.dot_dimension_numbers<[1], [0], [0], [1], [0, 0, 1, 1], [], []>} : vector<392x64xf32>, vector<64x512xf32>, vector<392x512xf32> -> vector<392x512xf32>
    %3 = vector.extract_strided_slice %2 {offsets = [0, 0], sizes = [392, 128], strides = [1, 1]} : vector<392x512xf32> to vector<392x128xf32>
    %4 = vector.extract_strided_slice %2 {offsets = [0, 128], sizes = [392, 128], strides = [1, 1]} : vector<392x512xf32> to vector<392x128xf32>
    %5 = arith.maximumf %3, %4 : vector<392x128xf32>
    %6 = vector.extract_strided_slice %2 {offsets = [0, 256], sizes = [392, 128], strides = [1, 1]} : vector<392x512xf32> to vector<392x128xf32>
    %7 = vector.extract_strided_slice %2 {offsets = [0, 384], sizes = [392, 128], strides = [1, 1]} : vector<392x512xf32> to vector<392x128xf32>
    %8 = arith.maximumf %6, %7 : vector<392x128xf32>
    %9 = arith.maximumf %5, %8 : vector<392x128xf32>
    %c0_3 = arith.constant 0 : index
    %c0_4 = arith.constant 0 : index
    %10 = vector.load %arg3[%c0_3, %c0_4] : memref<1x128xf32, #tpu.memory_space<vmem>>, vector<1x128xf32>
    %11 = vector.broadcast %10 : vector<1x128xf32> to vector<392x128xf32>
    %12 = arith.addf %9, %11 : vector<392x128xf32>
    %cst_5 = arith.constant 0.000000e+00 : f32
    %13 = vector.broadcast %cst_5 : f32 to vector<392x128xf32>
    %14 = arith.maximumf %12, %13 : vector<392x128xf32>
    %15 = vector.extract_strided_slice %14 {offsets = [0, 0], sizes = [8, 128], strides = [1, 1]} : vector<392x128xf32> to vector<8x128xf32>
    %c0_6 = arith.constant 0 : index
    %c0_7 = arith.constant 0 : index
    %16 = vector.load %arg7[%c0_6, %c0_7] : memref<8x6272xf32, #tpu.memory_space<vmem>>, vector<8x128xf32>
    tpu.vector_store %arg7[%c0_6, %c0_7], %15 {strides = array<i32>} : memref<8x6272xf32, #tpu.memory_space<vmem>>, vector<8x128xf32>,
    %17 = vector.extract_strided_slice %14 {offsets = [8, 0], sizes = [8, 128], strides = [1, 1]} : vector<392x128xf32> to vector<8x128xf32>
    %c0_8 = arith.constant 0 : index
    %c128 = arith.constant 128 : index
    %18 = vector.load %arg7[%c0_8, %c128] : memref<8x6272xf32, #tpu.memory_space<vmem>>, vector<8x128xf32>
    tpu.vector_store %arg7[%c0_8, %c128], %17 {strides = array<i32>} : memref<8x6272xf32, #tpu.memory_space<vmem>>, vector<8x128xf32>,
    %19 = vector.extract_strided_slice %14 {offsets = [16, 0], sizes = [8, 128], strides = [1, 1]} : vector<392x128xf32> to vector<8x128xf32>
    %c0_9 = arith.constant 0 : index
    %c256 = arith.constant 256 : index
    %20 = vector.load %arg7[%c0_9, %c256] : memref<8x6272xf32, #tpu.memory_space<vmem>>, vector<8x128xf32>
    tpu.vector_store %arg7[%c0_9, %c256], %19 {strides = array<i32>} : memref<8x6272xf32, #tpu.memory_space<vmem>>, vector<8x128xf32>,
    %21 = vector.extract_strided_slice %14 {offsets = [24, 0], sizes = [8, 128], strides = [1, 1]} : vector<392x128xf32> to vector<8x128xf32>
    %c0_10 = arith.constant 0 : index
    %c384 = arith.constant 384 : index
    %22 = vector.load %arg7[%c0_10, %c384] : memref<8x6272xf32, #tpu.memory_space<vmem>>, vector<8x128xf32>
    tpu.vector_store %arg7[%c0_10, %c384], %21 {strides = array<i32>} : memref<8x6272xf32, #tpu.memory_space<vmem>>, vector<8x128xf32>,
    %23 = vector.extract_strided_slice %14 {offsets = [32, 0], sizes = [8, 128], strides = [1, 1]} : vector<392x128xf32> to vector<8x128xf32>
    %c0_11 = arith.constant 0 : index
    %c512 = arith.constant 512 : index
    %24 = vector.load %arg7[%c0_11, %c512] : memref<8x6272xf32, #tpu.memory_space<vmem>>, vector<8x128xf32>
    tpu.vector_store %arg7[%c0_11, %c512], %23 {strides = array<i32>} : memref<8x6272xf32, #tpu.memory_space<vmem>>, vector<8x128xf32>,
    %25 = vector.extract_strided_slice %14 {offsets = [40, 0], sizes = [8, 128], strides = [1, 1]} : vector<392x128xf32> to vector<8x128xf32>
    %c0_12 = arith.constant 0 : index
    %c640 = arith.constant 640 : index
    %26 = vector.load %arg7[%c0_12, %c640] : memref<8x6272xf32, #tpu.memory_space<vmem>>, vector<8x128xf32>
    tpu.vector_store %arg7[%c0_12, %c640], %25 {strides = array<i32>} : memref<8x6272xf32, #tpu.memory_space<vmem>>, vector<8x128xf32>,
    %27 = vector.extract_strided_slice %14 {offsets = [48, 0], sizes = [8, 128], strides = [1, 1]} : vector<392x128xf32> to vector<8x128xf32>
    %c0_13 = arith.constant 0 : index
    %c768 = arith.constant 768 : index
    %28 = vector.load %arg7[%c0_13, %c768] : memref<8x6272xf32, #tpu.memory_space<vmem>>, vector<8x128xf32>
    tpu.vector_store %arg7[%c0_13, %c768], %27 {strides = array<i32>} : memref<8x6272xf32, #tpu.memory_space<vmem>>, vector<8x128xf32>,
    %29 = vector.extract_strided_slice %14 {offsets = [56, 0], sizes = [8, 128], strides = [1, 1]} : vector<392x128xf32> to vector<8x128xf32>
    %c0_14 = arith.constant 0 : index
    %c896 = arith.constant 896 : index
    %30 = vector.load %arg7[%c0_14, %c896] : memref<8x6272xf32, #tpu.memory_space<vmem>>, vector<8x128xf32>
    tpu.vector_store %arg7[%c0_14, %c896], %29 {strides = array<i32>} : memref<8x6272xf32, #tpu.memory_space<vmem>>, vector<8x128xf32>,
    %31 = vector.extract_strided_slice %14 {offsets = [64, 0], sizes = [8, 128], strides = [1, 1]} : vector<392x128xf32> to vector<8x128xf32>
    %c0_15 = arith.constant 0 : index
    %c1024 = arith.constant 1024 : index
    %32 = vector.load %arg7[%c0_15, %c1024] : memref<8x6272xf32, #tpu.memory_space<vmem>>, vector<8x128xf32>
    tpu.vector_store %arg7[%c0_15, %c1024], %31 {strides = array<i32>} : memref<8x6272xf32, #tpu.memory_space<vmem>>, vector<8x128xf32>,
    %33 = vector.extract_strided_slice %14 {offsets = [72, 0], sizes = [8, 128], strides = [1, 1]} : vector<392x128xf32> to vector<8x128xf32>
    %c0_16 = arith.constant 0 : index
    %c1152 = arith.constant 1152 : index
    %34 = vector.load %arg7[%c0_16, %c1152] : memref<8x6272xf32, #tpu.memory_space<vmem>>, vector<8x128xf32>
    tpu.vector_store %arg7[%c0_16, %c1152], %33 {strides = array<i32>} : memref<8x6272xf32, #tpu.memory_space<vmem>>, vector<8x128xf32>,
    %35 = vector.extract_strided_slice %14 {offsets = [80, 0], sizes = [8, 128], strides = [1, 1]} : vector<392x128xf32> to vector<8x128xf32>
    %c0_17 = arith.constant 0 : index
    %c1280 = arith.constant 1280 : index
    %36 = vector.load %arg7[%c0_17, %c1280] : memref<8x6272xf32, #tpu.memory_space<vmem>>, vector<8x128xf32>
    tpu.vector_store %arg7[%c0_17, %c1280], %35 {strides = array<i32>} : memref<8x6272xf32, #tpu.memory_space<vmem>>, vector<8x128xf32>,
    %37 = vector.extract_strided_slice %14 {offsets = [88, 0], sizes = [8, 128], strides = [1, 1]} : vector<392x128xf32> to vector<8x128xf32>
    %c0_18 = arith.constant 0 : index
    %c1408 = arith.constant 1408 : index
    %38 = vector.load %arg7[%c0_18, %c1408] : memref<8x6272xf32, #tpu.memory_space<vmem>>, vector<8x128xf32>
    tpu.vector_store %arg7[%c0_18, %c1408], %37 {strides = array<i32>} : memref<8x6272xf32, #tpu.memory_space<vmem>>, vector<8x128xf32>,
    %39 = vector.extract_strided_slice %14 {offsets = [96, 0], sizes = [8, 128], strides = [1, 1]} : vector<392x128xf32> to vector<8x128xf32>
    %c0_19 = arith.constant 0 : index
    %c1536 = arith.constant 1536 : index
    %40 = vector.load %arg7[%c0_19, %c1536] : memref<8x6272xf32, #tpu.memory_space<vmem>>, vector<8x128xf32>
    tpu.vector_store %arg7[%c0_19, %c1536], %39 {strides = array<i32>} : memref<8x6272xf32, #tpu.memory_space<vmem>>, vector<8x128xf32>,
    %41 = vector.extract_strided_slice %14 {offsets = [104, 0], sizes = [8, 128], strides = [1, 1]} : vector<392x128xf32> to vector<8x128xf32>
    %c0_20 = arith.constant 0 : index
    %c1664 = arith.constant 1664 : index
    %42 = vector.load %arg7[%c0_20, %c1664] : memref<8x6272xf32, #tpu.memory_space<vmem>>, vector<8x128xf32>
    tpu.vector_store %arg7[%c0_20, %c1664], %41 {strides = array<i32>} : memref<8x6272xf32, #tpu.memory_space<vmem>>, vector<8x128xf32>,
    %43 = vector.extract_strided_slice %14 {offsets = [112, 0], sizes = [8, 128], strides = [1, 1]} : vector<392x128xf32> to vector<8x128xf32>
    %c0_21 = arith.constant 0 : index
    %c1792 = arith.constant 1792 : index
    %44 = vector.load %arg7[%c0_21, %c1792] : memref<8x6272xf32, #tpu.memory_space<vmem>>, vector<8x128xf32>
    tpu.vector_store %arg7[%c0_21, %c1792], %43 {strides = array<i32>} : memref<8x6272xf32, #tpu.memory_space<vmem>>, vector<8x128xf32>,
    %45 = vector.extract_strided_slice %14 {offsets = [120, 0], sizes = [8, 128], strides = [1, 1]} : vector<392x128xf32> to vector<8x128xf32>
    %c0_22 = arith.constant 0 : index
    %c1920 = arith.constant 1920 : index
    %46 = vector.load %arg7[%c0_22, %c1920] : memref<8x6272xf32, #tpu.memory_space<vmem>>, vector<8x128xf32>
    tpu.vector_store %arg7[%c0_22, %c1920], %45 {strides = array<i32>} : memref<8x6272xf32, #tpu.memory_space<vmem>>, vector<8x128xf32>,
    %47 = vector.extract_strided_slice %14 {offsets = [128, 0], sizes = [8, 128], strides = [1, 1]} : vector<392x128xf32> to vector<8x128xf32>
    %c0_23 = arith.constant 0 : index
    %c2048 = arith.constant 2048 : index
    %48 = vector.load %arg7[%c0_23, %c2048] : memref<8x6272xf32, #tpu.memory_space<vmem>>, vector<8x128xf32>
    tpu.vector_store %arg7[%c0_23, %c2048], %47 {strides = array<i32>} : memref<8x6272xf32, #tpu.memory_space<vmem>>, vector<8x128xf32>,
    %49 = vector.extract_strided_slice %14 {offsets = [136, 0], sizes = [8, 128], strides = [1, 1]} : vector<392x128xf32> to vector<8x128xf32>
    %c0_24 = arith.constant 0 : index
    %c2176 = arith.constant 2176 : index
    %50 = vector.load %arg7[%c0_24, %c2176] : memref<8x6272xf32, #tpu.memory_space<vmem>>, vector<8x128xf32>
    tpu.vector_store %arg7[%c0_24, %c2176], %49 {strides = array<i32>} : memref<8x6272xf32, #tpu.memory_space<vmem>>, vector<8x128xf32>,
    %51 = vector.extract_strided_slice %14 {offsets = [144, 0], sizes = [8, 128], strides = [1, 1]} : vector<392x128xf32> to vector<8x128xf32>
    %c0_25 = arith.constant 0 : index
    %c2304 = arith.constant 2304 : index
    %52 = vector.load %arg7[%c0_25, %c2304] : memref<8x6272xf32, #tpu.memory_space<vmem>>, vector<8x128xf32>
    tpu.vector_store %arg7[%c0_25, %c2304], %51 {strides = array<i32>} : memref<8x6272xf32, #tpu.memory_space<vmem>>, vector<8x128xf32>,
    %53 = vector.extract_strided_slice %14 {offsets = [152, 0], sizes = [8, 128], strides = [1, 1]} : vector<392x128xf32> to vector<8x128xf32>
    %c0_26 = arith.constant 0 : index
    %c2432 = arith.constant 2432 : index
    %54 = vector.load %arg7[%c0_26, %c2432] : memref<8x6272xf32, #tpu.memory_space<vmem>>, vector<8x128xf32>
    tpu.vector_store %arg7[%c0_26, %c2432], %53 {strides = array<i32>} : memref<8x6272xf32, #tpu.memory_space<vmem>>, vector<8x128xf32>,
    %55 = vector.extract_strided_slice %14 {offsets = [160, 0], sizes = [8, 128], strides = [1, 1]} : vector<392x128xf32> to vector<8x128xf32>
    %c0_27 = arith.constant 0 : index
    %c2560 = arith.constant 2560 : index
    %56 = vector.load %arg7[%c0_27, %c2560] : memref<8x6272xf32, #tpu.memory_space<vmem>>, vector<8x128xf32>
    tpu.vector_store %arg7[%c0_27, %c2560], %55 {strides = array<i32>} : memref<8x6272xf32, #tpu.memory_space<vmem>>, vector<8x128xf32>,
    %57 = vector.extract_strided_slice %14 {offsets = [168, 0], sizes = [8, 128], strides = [1, 1]} : vector<392x128xf32> to vector<8x128xf32>
    %c0_28 = arith.constant 0 : index
    %c2688 = arith.constant 2688 : index
    %58 = vector.load %arg7[%c0_28, %c2688] : memref<8x6272xf32, #tpu.memory_space<vmem>>, vector<8x128xf32>
    tpu.vector_store %arg7[%c0_28, %c2688], %57 {strides = array<i32>} : memref<8x6272xf32, #tpu.memory_space<vmem>>, vector<8x128xf32>,
    %59 = vector.extract_strided_slice %14 {offsets = [176, 0], sizes = [8, 128], strides = [1, 1]} : vector<392x128xf32> to vector<8x128xf32>
    %c0_29 = arith.constant 0 : index
    %c2816 = arith.constant 2816 : index
    %60 = vector.load %arg7[%c0_29, %c2816] : memref<8x6272xf32, #tpu.memory_space<vmem>>, vector<8x128xf32>
    tpu.vector_store %arg7[%c0_29, %c2816], %59 {strides = array<i32>} : memref<8x6272xf32, #tpu.memory_space<vmem>>, vector<8x128xf32>,
    %61 = vector.extract_strided_slice %14 {offsets = [184, 0], sizes = [8, 128], strides = [1, 1]} : vector<392x128xf32> to vector<8x128xf32>
    %c0_30 = arith.constant 0 : index
    %c2944 = arith.constant 2944 : index
    %62 = vector.load %arg7[%c0_30, %c2944] : memref<8x6272xf32, #tpu.memory_space<vmem>>, vector<8x128xf32>
    tpu.vector_store %arg7[%c0_30, %c2944], %61 {strides = array<i32>} : memref<8x6272xf32, #tpu.memory_space<vmem>>, vector<8x128xf32>,
    %63 = vector.extract_strided_slice %14 {offsets = [192, 0], sizes = [8, 128], strides = [1, 1]} : vector<392x128xf32> to vector<8x128xf32>
    %c0_31 = arith.constant 0 : index
    %c3072 = arith.constant 3072 : index
    %64 = vector.load %arg7[%c0_31, %c3072] : memref<8x6272xf32, #tpu.memory_space<vmem>>, vector<8x128xf32>
    tpu.vector_store %arg7[%c0_31, %c3072], %63 {strides = array<i32>} : memref<8x6272xf32, #tpu.memory_space<vmem>>, vector<8x128xf32>,
    %65 = vector.extract_strided_slice %14 {offsets = [200, 0], sizes = [8, 128], strides = [1, 1]} : vector<392x128xf32> to vector<8x128xf32>
    %c0_32 = arith.constant 0 : index
    %c3200 = arith.constant 3200 : index
    %66 = vector.load %arg7[%c0_32, %c3200] : memref<8x6272xf32, #tpu.memory_space<vmem>>, vector<8x128xf32>
    tpu.vector_store %arg7[%c0_32, %c3200], %65 {strides = array<i32>} : memref<8x6272xf32, #tpu.memory_space<vmem>>, vector<8x128xf32>,
    %67 = vector.extract_strided_slice %14 {offsets = [208, 0], sizes = [8, 128], strides = [1, 1]} : vector<392x128xf32> to vector<8x128xf32>
    %c0_33 = arith.constant 0 : index
    %c3328 = arith.constant 3328 : index
    %68 = vector.load %arg7[%c0_33, %c3328] : memref<8x6272xf32, #tpu.memory_space<vmem>>, vector<8x128xf32>
    tpu.vector_store %arg7[%c0_33, %c3328], %67 {strides = array<i32>} : memref<8x6272xf32, #tpu.memory_space<vmem>>, vector<8x128xf32>,
    %69 = vector.extract_strided_slice %14 {offsets = [216, 0], sizes = [8, 128], strides = [1, 1]} : vector<392x128xf32> to vector<8x128xf32>
    %c0_34 = arith.constant 0 : index
    %c3456 = arith.constant 3456 : index
    %70 = vector.load %arg7[%c0_34, %c3456] : memref<8x6272xf32, #tpu.memory_space<vmem>>, vector<8x128xf32>
    tpu.vector_store %arg7[%c0_34, %c3456], %69 {strides = array<i32>} : memref<8x6272xf32, #tpu.memory_space<vmem>>, vector<8x128xf32>,
    %71 = vector.extract_strided_slice %14 {offsets = [224, 0], sizes = [8, 128], strides = [1, 1]} : vector<392x128xf32> to vector<8x128xf32>
    %c0_35 = arith.constant 0 : index
    %c3584 = arith.constant 3584 : index
    %72 = vector.load %arg7[%c0_35, %c3584] : memref<8x6272xf32, #tpu.memory_space<vmem>>, vector<8x128xf32>
    tpu.vector_store %arg7[%c0_35, %c3584], %71 {strides = array<i32>} : memref<8x6272xf32, #tpu.memory_space<vmem>>, vector<8x128xf32>,
    %73 = vector.extract_strided_slice %14 {offsets = [232, 0], sizes = [8, 128], strides = [1, 1]} : vector<392x128xf32> to vector<8x128xf32>
    %c0_36 = arith.constant 0 : index
    %c3712 = arith.constant 3712 : index
    %74 = vector.load %arg7[%c0_36, %c3712] : memref<8x6272xf32, #tpu.memory_space<vmem>>, vector<8x128xf32>
    tpu.vector_store %arg7[%c0_36, %c3712], %73 {strides = array<i32>} : memref<8x6272xf32, #tpu.memory_space<vmem>>, vector<8x128xf32>,
    %75 = vector.extract_strided_slice %14 {offsets = [240, 0], sizes = [8, 128], strides = [1, 1]} : vector<392x128xf32> to vector<8x128xf32>
    %c0_37 = arith.constant 0 : index
    %c3840 = arith.constant 3840 : index
    %76 = vector.load %arg7[%c0_37, %c3840] : memref<8x6272xf32, #tpu.memory_space<vmem>>, vector<8x128xf32>
    tpu.vector_store %arg7[%c0_37, %c3840], %75 {strides = array<i32>} : memref<8x6272xf32, #tpu.memory_space<vmem>>, vector<8x128xf32>,
    %77 = vector.extract_strided_slice %14 {offsets = [248, 0], sizes = [8, 128], strides = [1, 1]} : vector<392x128xf32> to vector<8x128xf32>
    %c0_38 = arith.constant 0 : index
    %c3968 = arith.constant 3968 : index
    %78 = vector.load %arg7[%c0_38, %c3968] : memref<8x6272xf32, #tpu.memory_space<vmem>>, vector<8x128xf32>
    tpu.vector_store %arg7[%c0_38, %c3968], %77 {strides = array<i32>} : memref<8x6272xf32, #tpu.memory_space<vmem>>, vector<8x128xf32>,
    %79 = vector.extract_strided_slice %14 {offsets = [256, 0], sizes = [8, 128], strides = [1, 1]} : vector<392x128xf32> to vector<8x128xf32>
    %c0_39 = arith.constant 0 : index
    %c4096 = arith.constant 4096 : index
    %80 = vector.load %arg7[%c0_39, %c4096] : memref<8x6272xf32, #tpu.memory_space<vmem>>, vector<8x128xf32>
    tpu.vector_store %arg7[%c0_39, %c4096], %79 {strides = array<i32>} : memref<8x6272xf32, #tpu.memory_space<vmem>>, vector<8x128xf32>,
    %81 = vector.extract_strided_slice %14 {offsets = [264, 0], sizes = [8, 128], strides = [1, 1]} : vector<392x128xf32> to vector<8x128xf32>
    %c0_40 = arith.constant 0 : index
    %c4224 = arith.constant 4224 : index
    %82 = vector.load %arg7[%c0_40, %c4224] : memref<8x6272xf32, #tpu.memory_space<vmem>>, vector<8x128xf32>
    tpu.vector_store %arg7[%c0_40, %c4224], %81 {strides = array<i32>} : memref<8x6272xf32, #tpu.memory_space<vmem>>, vector<8x128xf32>,
    %83 = vector.extract_strided_slice %14 {offsets = [272, 0], sizes = [8, 128], strides = [1, 1]} : vector<392x128xf32> to vector<8x128xf32>
    %c0_41 = arith.constant 0 : index
    %c4352 = arith.constant 4352 : index
    %84 = vector.load %arg7[%c0_41, %c4352] : memref<8x6272xf32, #tpu.memory_space<vmem>>, vector<8x128xf32>
    tpu.vector_store %arg7[%c0_41, %c4352], %83 {strides = array<i32>} : memref<8x6272xf32, #tpu.memory_space<vmem>>, vector<8x128xf32>,
    %85 = vector.extract_strided_slice %14 {offsets = [280, 0], sizes = [8, 128], strides = [1, 1]} : vector<392x128xf32> to vector<8x128xf32>
    %c0_42 = arith.constant 0 : index
    %c4480 = arith.constant 4480 : index
    %86 = vector.load %arg7[%c0_42, %c4480] : memref<8x6272xf32, #tpu.memory_space<vmem>>, vector<8x128xf32>
    tpu.vector_store %arg7[%c0_42, %c4480], %85 {strides = array<i32>} : memref<8x6272xf32, #tpu.memory_space<vmem>>, vector<8x128xf32>,
    %87 = vector.extract_strided_slice %14 {offsets = [288, 0], sizes = [8, 128], strides = [1, 1]} : vector<392x128xf32> to vector<8x128xf32>
    %c0_43 = arith.constant 0 : index
    %c4608 = arith.constant 4608 : index
    %88 = vector.load %arg7[%c0_43, %c4608] : memref<8x6272xf32, #tpu.memory_space<vmem>>, vector<8x128xf32>
    tpu.vector_store %arg7[%c0_43, %c4608], %87 {strides = array<i32>} : memref<8x6272xf32, #tpu.memory_space<vmem>>, vector<8x128xf32>,
    %89 = vector.extract_strided_slice %14 {offsets = [296, 0], sizes = [8, 128], strides = [1, 1]} : vector<392x128xf32> to vector<8x128xf32>
    %c0_44 = arith.constant 0 : index
    %c4736 = arith.constant 4736 : index
    %90 = vector.load %arg7[%c0_44, %c4736] : memref<8x6272xf32, #tpu.memory_space<vmem>>, vector<8x128xf32>
    tpu.vector_store %arg7[%c0_44, %c4736], %89 {strides = array<i32>} : memref<8x6272xf32, #tpu.memory_space<vmem>>, vector<8x128xf32>,
    %91 = vector.extract_strided_slice %14 {offsets = [304, 0], sizes = [8, 128], strides = [1, 1]} : vector<392x128xf32> to vector<8x128xf32>
    %c0_45 = arith.constant 0 : index
    %c4864 = arith.constant 4864 : index
    %92 = vector.load %arg7[%c0_45, %c4864] : memref<8x6272xf32, #tpu.memory_space<vmem>>, vector<8x128xf32>
    tpu.vector_store %arg7[%c0_45, %c4864], %91 {strides = array<i32>} : memref<8x6272xf32, #tpu.memory_space<vmem>>, vector<8x128xf32>,
    %93 = vector.extract_strided_slice %14 {offsets = [312, 0], sizes = [8, 128], strides = [1, 1]} : vector<392x128xf32> to vector<8x128xf32>
    %c0_46 = arith.constant 0 : index
    %c4992 = arith.constant 4992 : index
    %94 = vector.load %arg7[%c0_46, %c4992] : memref<8x6272xf32, #tpu.memory_space<vmem>>, vector<8x128xf32>
    tpu.vector_store %arg7[%c0_46, %c4992], %93 {strides = array<i32>} : memref<8x6272xf32, #tpu.memory_space<vmem>>, vector<8x128xf32>,
    %95 = vector.extract_strided_slice %14 {offsets = [320, 0], sizes = [8, 128], strides = [1, 1]} : vector<392x128xf32> to vector<8x128xf32>
    %c0_47 = arith.constant 0 : index
    %c5120 = arith.constant 5120 : index
    %96 = vector.load %arg7[%c0_47, %c5120] : memref<8x6272xf32, #tpu.memory_space<vmem>>, vector<8x128xf32>
    tpu.vector_store %arg7[%c0_47, %c5120], %95 {strides = array<i32>} : memref<8x6272xf32, #tpu.memory_space<vmem>>, vector<8x128xf32>,
    %97 = vector.extract_strided_slice %14 {offsets = [328, 0], sizes = [8, 128], strides = [1, 1]} : vector<392x128xf32> to vector<8x128xf32>
    %c0_48 = arith.constant 0 : index
    %c5248 = arith.constant 5248 : index
    %98 = vector.load %arg7[%c0_48, %c5248] : memref<8x6272xf32, #tpu.memory_space<vmem>>, vector<8x128xf32>
    tpu.vector_store %arg7[%c0_48, %c5248], %97 {strides = array<i32>} : memref<8x6272xf32, #tpu.memory_space<vmem>>, vector<8x128xf32>,
    %99 = vector.extract_strided_slice %14 {offsets = [336, 0], sizes = [8, 128], strides = [1, 1]} : vector<392x128xf32> to vector<8x128xf32>
    %c0_49 = arith.constant 0 : index
    %c5376 = arith.constant 5376 : index
    %100 = vector.load %arg7[%c0_49, %c5376] : memref<8x6272xf32, #tpu.memory_space<vmem>>, vector<8x128xf32>
    tpu.vector_store %arg7[%c0_49, %c5376], %99 {strides = array<i32>} : memref<8x6272xf32, #tpu.memory_space<vmem>>, vector<8x128xf32>,
    %101 = vector.extract_strided_slice %14 {offsets = [344, 0], sizes = [8, 128], strides = [1, 1]} : vector<392x128xf32> to vector<8x128xf32>
    %c0_50 = arith.constant 0 : index
    %c5504 = arith.constant 5504 : index
    %102 = vector.load %arg7[%c0_50, %c5504] : memref<8x6272xf32, #tpu.memory_space<vmem>>, vector<8x128xf32>
    tpu.vector_store %arg7[%c0_50, %c5504], %101 {strides = array<i32>} : memref<8x6272xf32, #tpu.memory_space<vmem>>, vector<8x128xf32>,
    %103 = vector.extract_strided_slice %14 {offsets = [352, 0], sizes = [8, 128], strides = [1, 1]} : vector<392x128xf32> to vector<8x128xf32>
    %c0_51 = arith.constant 0 : index
    %c5632 = arith.constant 5632 : index
    %104 = vector.load %arg7[%c0_51, %c5632] : memref<8x6272xf32, #tpu.memory_space<vmem>>, vector<8x128xf32>
    tpu.vector_store %arg7[%c0_51, %c5632], %103 {strides = array<i32>} : memref<8x6272xf32, #tpu.memory_space<vmem>>, vector<8x128xf32>,
    %105 = vector.extract_strided_slice %14 {offsets = [360, 0], sizes = [8, 128], strides = [1, 1]} : vector<392x128xf32> to vector<8x128xf32>
    %c0_52 = arith.constant 0 : index
    %c5760 = arith.constant 5760 : index
    %106 = vector.load %arg7[%c0_52, %c5760] : memref<8x6272xf32, #tpu.memory_space<vmem>>, vector<8x128xf32>
    tpu.vector_store %arg7[%c0_52, %c5760], %105 {strides = array<i32>} : memref<8x6272xf32, #tpu.memory_space<vmem>>, vector<8x128xf32>,
    %107 = vector.extract_strided_slice %14 {offsets = [368, 0], sizes = [8, 128], strides = [1, 1]} : vector<392x128xf32> to vector<8x128xf32>
    %c0_53 = arith.constant 0 : index
    %c5888 = arith.constant 5888 : index
    %108 = vector.load %arg7[%c0_53, %c5888] : memref<8x6272xf32, #tpu.memory_space<vmem>>, vector<8x128xf32>
    tpu.vector_store %arg7[%c0_53, %c5888], %107 {strides = array<i32>} : memref<8x6272xf32, #tpu.memory_space<vmem>>, vector<8x128xf32>,
    %109 = vector.extract_strided_slice %14 {offsets = [376, 0], sizes = [8, 128], strides = [1, 1]} : vector<392x128xf32> to vector<8x128xf32>
    %c0_54 = arith.constant 0 : index
    %c6016 = arith.constant 6016 : index
    %110 = vector.load %arg7[%c0_54, %c6016] : memref<8x6272xf32, #tpu.memory_space<vmem>>, vector<8x128xf32>
    tpu.vector_store %arg7[%c0_54, %c6016], %109 {strides = array<i32>} : memref<8x6272xf32, #tpu.memory_space<vmem>>, vector<8x128xf32>,
    %111 = vector.extract_strided_slice %14 {offsets = [384, 0], sizes = [8, 128], strides = [1, 1]} : vector<392x128xf32> to vector<8x128xf32>
    %c0_55 = arith.constant 0 : index
    %c6144 = arith.constant 6144 : index
    %112 = vector.load %arg7[%c0_55, %c6144] : memref<8x6272xf32, #tpu.memory_space<vmem>>, vector<8x128xf32>
    tpu.vector_store %arg7[%c0_55, %c6144], %111 {strides = array<i32>} : memref<8x6272xf32, #tpu.memory_space<vmem>>, vector<8x128xf32>,
    %c0_56 = arith.constant 0 : index
    %c0_57 = arith.constant 0 : index
    %113 = vector.load %arg7[%c0_56, %c0_57] : memref<8x6272xf32, #tpu.memory_space<vmem>>, vector<8x6272xf32>
    %c0_58 = arith.constant 0 : index
    %c0_59 = arith.constant 0 : index
    %114 = vector.load %arg4[%c0_58, %c0_59] : memref<6272x10xf32, #tpu.memory_space<vmem>>, vector<6272x10xf32>
    %cst_60 = arith.constant dense<0.000000e+00> : vector<8x10xf32>
    %115 = tpu.matmul %113, %114, %cst_60 {dimension_numbers = #tpu.dot_dimension_numbers<[1], [0], [0], [1], [0, 0, 1, 1], [], []>} : vector<8x6272xf32>, vector<6272x10xf32>, vector<8x10xf32> -> vector<8x10xf32>
    %c0_61 = arith.constant 0 : index
    %c0_62 = arith.constant 0 : index
    %116 = vector.load %arg5[%c0_61, %c0_62] : memref<1x10xf32, #tpu.memory_space<vmem>>, vector<1x10xf32>
    %117 = vector.broadcast %116 : vector<1x10xf32> to vector<8x10xf32>
    %118 = arith.addf %115, %117 : vector<8x10xf32>
    %c0_63 = arith.constant 0 : index
    %c0_64 = arith.constant 0 : index
    %119 = vector.load %arg6[%c0_63, %c0_64] : memref<8x10xf32, #tpu.memory_space<vmem>>, vector<8x10xf32>
    tpu.vector_store %arg6[%c0_63, %c0_64], %118 {strides = array<i32>} : memref<8x10xf32, #tpu.memory_space<vmem>>, vector<8x10xf32>,
    return
  }
  func.func @transform_0(%arg0: i32) -> (i32, i32) {
    %c0_i32 = arith.constant 0 : i32
    %c0_i32_0 = arith.constant 0 : i32
    return %arg0, %c0_i32 : i32, i32
  }
  func.func @transform_1(%arg0: i32) -> (i32, i32) {
    %c0_i32 = arith.constant 0 : i32
    %c0_i32_0 = arith.constant 0 : i32
    %c0_i32_1 = arith.constant 0 : i32
    return %c0_i32, %c0_i32_0 : i32, i32
  }
  func.func @transform_2(%arg0: i32) -> (i32, i32) {
    %c0_i32 = arith.constant 0 : i32
    %c0_i32_0 = arith.constant 0 : i32
    %c0_i32_1 = arith.constant 0 : i32
    return %c0_i32, %c0_i32_0 : i32, i32
  }
  func.func @transform_3(%arg0: i32) -> (i32, i32) {
    %c0_i32 = arith.constant 0 : i32
    %c0_i32_0 = arith.constant 0 : i32
    %c0_i32_1 = arith.constant 0 : i32
    return %c0_i32, %c0_i32_0 : i32, i32
  }
  func.func @transform_4(%arg0: i32) -> (i32, i32) {
    %c0_i32 = arith.constant 0 : i32
    %c0_i32_0 = arith.constant 0 : i32
    %c0_i32_1 = arith.constant 0 : i32
    return %c0_i32, %c0_i32_0 : i32, i32
  }
  func.func @transform_5(%arg0: i32) -> (i32, i32) {
    %c0_i32 = arith.constant 0 : i32
    %c0_i32_0 = arith.constant 0 : i32
    return %arg0, %c0_i32 : i32, i32
  }
}

</mosaic_0001>

<llo_original>
// kernel: basic_cnn_forward.1
$region0: #{basic_cnn_forward.1}
  #allocation0 [shape = 'u32[]', space=smem, size = 0x4, offset = 0x4, fixed_abs, tag = 'smem constant byte address 0x4 - core index']
  #allocation1 [shape = 'u32[72,128]{1,0:T(1,128)}', space=vmem, size = 0x9000, scoped, tag = 'internal scratch']
  #allocation2 [shape = 'f32[8,6272]{1,0:T(8,128)}', space=vmem, size = 0x31000, scoped, tag = 'scratch operand']
  %s0 = inlined_call_operand.vmem [shape: f32[392,64], index: 0, kind: input, shape index: {}]
  %s1 = inlined_call_operand.vmem [shape: f32[64,512], index: 1, kind: input, shape index: {}]
  %s2 = inlined_call_operand.vmem [shape: f32[1,128], index: 2, kind: input, shape index: {}]
  %s3 = inlined_call_operand.vmem [shape: f32[6272,10], index: 3, kind: input, shape index: {}]
  %s4 = inlined_call_operand.vmem [shape: f32[1,10], index: 4, kind: input, shape index: {}]
  %s5 = inlined_call_operand.vmem [shape: f32[8,10], index: 5, kind: output, shape index: {}]
  %s6 = sld [smem:[#allocation0]]
  $region30: #{basic_cnn_forward.1} parent=0
    _
  %s8 = ssub.s32 1, %s6
  %s9 = scalar_select 0, %s8, %s6
  // Predicated region
  $region2: #{basic_cnn_forward.1} parent=0 // pred_check
    _
  $region3: #{basic_cnn_forward.1} parent=0 // pred_check_branch
    %11 = sbr.rel (0) target = $region5
  $region4: #{basic_cnn_forward.1} parent=0 // pred_region
    _
  $region5: #{basic_cnn_forward.1} parent=0 // pred_fallthru
    _
  // Predicated region
  $region6: #{basic_cnn_forward.1} parent=0 // pred_check
    _
  $region7: #{basic_cnn_forward.1} parent=0 // pred_check_branch
    %13 = sbr.rel (0) target = $region9
  $region8: #{basic_cnn_forward.1} parent=0 // pred_region
    _
  $region9: #{basic_cnn_forward.1} parent=0 // pred_fallthru
    _
  // Predicated region
  $region10: #{basic_cnn_forward.1} parent=0 // pred_check
    _
  $region11: #{basic_cnn_forward.1} parent=0 // pred_check_branch
    %15 = sbr.rel (0) target = $region13
  $region12: #{basic_cnn_forward.1} parent=0 // pred_region
    _
  $region13: #{basic_cnn_forward.1} parent=0 // pred_fallthru
    _
  // Predicated region
  $region14: #{basic_cnn_forward.1} parent=0 // pred_check
    _
  $region15: #{basic_cnn_forward.1} parent=0 // pred_check_branch
    %17 = sbr.rel (0) target = $region17
  $region16: #{basic_cnn_forward.1} parent=0 // pred_region
    _
  $region17: #{basic_cnn_forward.1} parent=0 // pred_fallthru
    _
  // Predicated region
  $region18: #{basic_cnn_forward.1} parent=0 // pred_check
    _
  $region19: #{basic_cnn_forward.1} parent=0 // pred_check_branch
    %19 = sbr.rel (0) target = $region21
  $region20: #{basic_cnn_forward.1} parent=0 // pred_region
    _
  $region21: #{basic_cnn_forward.1} parent=0 // pred_fallthru
    _
  %v20 = vld [vmem:[%s0] sm:$0xff]
  %v21 = vld [vmem:[%s0 + $0x8] sm:$0xff]
  %v22 = vld [vmem:[%s0 + $0x10] sm:$0xff]
  %v23 = vld [vmem:[%s0 + $0x18] sm:$0xff]
  %v24 = vld [vmem:[%s0 + $0x20] sm:$0xff]
  %v25 = vld [vmem:[%s0 + $0x28] sm:$0xff]
  %v26 = vld [vmem:[%s0 + $0x30] sm:$0xff]
  %v27 = vld [vmem:[%s0 + $0x38] sm:$0xff]
  %v28 = vld [vmem:[%s0 + $0x40] sm:$0xff]
  %v29 = vld [vmem:[%s0 + $0x48] sm:$0xff]
  %v30 = vld [vmem:[%s0 + $0x50] sm:$0xff]
  %v31 = vld [vmem:[%s0 + $0x58] sm:$0xff]
  %v32 = vld [vmem:[%s0 + $0x60] sm:$0xff]
  %v33 = vld [vmem:[%s0 + $0x68] sm:$0xff]
  %v34 = vld [vmem:[%s0 + $0x70] sm:$0xff]
  %v35 = vld [vmem:[%s0 + $0x78] sm:$0xff]
  %v36 = vld [vmem:[%s0 + $0x80] sm:$0xff]
  %v37 = vld [vmem:[%s0 + $0x88] sm:$0xff]
  %v38 = vld [vmem:[%s0 + $0x90] sm:$0xff]
  %v39 = vld [vmem:[%s0 + $0x98] sm:$0xff]
  %v40 = vld [vmem:[%s0 + $0xa0] sm:$0xff]
  %v41 = vld [vmem:[%s0 + $0xa8] sm:$0xff]
  %v42 = vld [vmem:[%s0 + $0xb0] sm:$0xff]
  %v43 = vld [vmem:[%s0 + $0xb8] sm:$0xff]
  %v44 = vld [vmem:[%s0 + $0xc0] sm:$0xff]
  %v45 = vld [vmem:[%s0 + $0xc8] sm:$0xff]
  %v46 = vld [vmem:[%s0 + $0xd0] sm:$0xff]
  %v47 = vld [vmem:[%s0 + $0xd8] sm:$0xff]
  %v48 = vld [vmem:[%s0 + $0xe0] sm:$0xff]
  %v49 = vld [vmem:[%s0 + $0xe8] sm:$0xff]
  %v50 = vld [vmem:[%s0 + $0xf0] sm:$0xff]
  %v51 = vld [vmem:[%s0 + $0xf8] sm:$0xff]
  %v52 = vld [vmem:[%s0 + $0x100] sm:$0xff]
  %v53 = vld [vmem:[%s0 + $0x108] sm:$0xff]
  %v54 = vld [vmem:[%s0 + $0x110] sm:$0xff]
  %v55 = vld [vmem:[%s0 + $0x118] sm:$0xff]
  %v56 = vld [vmem:[%s0 + $0x120] sm:$0xff]
  %v57 = vld [vmem:[%s0 + $0x128] sm:$0xff]
  %v58 = vld [vmem:[%s0 + $0x130] sm:$0xff]
  %v59 = vld [vmem:[%s0 + $0x138] sm:$0xff]
  %v60 = vld [vmem:[%s0 + $0x140] sm:$0xff]
  %v61 = vld [vmem:[%s0 + $0x148] sm:$0xff]
  %v62 = vld [vmem:[%s0 + $0x150] sm:$0xff]
  %v63 = vld [vmem:[%s0 + $0x158] sm:$0xff]
  %v64 = vld [vmem:[%s0 + $0x160] sm:$0xff]
  %v65 = vld [vmem:[%s0 + $0x168] sm:$0xff]
  %v66 = vld [vmem:[%s0 + $0x170] sm:$0xff]
  %v67 = vld [vmem:[%s0 + $0x178] sm:$0xff]
  %v68 = vld [vmem:[%s0 + $0x180] sm:$0xff]
  %v69 = vld [vmem:[%s1] sm:$0xff]
  %v70 = vld [vmem:[%s1 + $0x8] sm:$0xff]
  %v71 = vld [vmem:[%s1 + $0x10] sm:$0xff]
  %v72 = vld [vmem:[%s1 + $0x18] sm:$0xff]
  %v73 = vld [vmem:[%s1 + $0x20] sm:$0xff]
  %v74 = vld [vmem:[%s1 + $0x28] sm:$0xff]
  %v75 = vld [vmem:[%s1 + $0x30] sm:$0xff]
  %v76 = vld [vmem:[%s1 + $0x38] sm:$0xff]
  %v77 = vld [vmem:[%s1 + $0x40] sm:$0xff]
  %v78 = vld [vmem:[%s1 + $0x48] sm:$0xff]
  %v79 = vld [vmem:[%s1 + $0x50] sm:$0xff]
  %v80 = vld [vmem:[%s1 + $0x58] sm:$0xff]
  %v81 = vld [vmem:[%s1 + $0x60] sm:$0xff]
  %v82 = vld [vmem:[%s1 + $0x68] sm:$0xff]
  %v83 = vld [vmem:[%s1 + $0x70] sm:$0xff]
  %v84 = vld [vmem:[%s1 + $0x78] sm:$0xff]
  %v85 = vld [vmem:[%s1 + $0x80] sm:$0xff]
  %v86 = vld [vmem:[%s1 + $0x88] sm:$0xff]
  %v87 = vld [vmem:[%s1 + $0x90] sm:$0xff]
  %v88 = vld [vmem:[%s1 + $0x98] sm:$0xff]
  %v89 = vld [vmem:[%s1 + $0xa0] sm:$0xff]
  %v90 = vld [vmem:[%s1 + $0xa8] sm:$0xff]
  %v91 = vld [vmem:[%s1 + $0xb0] sm:$0xff]
  %v92 = vld [vmem:[%s1 + $0xb8] sm:$0xff]
  %v93 = vld [vmem:[%s1 + $0xc0] sm:$0xff]
  %v94 = vld [vmem:[%s1 + $0xc8] sm:$0xff]
  %v95 = vld [vmem:[%s1 + $0xd0] sm:$0xff]
  %v96 = vld [vmem:[%s1 + $0xd8] sm:$0xff]
  %v97 = vld [vmem:[%s1 + $0xe0] sm:$0xff]
  %v98 = vld [vmem:[%s1 + $0xe8] sm:$0xff]
  %v99 = vld [vmem:[%s1 + $0xf0] sm:$0xff]
  %v100 = vld [vmem:[%s1 + $0xf8] sm:$0xff]
  %vm101 = vcmask 523264
  %v103 = vsel %vm101, %v20, 0
  %v106 = vsel %vm101, %v21, 0
  %v109 = vsel %vm101, %v22, 0
  %v112 = vsel %vm101, %v23, 0
  %v115 = vsel %vm101, %v24, 0
  %v118 = vsel %vm101, %v25, 0
  %v121 = vsel %vm101, %v26, 0
  %v124 = vsel %vm101, %v27, 0
  %v127 = vsel %vm101, %v28, 0
  %v130 = vsel %vm101, %v29, 0
  %v133 = vsel %vm101, %v30, 0
  %v136 = vsel %vm101, %v31, 0
  %v139 = vsel %vm101, %v32, 0
  %v142 = vsel %vm101, %v33, 0
  %v145 = vsel %vm101, %v34, 0
  %v148 = vsel %vm101, %v35, 0
  %v151 = vsel %vm101, %v36, 0
  %v154 = vsel %vm101, %v37, 0
  %v157 = vsel %vm101, %v38, 0
  %v160 = vsel %vm101, %v39, 0
  %v163 = vsel %vm101, %v40, 0
  %v166 = vsel %vm101, %v41, 0
  %v169 = vsel %vm101, %v42, 0
  %v172 = vsel %vm101, %v43, 0
  %v175 = vsel %vm101, %v44, 0
  %v178 = vsel %vm101, %v45, 0
  %v181 = vsel %vm101, %v46, 0
  %v184 = vsel %vm101, %v47, 0
  %v187 = vsel %vm101, %v48, 0
  %v190 = vsel %vm101, %v49, 0
  %v193 = vsel %vm101, %v50, 0
  %v196 = vsel %vm101, %v51, 0
  %v199 = vsel %vm101, %v52, 0
  %v202 = vsel %vm101, %v53, 0
  %v205 = vsel %vm101, %v54, 0
  %v208 = vsel %vm101, %v55, 0
  %v211 = vsel %vm101, %v56, 0
  %v214 = vsel %vm101, %v57, 0
  %v217 = vsel %vm101, %v58, 0
  %v220 = vsel %vm101, %v59, 0
  %v223 = vsel %vm101, %v60, 0
  %v226 = vsel %vm101, %v61, 0
  %v229 = vsel %vm101, %v62, 0
  %v232 = vsel %vm101, %v63, 0
  %v235 = vsel %vm101, %v64, 0
  %v238 = vsel %vm101, %v65, 0
  %v241 = vsel %vm101, %v66, 0
  %v244 = vsel %vm101, %v67, 0
  %v247 = vsel %vm101, %v68, 0
  %249 = vmatpush.msra.mxu0 0.0
  %250 = vmatpush.msra.mxu0 0.0
  %251 = vmatpush.msra.mxu0 0.0
  %252 = vmatpush.msra.mxu0 0.0
  %253 = vmatpush.msra.mxu0 0.0
  %254 = vmatpush.msra.mxu0 0.0
  %255 = vmatpush.msra.mxu0 0.0
  %256 = vmatpush.msra.mxu0 0.0
  %257 = vmatpush.msra.mxu0 %v97
  %258 = vmatpush.msra.mxu0 %v93
  %259 = vmatpush.msra.mxu0 %v89
  %260 = vmatpush.msra.mxu0 %v85
  %261 = vmatpush.msra.mxu0 %v81
  %262 = vmatpush.msra.mxu0 %v77
  %263 = vmatpush.msra.mxu0 %v73
  %264 = vmatpush.msra.mxu0 %v69
  %265 = vmatmul.f32.gmra.mxu0 %v103
  %v266 = vpop.f32.mrf.mxu0
  %v267 = vadd.f32 0.0, %v266
  %268 = vmatmul.f32.gmra.mxu0 %v106
  %v269 = vpop.f32.mrf.mxu0
  %v270 = vadd.f32 0.0, %v269
  %271 = vmatmul.f32.gmra.mxu0 %v109
  %v272 = vpop.f32.mrf.mxu0
  %v273 = vadd.f32 0.0, %v272
  %274 = vmatmul.f32.gmra.mxu0 %v112
  %v275 = vpop.f32.mrf.mxu0
  %v276 = vadd.f32 0.0, %v275
  %277 = vmatmul.f32.gmra.mxu0 %v115
  %v278 = vpop.f32.mrf.mxu0
  %v279 = vadd.f32 0.0, %v278
  %280 = vmatmul.f32.gmra.mxu0 %v118
  %v281 = vpop.f32.mrf.mxu0
  %v282 = vadd.f32 0.0, %v281
  %283 = vmatmul.f32.gmra.mxu0 %v121
  %v284 = vpop.f32.mrf.mxu0
  %v285 = vadd.f32 0.0, %v284
  %286 = vmatmul.f32.gmra.mxu0 %v124
  %v287 = vpop.f32.mrf.mxu0
  %v288 = vadd.f32 0.0, %v287
  %289 = vmatmul.f32.gmra.mxu0 %v127
  %v290 = vpop.f32.mrf.mxu0
  %v291 = vadd.f32 0.0, %v290
  %292 = vmatmul.f32.gmra.mxu0 %v130
  %v293 = vpop.f32.mrf.mxu0
  %v294 = vadd.f32 0.0, %v293
  %295 = vmatmul.f32.gmra.mxu0 %v133
  %v296 = vpop.f32.mrf.mxu0
  %v297 = vadd.f32 0.0, %v296
  %298 = vmatmul.f32.gmra.mxu0 %v136
  %v299 = vpop.f32.mrf.mxu0
  %v300 = vadd.f32 0.0, %v299
  %301 = vmatmul.f32.gmra.mxu0 %v139
  %v302 = vpop.f32.mrf.mxu0
  %v303 = vadd.f32 0.0, %v302
  %304 = vmatmul.f32.gmra.mxu0 %v142
  %v305 = vpop.f32.mrf.mxu0
  %v306 = vadd.f32 0.0, %v305
  %307 = vmatmul.f32.gmra.mxu0 %v145
  %v308 = vpop.f32.mrf.mxu0
  %v309 = vadd.f32 0.0, %v308
  %310 = vmatmul.f32.gmra.mxu0 %v148
  %v311 = vpop.f32.mrf.mxu0
  %v312 = vadd.f32 0.0, %v311
  %313 = vmatmul.f32.gmra.mxu0 %v151
  %v314 = vpop.f32.mrf.mxu0
  %v315 = vadd.f32 0.0, %v314
  %316 = vmatmul.f32.gmra.mxu0 %v154
  %v317 = vpop.f32.mrf.mxu0
  %v318 = vadd.f32 0.0, %v317
  %319 = vmatmul.f32.gmra.mxu0 %v157
  %v320 = vpop.f32.mrf.mxu0
  %v321 = vadd.f32 0.0, %v320
  %322 = vmatmul.f32.gmra.mxu0 %v160
  %v323 = vpop.f32.mrf.mxu0
  %v324 = vadd.f32 0.0, %v323
  %325 = vmatmul.f32.gmra.mxu0 %v163
  %v326 = vpop.f32.mrf.mxu0
  %v327 = vadd.f32 0.0, %v326
  %328 = vmatmul.f32.gmra.mxu0 %v166
  %v329 = vpop.f32.mrf.mxu0
  %v330 = vadd.f32 0.0, %v329
  %331 = vmatmul.f32.gmra.mxu0 %v169
  %v332 = vpop.f32.mrf.mxu0
  %v333 = vadd.f32 0.0, %v332
  %334 = vmatmul.f32.gmra.mxu0 %v172
  %v335 = vpop.f32.mrf.mxu0
  %v336 = vadd.f32 0.0, %v335
  %337 = vmatmul.f32.gmra.mxu0 %v175
  %v338 = vpop.f32.mrf.mxu0
  %v339 = vadd.f32 0.0, %v338
  %340 = vmatmul.f32.gmra.mxu0 %v178
  %v341 = vpop.f32.mrf.mxu0
  %v342 = vadd.f32 0.0, %v341
  %343 = vmatmul.f32.gmra.mxu0 %v181
  %v344 = vpop.f32.mrf.mxu0
  %v345 = vadd.f32 0.0, %v344
  %346 = vmatmul.f32.gmra.mxu0 %v184
  %v347 = vpop.f32.mrf.mxu0
  %v348 = vadd.f32 0.0, %v347
  %349 = vmatmul.f32.gmra.mxu0 %v187
  %v350 = vpop.f32.mrf.mxu0
  %v351 = vadd.f32 0.0, %v350
  %352 = vmatmul.f32.gmra.mxu0 %v190
  %v353 = vpop.f32.mrf.mxu0
  %v354 = vadd.f32 0.0, %v353
  %355 = vmatmul.f32.gmra.mxu0 %v193
  %v356 = vpop.f32.mrf.mxu0
  %v357 = vadd.f32 0.0, %v356
  %358 = vmatmul.f32.gmra.mxu0 %v196
  %v359 = vpop.f32.mrf.mxu0
  %v360 = vadd.f32 0.0, %v359
  %361 = vmatmul.f32.gmra.mxu0 %v199
  %v362 = vpop.f32.mrf.mxu0
  %v363 = vadd.f32 0.0, %v362
  %364 = vmatmul.f32.gmra.mxu0 %v202
  %v365 = vpop.f32.mrf.mxu0
  %v366 = vadd.f32 0.0, %v365
  %367 = vmatmul.f32.gmra.mxu0 %v205
  %v368 = vpop.f32.mrf.mxu0
  %v369 = vadd.f32 0.0, %v368
  %370 = vmatmul.f32.gmra.mxu0 %v208
  %v371 = vpop.f32.mrf.mxu0
  %v372 = vadd.f32 0.0, %v371
  %373 = vmatmul.f32.gmra.mxu0 %v211
  %v374 = vpop.f32.mrf.mxu0
  %v375 = vadd.f32 0.0, %v374
  %376 = vmatmul.f32.gmra.mxu0 %v214
  %v377 = vpop.f32.mrf.mxu0
  %v378 = vadd.f32 0.0, %v377
  %379 = vmatmul.f32.gmra.mxu0 %v217
  %v380 = vpop.f32.mrf.mxu0
  %v381 = vadd.f32 0.0, %v380
  %382 = vmatmul.f32.gmra.mxu0 %v220
  %v383 = vpop.f32.mrf.mxu0
  %v384 = vadd.f32 0.0, %v383
  %385 = vmatmul.f32.gmra.mxu0 %v223
  %v386 = vpop.f32.mrf.mxu0
  %v387 = vadd.f32 0.0, %v386
  %388 = vmatmul.f32.gmra.mxu0 %v226
  %v389 = vpop.f32.mrf.mxu0
  %v390 = vadd.f32 0.0, %v389
  %391 = vmatmul.f32.gmra.mxu0 %v229
  %v392 = vpop.f32.mrf.mxu0
  %v393 = vadd.f32 0.0, %v392
  %394 = vmatmul.f32.gmra.mxu0 %v232
  %v395 = vpop.f32.mrf.mxu0
  %v396 = vadd.f32 0.0, %v395
  %397 = vmatmul.f32.gmra.mxu0 %v235
  %v398 = vpop.f32.mrf.mxu0
  %v399 = vadd.f32 0.0, %v398
  %400 = vmatmul.f32.gmra.mxu0 %v238
  %v401 = vpop.f32.mrf.mxu0
  %v402 = vadd.f32 0.0, %v401
  %403 = vmatmul.f32.gmra.mxu0 %v241
  %v404 = vpop.f32.mrf.mxu0
  %v405 = vadd.f32 0.0, %v404
  %406 = vmatmul.f32.gmra.mxu0 %v244
  %v407 = vpop.f32.mrf.mxu0
  %v408 = vadd.f32 0.0, %v407
  %409 = vmatmul.f32.gmra.mxu0 %v247
  %v410 = vpop.f32.mrf.mxu0
  %v411 = vadd.f32 0.0, %v410
  %412 = vdwg.mxu0
  %413 = vmatpush.msra.mxu0 0.0
  %414 = vmatpush.msra.mxu0 0.0
  %415 = vmatpush.msra.mxu0 0.0
  %416 = vmatpush.msra.mxu0 0.0
  %417 = vmatpush.msra.mxu0 0.0
  %418 = vmatpush.msra.mxu0 0.0
  %419 = vmatpush.msra.mxu0 0.0
  %420 = vmatpush.msra.mxu0 0.0
  %421 = vmatpush.msra.mxu0 %v98
  %422 = vmatpush.msra.mxu0 %v94
  %423 = vmatpush.msra.mxu0 %v90
  %424 = vmatpush.msra.mxu0 %v86
  %425 = vmatpush.msra.mxu0 %v82
  %426 = vmatpush.msra.mxu0 %v78
  %427 = vmatpush.msra.mxu0 %v74
  %428 = vmatpush.msra.mxu0 %v70
  %429 = vmatmul.f32.gmra.mxu0 %v103
  %v430 = vpop.f32.mrf.mxu0
  %v431 = vadd.f32 0.0, %v430
  %432 = vmatmul.f32.gmra.mxu0 %v106
  %v433 = vpop.f32.mrf.mxu0
  %v434 = vadd.f32 0.0, %v433
  %435 = vmatmul.f32.gmra.mxu0 %v109
  %v436 = vpop.f32.mrf.mxu0
  %v437 = vadd.f32 0.0, %v436
  %438 = vmatmul.f32.gmra.mxu0 %v112
  %v439 = vpop.f32.mrf.mxu0
  %v440 = vadd.f32 0.0, %v439
  %441 = vmatmul.f32.gmra.mxu0 %v115
  %v442 = vpop.f32.mrf.mxu0
  %v443 = vadd.f32 0.0, %v442
  %444 = vmatmul.f32.gmra.mxu0 %v118
  %v445 = vpop.f32.mrf.mxu0
  %v446 = vadd.f32 0.0, %v445
  %447 = vmatmul.f32.gmra.mxu0 %v121
  %v448 = vpop.f32.mrf.mxu0
  %v449 = vadd.f32 0.0, %v448
  %450 = vmatmul.f32.gmra.mxu0 %v124
  %v451 = vpop.f32.mrf.mxu0
  %v452 = vadd.f32 0.0, %v451
  %453 = vmatmul.f32.gmra.mxu0 %v127
  %v454 = vpop.f32.mrf.mxu0
  %v455 = vadd.f32 0.0, %v454
  %456 = vmatmul.f32.gmra.mxu0 %v130
  %v457 = vpop.f32.mrf.mxu0
  %v458 = vadd.f32 0.0, %v457
  %459 = vmatmul.f32.gmra.mxu0 %v133
  %v460 = vpop.f32.mrf.mxu0
  %v461 = vadd.f32 0.0, %v460
  %462 = vmatmul.f32.gmra.mxu0 %v136
  %v463 = vpop.f32.mrf.mxu0
  %v464 = vadd.f32 0.0, %v463
  %465 = vmatmul.f32.gmra.mxu0 %v139
  %v466 = vpop.f32.mrf.mxu0
  %v467 = vadd.f32 0.0, %v466
  %468 = vmatmul.f32.gmra.mxu0 %v142
  %v469 = vpop.f32.mrf.mxu0
  %v470 = vadd.f32 0.0, %v469
  %471 = vmatmul.f32.gmra.mxu0 %v145
  %v472 = vpop.f32.mrf.mxu0
  %v473 = vadd.f32 0.0, %v472
  %474 = vmatmul.f32.gmra.mxu0 %v148
  %v475 = vpop.f32.mrf.mxu0
  %v476 = vadd.f32 0.0, %v475
  %477 = vmatmul.f32.gmra.mxu0 %v151
  %v478 = vpop.f32.mrf.mxu0
  %v479 = vadd.f32 0.0, %v478
  %480 = vmatmul.f32.gmra.mxu0 %v154
  %v481 = vpop.f32.mrf.mxu0
  %v482 = vadd.f32 0.0, %v481
  %483 = vmatmul.f32.gmra.mxu0 %v157
  %v484 = vpop.f32.mrf.mxu0
  %v485 = vadd.f32 0.0, %v484
  %486 = vmatmul.f32.gmra.mxu0 %v160
  %v487 = vpop.f32.mrf.mxu0
  %v488 = vadd.f32 0.0, %v487
  %489 = vmatmul.f32.gmra.mxu0 %v163
  %v490 = vpop.f32.mrf.mxu0
  %v491 = vadd.f32 0.0, %v490
  %492 = vmatmul.f32.gmra.mxu0 %v166
  %v493 = vpop.f32.mrf.mxu0
  %v494 = vadd.f32 0.0, %v493
  %495 = vmatmul.f32.gmra.mxu0 %v169
  %v496 = vpop.f32.mrf.mxu0
  %v497 = vadd.f32 0.0, %v496
  %498 = vmatmul.f32.gmra.mxu0 %v172
  %v499 = vpop.f32.mrf.mxu0
  %v500 = vadd.f32 0.0, %v499
  %501 = vmatmul.f32.gmra.mxu0 %v175
  %v502 = vpop.f32.mrf.mxu0
  %v503 = vadd.f32 0.0, %v502
  %504 = vmatmul.f32.gmra.mxu0 %v178
  %v505 = vpop.f32.mrf.mxu0
  %v506 = vadd.f32 0.0, %v505
  %507 = vmatmul.f32.gmra.mxu0 %v181
  %v508 = vpop.f32.mrf.mxu0
  %v509 = vadd.f32 0.0, %v508
  %510 = vmatmul.f32.gmra.mxu0 %v184
  %v511 = vpop.f32.mrf.mxu0
  %v512 = vadd.f32 0.0, %v511
  %513 = vmatmul.f32.gmra.mxu0 %v187
  %v514 = vpop.f32.mrf.mxu0
  %v515 = vadd.f32 0.0, %v514
  %516 = vmatmul.f32.gmra.mxu0 %v190
  %v517 = vpop.f32.mrf.mxu0
  %v518 = vadd.f32 0.0, %v517
  %519 = vmatmul.f32.gmra.mxu0 %v193
  %v520 = vpop.f32.mrf.mxu0
  %v521 = vadd.f32 0.0, %v520
  %522 = vmatmul.f32.gmra.mxu0 %v196
  %v523 = vpop.f32.mrf.mxu0
  %v524 = vadd.f32 0.0, %v523
  %525 = vmatmul.f32.gmra.mxu0 %v199
  %v526 = vpop.f32.mrf.mxu0
  %v527 = vadd.f32 0.0, %v526
  %528 = vmatmul.f32.gmra.mxu0 %v202
  %v529 = vpop.f32.mrf.mxu0
  %v530 = vadd.f32 0.0, %v529
  %531 = vmatmul.f32.gmra.mxu0 %v205
  %v532 = vpop.f32.mrf.mxu0
  %v533 = vadd.f32 0.0, %v532
  %534 = vmatmul.f32.gmra.mxu0 %v208
  %v535 = vpop.f32.mrf.mxu0
  %v536 = vadd.f32 0.0, %v535
  %537 = vmatmul.f32.gmra.mxu0 %v211
  %v538 = vpop.f32.mrf.mxu0
  %v539 = vadd.f32 0.0, %v538
  %540 = vmatmul.f32.gmra.mxu0 %v214
  %v541 = vpop.f32.mrf.mxu0
  %v542 = vadd.f32 0.0, %v541
  %543 = vmatmul.f32.gmra.mxu0 %v217
  %v544 = vpop.f32.mrf.mxu0
  %v545 = vadd.f32 0.0, %v544
  %546 = vmatmul.f32.gmra.mxu0 %v220
  %v547 = vpop.f32.mrf.mxu0
  %v548 = vadd.f32 0.0, %v547
  %549 = vmatmul.f32.gmra.mxu0 %v223
  %v550 = vpop.f32.mrf.mxu0
  %v551 = vadd.f32 0.0, %v550
  %552 = vmatmul.f32.gmra.mxu0 %v226
  %v553 = vpop.f32.mrf.mxu0
  %v554 = vadd.f32 0.0, %v553
  %555 = vmatmul.f32.gmra.mxu0 %v229
  %v556 = vpop.f32.mrf.mxu0
  %v557 = vadd.f32 0.0, %v556
  %558 = vmatmul.f32.gmra.mxu0 %v232
  %v559 = vpop.f32.mrf.mxu0
  %v560 = vadd.f32 0.0, %v559
  %561 = vmatmul.f32.gmra.mxu0 %v235
  %v562 = vpop.f32.mrf.mxu0
  %v563 = vadd.f32 0.0, %v562
  %564 = vmatmul.f32.gmra.mxu0 %v238
  %v565 = vpop.f32.mrf.mxu0
  %v566 = vadd.f32 0.0, %v565
  %567 = vmatmul.f32.gmra.mxu0 %v241
  %v568 = vpop.f32.mrf.mxu0
  %v569 = vadd.f32 0.0, %v568
  %570 = vmatmul.f32.gmra.mxu0 %v244
  %v571 = vpop.f32.mrf.mxu0
  %v572 = vadd.f32 0.0, %v571
  %573 = vmatmul.f32.gmra.mxu0 %v247
  %v574 = vpop.f32.mrf.mxu0
  %v575 = vadd.f32 0.0, %v574
  %576 = vdwg.mxu0
  %577 = vmatpush.msra.mxu0 0.0
  %578 = vmatpush.msra.mxu0 0.0
  %579 = vmatpush.msra.mxu0 0.0
  %580 = vmatpush.msra.mxu0 0.0
  %581 = vmatpush.msra.mxu0 0.0
  %582 = vmatpush.msra.mxu0 0.0
  %583 = vmatpush.msra.mxu0 0.0
  %584 = vmatpush.msra.mxu0 0.0
  %585 = vmatpush.msra.mxu0 %v99
  %586 = vmatpush.msra.mxu0 %v95
  %587 = vmatpush.msra.mxu0 %v91
  %588 = vmatpush.msra.mxu0 %v87
  %589 = vmatpush.msra.mxu0 %v83
  %590 = vmatpush.msra.mxu0 %v79
  %591 = vmatpush.msra.mxu0 %v75
  %592 = vmatpush.msra.mxu0 %v71
  %593 = vmatmul.f32.gmra.mxu0 %v103
  %v594 = vpop.f32.mrf.mxu0
  %v595 = vadd.f32 0.0, %v594
  %596 = vmatmul.f32.gmra.mxu0 %v106
  %v597 = vpop.f32.mrf.mxu0
  %v598 = vadd.f32 0.0, %v597
  %599 = vmatmul.f32.gmra.mxu0 %v109
  %v600 = vpop.f32.mrf.mxu0
  %v601 = vadd.f32 0.0, %v600
  %602 = vmatmul.f32.gmra.mxu0 %v112
  %v603 = vpop.f32.mrf.mxu0
  %v604 = vadd.f32 0.0, %v603
  %605 = vmatmul.f32.gmra.mxu0 %v115
  %v606 = vpop.f32.mrf.mxu0
  %v607 = vadd.f32 0.0, %v606
  %608 = vmatmul.f32.gmra.mxu0 %v118
  %v609 = vpop.f32.mrf.mxu0
  %v610 = vadd.f32 0.0, %v609
  %611 = vmatmul.f32.gmra.mxu0 %v121
  %v612 = vpop.f32.mrf.mxu0
  %v613 = vadd.f32 0.0, %v612
  %614 = vmatmul.f32.gmra.mxu0 %v124
  %v615 = vpop.f32.mrf.mxu0
  %v616 = vadd.f32 0.0, %v615
  %617 = vmatmul.f32.gmra.mxu0 %v127
  %v618 = vpop.f32.mrf.mxu0
  %v619 = vadd.f32 0.0, %v618
  %620 = vmatmul.f32.gmra.mxu0 %v130
  %v621 = vpop.f32.mrf.mxu0
  %v622 = vadd.f32 0.0, %v621
  %623 = vmatmul.f32.gmra.mxu0 %v133
  %v624 = vpop.f32.mrf.mxu0
  %v625 = vadd.f32 0.0, %v624
  %626 = vmatmul.f32.gmra.mxu0 %v136
  %v627 = vpop.f32.mrf.mxu0
  %v628 = vadd.f32 0.0, %v627
  %629 = vmatmul.f32.gmra.mxu0 %v139
  %v630 = vpop.f32.mrf.mxu0
  %v631 = vadd.f32 0.0, %v630
  %632 = vmatmul.f32.gmra.mxu0 %v142
  %v633 = vpop.f32.mrf.mxu0
  %v634 = vadd.f32 0.0, %v633
  %635 = vmatmul.f32.gmra.mxu0 %v145
  %v636 = vpop.f32.mrf.mxu0
  %v637 = vadd.f32 0.0, %v636
  %638 = vmatmul.f32.gmra.mxu0 %v148
  %v639 = vpop.f32.mrf.mxu0
  %v640 = vadd.f32 0.0, %v639
  %641 = vmatmul.f32.gmra.mxu0 %v151
  %v642 = vpop.f32.mrf.mxu0
  %v643 = vadd.f32 0.0, %v642
  %644 = vmatmul.f32.gmra.mxu0 %v154
  %v645 = vpop.f32.mrf.mxu0
  %v646 = vadd.f32 0.0, %v645
  %647 = vmatmul.f32.gmra.mxu0 %v157
  %v648 = vpop.f32.mrf.mxu0
  %v649 = vadd.f32 0.0, %v648
  %650 = vmatmul.f32.gmra.mxu0 %v160
  %v651 = vpop.f32.mrf.mxu0
  %v652 = vadd.f32 0.0, %v651
  %653 = vmatmul.f32.gmra.mxu0 %v163
  %v654 = vpop.f32.mrf.mxu0
  %v655 = vadd.f32 0.0, %v654
  %656 = vmatmul.f32.gmra.mxu0 %v166
  %v657 = vpop.f32.mrf.mxu0
  %v658 = vadd.f32 0.0, %v657
  %659 = vmatmul.f32.gmra.mxu0 %v169
  %v660 = vpop.f32.mrf.mxu0
  %v661 = vadd.f32 0.0, %v660
  %662 = vmatmul.f32.gmra.mxu0 %v172
  %v663 = vpop.f32.mrf.mxu0
  %v664 = vadd.f32 0.0, %v663
  %665 = vmatmul.f32.gmra.mxu0 %v175
  %v666 = vpop.f32.mrf.mxu0
  %v667 = vadd.f32 0.0, %v666
  %668 = vmatmul.f32.gmra.mxu0 %v178
  %v669 = vpop.f32.mrf.mxu0
  %v670 = vadd.f32 0.0, %v669
  %671 = vmatmul.f32.gmra.mxu0 %v181
  %v672 = vpop.f32.mrf.mxu0
  %v673 = vadd.f32 0.0, %v672
  %674 = vmatmul.f32.gmra.mxu0 %v184
  %v675 = vpop.f32.mrf.mxu0
  %v676 = vadd.f32 0.0, %v675
  %677 = vmatmul.f32.gmra.mxu0 %v187
  %v678 = vpop.f32.mrf.mxu0
  %v679 = vadd.f32 0.0, %v678
  %680 = vmatmul.f32.gmra.mxu0 %v190
  %v681 = vpop.f32.mrf.mxu0
  %v682 = vadd.f32 0.0, %v681
  %683 = vmatmul.f32.gmra.mxu0 %v193
  %v684 = vpop.f32.mrf.mxu0
  %v685 = vadd.f32 0.0, %v684
  %686 = vmatmul.f32.gmra.mxu0 %v196
  %v687 = vpop.f32.mrf.mxu0
  %v688 = vadd.f32 0.0, %v687
  %689 = vmatmul.f32.gmra.mxu0 %v199
  %v690 = vpop.f32.mrf.mxu0
  %v691 = vadd.f32 0.0, %v690
  %692 = vmatmul.f32.gmra.mxu0 %v202
  %v693 = vpop.f32.mrf.mxu0
  %v694 = vadd.f32 0.0, %v693
  %695 = vmatmul.f32.gmra.mxu0 %v205
  %v696 = vpop.f32.mrf.mxu0
  %v697 = vadd.f32 0.0, %v696
  %698 = vmatmul.f32.gmra.mxu0 %v208
  %v699 = vpop.f32.mrf.mxu0
  %v700 = vadd.f32 0.0, %v699
  %701 = vmatmul.f32.gmra.mxu0 %v211
  %v702 = vpop.f32.mrf.mxu0
  %v703 = vadd.f32 0.0, %v702
  %704 = vmatmul.f32.gmra.mxu0 %v214
  %v705 = vpop.f32.mrf.mxu0
  %v706 = vadd.f32 0.0, %v705
  %707 = vmatmul.f32.gmra.mxu0 %v217
  %v708 = vpop.f32.mrf.mxu0
  %v709 = vadd.f32 0.0, %v708
  %710 = vmatmul.f32.gmra.mxu0 %v220
  %v711 = vpop.f32.mrf.mxu0
  %v712 = vadd.f32 0.0, %v711
  %713 = vmatmul.f32.gmra.mxu0 %v223
  %v714 = vpop.f32.mrf.mxu0
  %v715 = vadd.f32 0.0, %v714
  %716 = vmatmul.f32.gmra.mxu0 %v226
  %v717 = vpop.f32.mrf.mxu0
  %v718 = vadd.f32 0.0, %v717
  %719 = vmatmul.f32.gmra.mxu0 %v229
  %v720 = vpop.f32.mrf.mxu0
  %v721 = vadd.f32 0.0, %v720
  %722 = vmatmul.f32.gmra.mxu0 %v232
  %v723 = vpop.f32.mrf.mxu0
  %v724 = vadd.f32 0.0, %v723
  %725 = vmatmul.f32.gmra.mxu0 %v235
  %v726 = vpop.f32.mrf.mxu0
  %v727 = vadd.f32 0.0, %v726
  %728 = vmatmul.f32.gmra.mxu0 %v238
  %v729 = vpop.f32.mrf.mxu0
  %v730 = vadd.f32 0.0, %v729
  %731 = vmatmul.f32.gmra.mxu0 %v241
  %v732 = vpop.f32.mrf.mxu0
  %v733 = vadd.f32 0.0, %v732
  %734 = vmatmul.f32.gmra.mxu0 %v244
  %v735 = vpop.f32.mrf.mxu0
  %v736 = vadd.f32 0.0, %v735
  %737 = vmatmul.f32.gmra.mxu0 %v247
  %v738 = vpop.f32.mrf.mxu0
  %v739 = vadd.f32 0.0, %v738
  %740 = vdwg.mxu0
  %741 = vmatpush.msra.mxu0 0.0
  %742 = vmatpush.msra.mxu0 0.0
  %743 = vmatpush.msra.mxu0 0.0
  %744 = vmatpush.msra.mxu0 0.0
  %745 = vmatpush.msra.mxu0 0.0
  %746 = vmatpush.msra.mxu0 0.0
  %747 = vmatpush.msra.mxu0 0.0
  %748 = vmatpush.msra.mxu0 0.0
  %749 = vmatpush.msra.mxu0 %v100
  %750 = vmatpush.msra.mxu0 %v96
  %751 = vmatpush.msra.mxu0 %v92
  %752 = vmatpush.msra.mxu0 %v88
  %753 = vmatpush.msra.mxu0 %v84
  %754 = vmatpush.msra.mxu0 %v80
  %755 = vmatpush.msra.mxu0 %v76
  %756 = vmatpush.msra.mxu0 %v72
  %757 = vmatmul.f32.gmra.mxu0 %v103
  %v758 = vpop.f32.mrf.mxu0
  %v759 = vadd.f32 0.0, %v758
  %760 = vmatmul.f32.gmra.mxu0 %v106
  %v761 = vpop.f32.mrf.mxu0
  %v762 = vadd.f32 0.0, %v761
  %763 = vmatmul.f32.gmra.mxu0 %v109
  %v764 = vpop.f32.mrf.mxu0
  %v765 = vadd.f32 0.0, %v764
  %766 = vmatmul.f32.gmra.mxu0 %v112
  %v767 = vpop.f32.mrf.mxu0
  %v768 = vadd.f32 0.0, %v767
  %769 = vmatmul.f32.gmra.mxu0 %v115
  %v770 = vpop.f32.mrf.mxu0
  %v771 = vadd.f32 0.0, %v770
  %772 = vmatmul.f32.gmra.mxu0 %v118
  %v773 = vpop.f32.mrf.mxu0
  %v774 = vadd.f32 0.0, %v773
  %775 = vmatmul.f32.gmra.mxu0 %v121
  %v776 = vpop.f32.mrf.mxu0
  %v777 = vadd.f32 0.0, %v776
  %778 = vmatmul.f32.gmra.mxu0 %v124
  %v779 = vpop.f32.mrf.mxu0
  %v780 = vadd.f32 0.0, %v779
  %781 = vmatmul.f32.gmra.mxu0 %v127
  %v782 = vpop.f32.mrf.mxu0
  %v783 = vadd.f32 0.0, %v782
  %784 = vmatmul.f32.gmra.mxu0 %v130
  %v785 = vpop.f32.mrf.mxu0
  %v786 = vadd.f32 0.0, %v785
  %787 = vmatmul.f32.gmra.mxu0 %v133
  %v788 = vpop.f32.mrf.mxu0
  %v789 = vadd.f32 0.0, %v788
  %790 = vmatmul.f32.gmra.mxu0 %v136
  %v791 = vpop.f32.mrf.mxu0
  %v792 = vadd.f32 0.0, %v791
  %793 = vmatmul.f32.gmra.mxu0 %v139
  %v794 = vpop.f32.mrf.mxu0
  %v795 = vadd.f32 0.0, %v794
  %796 = vmatmul.f32.gmra.mxu0 %v142
  %v797 = vpop.f32.mrf.mxu0
  %v798 = vadd.f32 0.0, %v797
  %799 = vmatmul.f32.gmra.mxu0 %v145
  %v800 = vpop.f32.mrf.mxu0
  %v801 = vadd.f32 0.0, %v800
  %802 = vmatmul.f32.gmra.mxu0 %v148
  %v803 = vpop.f32.mrf.mxu0
  %v804 = vadd.f32 0.0, %v803
  %805 = vmatmul.f32.gmra.mxu0 %v151
  %v806 = vpop.f32.mrf.mxu0
  %v807 = vadd.f32 0.0, %v806
  %808 = vmatmul.f32.gmra.mxu0 %v154
  %v809 = vpop.f32.mrf.mxu0
  %v810 = vadd.f32 0.0, %v809
  %811 = vmatmul.f32.gmra.mxu0 %v157
  %v812 = vpop.f32.mrf.mxu0
  %v813 = vadd.f32 0.0, %v812
  %814 = vmatmul.f32.gmra.mxu0 %v160
  %v815 = vpop.f32.mrf.mxu0
  %v816 = vadd.f32 0.0, %v815
  %817 = vmatmul.f32.gmra.mxu0 %v163
  %v818 = vpop.f32.mrf.mxu0
  %v819 = vadd.f32 0.0, %v818
  %820 = vmatmul.f32.gmra.mxu0 %v166
  %v821 = vpop.f32.mrf.mxu0
  %v822 = vadd.f32 0.0, %v821
  %823 = vmatmul.f32.gmra.mxu0 %v169
  %v824 = vpop.f32.mrf.mxu0
  %v825 = vadd.f32 0.0, %v824
  %826 = vmatmul.f32.gmra.mxu0 %v172
  %v827 = vpop.f32.mrf.mxu0
  %v828 = vadd.f32 0.0, %v827
  %829 = vmatmul.f32.gmra.mxu0 %v175
  %v830 = vpop.f32.mrf.mxu0
  %v831 = vadd.f32 0.0, %v830
  %832 = vmatmul.f32.gmra.mxu0 %v178
  %v833 = vpop.f32.mrf.mxu0
  %v834 = vadd.f32 0.0, %v833
  %835 = vmatmul.f32.gmra.mxu0 %v181
  %v836 = vpop.f32.mrf.mxu0
  %v837 = vadd.f32 0.0, %v836
  %838 = vmatmul.f32.gmra.mxu0 %v184
  %v839 = vpop.f32.mrf.mxu0
  %v840 = vadd.f32 0.0, %v839
  %841 = vmatmul.f32.gmra.mxu0 %v187
  %v842 = vpop.f32.mrf.mxu0
  %v843 = vadd.f32 0.0, %v842
  %844 = vmatmul.f32.gmra.mxu0 %v190
  %v845 = vpop.f32.mrf.mxu0
  %v846 = vadd.f32 0.0, %v845
  %847 = vmatmul.f32.gmra.mxu0 %v193
  %v848 = vpop.f32.mrf.mxu0
  %v849 = vadd.f32 0.0, %v848
  %850 = vmatmul.f32.gmra.mxu0 %v196
  %v851 = vpop.f32.mrf.mxu0
  %v852 = vadd.f32 0.0, %v851
  %853 = vmatmul.f32.gmra.mxu0 %v199
  %v854 = vpop.f32.mrf.mxu0
  %v855 = vadd.f32 0.0, %v854
  %856 = vmatmul.f32.gmra.mxu0 %v202
  %v857 = vpop.f32.mrf.mxu0
  %v858 = vadd.f32 0.0, %v857
  %859 = vmatmul.f32.gmra.mxu0 %v205
  %v860 = vpop.f32.mrf.mxu0
  %v861 = vadd.f32 0.0, %v860
  %862 = vmatmul.f32.gmra.mxu0 %v208
  %v863 = vpop.f32.mrf.mxu0
  %v864 = vadd.f32 0.0, %v863
  %865 = vmatmul.f32.gmra.mxu0 %v211
  %v866 = vpop.f32.mrf.mxu0
  %v867 = vadd.f32 0.0, %v866
  %868 = vmatmul.f32.gmra.mxu0 %v214
  %v869 = vpop.f32.mrf.mxu0
  %v870 = vadd.f32 0.0, %v869
  %871 = vmatmul.f32.gmra.mxu0 %v217
  %v872 = vpop.f32.mrf.mxu0
  %v873 = vadd.f32 0.0, %v872
  %874 = vmatmul.f32.gmra.mxu0 %v220
  %v875 = vpop.f32.mrf.mxu0
  %v876 = vadd.f32 0.0, %v875
  %877 = vmatmul.f32.gmra.mxu0 %v223
  %v878 = vpop.f32.mrf.mxu0
  %v879 = vadd.f32 0.0, %v878
  %880 = vmatmul.f32.gmra.mxu0 %v226
  %v881 = vpop.f32.mrf.mxu0
  %v882 = vadd.f32 0.0, %v881
  %883 = vmatmul.f32.gmra.mxu0 %v229
  %v884 = vpop.f32.mrf.mxu0
  %v885 = vadd.f32 0.0, %v884
  %886 = vmatmul.f32.gmra.mxu0 %v232
  %v887 = vpop.f32.mrf.mxu0
  %v888 = vadd.f32 0.0, %v887
  %889 = vmatmul.f32.gmra.mxu0 %v235
  %v890 = vpop.f32.mrf.mxu0
  %v891 = vadd.f32 0.0, %v890
  %892 = vmatmul.f32.gmra.mxu0 %v238
  %v893 = vpop.f32.mrf.mxu0
  %v894 = vadd.f32 0.0, %v893
  %895 = vmatmul.f32.gmra.mxu0 %v241
  %v896 = vpop.f32.mrf.mxu0
  %v897 = vadd.f32 0.0, %v896
  %898 = vmatmul.f32.gmra.mxu0 %v244
  %v899 = vpop.f32.mrf.mxu0
  %v900 = vadd.f32 0.0, %v899
  %901 = vmatmul.f32.gmra.mxu0 %v247
  %v902 = vpop.f32.mrf.mxu0
  %v903 = vadd.f32 0.0, %v902
  %904 = vdwg.mxu0
  %v905 = vmax.f32 %v267, %v431
  %v906 = vmax.f32 %v270, %v434
  %v907 = vmax.f32 %v273, %v437
  %v908 = vmax.f32 %v276, %v440
  %v909 = vmax.f32 %v279, %v443
  %v910 = vmax.f32 %v282, %v446
  %v911 = vmax.f32 %v285, %v449
  %v912 = vmax.f32 %v288, %v452
  %v913 = vmax.f32 %v291, %v455
  %v914 = vmax.f32 %v294, %v458
  %v915 = vmax.f32 %v297, %v461
  %v916 = vmax.f32 %v300, %v464
  %v917 = vmax.f32 %v303, %v467
  %v918 = vmax.f32 %v306, %v470
  %v919 = vmax.f32 %v309, %v473
  %v920 = vmax.f32 %v312, %v476
  %v921 = vmax.f32 %v315, %v479
  %v922 = vmax.f32 %v318, %v482
  %v923 = vmax.f32 %v321, %v485
  %v924 = vmax.f32 %v324, %v488
  %v925 = vmax.f32 %v327, %v491
  %v926 = vmax.f32 %v330, %v494
  %v927 = vmax.f32 %v333, %v497
  %v928 = vmax.f32 %v336, %v500
  %v929 = vmax.f32 %v339, %v503
  %v930 = vmax.f32 %v342, %v506
  %v931 = vmax.f32 %v345, %v509
  %v932 = vmax.f32 %v348, %v512
  %v933 = vmax.f32 %v351, %v515
  %v934 = vmax.f32 %v354, %v518
  %v935 = vmax.f32 %v357, %v521
  %v936 = vmax.f32 %v360, %v524
  %v937 = vmax.f32 %v363, %v527
  %v938 = vmax.f32 %v366, %v530
  %v939 = vmax.f32 %v369, %v533
  %v940 = vmax.f32 %v372, %v536
  %v941 = vmax.f32 %v375, %v539
  %v942 = vmax.f32 %v378, %v542
  %v943 = vmax.f32 %v381, %v545
  %v944 = vmax.f32 %v384, %v548
  %v945 = vmax.f32 %v387, %v551
  %v946 = vmax.f32 %v390, %v554
  %v947 = vmax.f32 %v393, %v557
  %v948 = vmax.f32 %v396, %v560
  %v949 = vmax.f32 %v399, %v563
  %v950 = vmax.f32 %v402, %v566
  %v951 = vmax.f32 %v405, %v569
  %v952 = vmax.f32 %v408, %v572
  %v953 = vmax.f32 %v411, %v575
  %v954 = vmax.f32 %v595, %v759
  %v955 = vmax.f32 %v598, %v762
  %v956 = vmax.f32 %v601, %v765
  %v957 = vmax.f32 %v604, %v768
  %v958 = vmax.f32 %v607, %v771
  %v959 = vmax.f32 %v610, %v774
  %v960 = vmax.f32 %v613, %v777
  %v961 = vmax.f32 %v616, %v780
  %v962 = vmax.f32 %v619, %v783
  %v963 = vmax.f32 %v622, %v786
  %v964 = vmax.f32 %v625, %v789
  %v965 = vmax.f32 %v628, %v792
  %v966 = vmax.f32 %v631, %v795
  %v967 = vmax.f32 %v634, %v798
  %v968 = vmax.f32 %v637, %v801
  %v969 = vmax.f32 %v640, %v804
  %v970 = vmax.f32 %v643, %v807
  %v971 = vmax.f32 %v646, %v810
  %v972 = vmax.f32 %v649, %v813
  %v973 = vmax.f32 %v652, %v816
  %v974 = vmax.f32 %v655, %v819
  %v975 = vmax.f32 %v658, %v822
  %v976 = vmax.f32 %v661, %v825
  %v977 = vmax.f32 %v664, %v828
  %v978 = vmax.f32 %v667, %v831
  %v979 = vmax.f32 %v670, %v834
  %v980 = vmax.f32 %v673, %v837
  %v981 = vmax.f32 %v676, %v840
  %v982 = vmax.f32 %v679, %v843
  %v983 = vmax.f32 %v682, %v846
  %v984 = vmax.f32 %v685, %v849
  %v985 = vmax.f32 %v688, %v852
  %v986 = vmax.f32 %v691, %v855
  %v987 = vmax.f32 %v694, %v858
  %v988 = vmax.f32 %v697, %v861
  %v989 = vmax.f32 %v700, %v864
  %v990 = vmax.f32 %v703, %v867
  %v991 = vmax.f32 %v706, %v870
  %v992 = vmax.f32 %v709, %v873
  %v993 = vmax.f32 %v712, %v876
  %v994 = vmax.f32 %v715, %v879
  %v995 = vmax.f32 %v718, %v882
  %v996 = vmax.f32 %v721, %v885
  %v997 = vmax.f32 %v724, %v888
  %v998 = vmax.f32 %v727, %v891
  %v999 = vmax.f32 %v730, %v894
  %v1000 = vmax.f32 %v733, %v897
  %v1001 = vmax.f32 %v736, %v900
  %v1002 = vmax.f32 %v739, %v903
  %v1003 = vmax.f32 %v905, %v954
  %v1004 = vmax.f32 %v906, %v955
  %v1005 = vmax.f32 %v907, %v956
  %v1006 = vmax.f32 %v908, %v957
  %v1007 = vmax.f32 %v909, %v958
  %v1008 = vmax.f32 %v910, %v959
  %v1009 = vmax.f32 %v911, %v960
  %v1010 = vmax.f32 %v912, %v961
  %v1011 = vmax.f32 %v913, %v962
  %v1012 = vmax.f32 %v914, %v963
  %v1013 = vmax.f32 %v915, %v964
  %v1014 = vmax.f32 %v916, %v965
  %v1015 = vmax.f32 %v917, %v966
  %v1016 = vmax.f32 %v918, %v967
  %v1017 = vmax.f32 %v919, %v968
  %v1018 = vmax.f32 %v920, %v969
  %v1019 = vmax.f32 %v921, %v970
  %v1020 = vmax.f32 %v922, %v971
  %v1021 = vmax.f32 %v923, %v972
  %v1022 = vmax.f32 %v924, %v973
  %v1023 = vmax.f32 %v925, %v974
  %v1024 = vmax.f32 %v926, %v975
  %v1025 = vmax.f32 %v927, %v976
  %v1026 = vmax.f32 %v928, %v977
  %v1027 = vmax.f32 %v929, %v978
  %v1028 = vmax.f32 %v930, %v979
  %v1029 = vmax.f32 %v931, %v980
  %v1030 = vmax.f32 %v932, %v981
  %v1031 = vmax.f32 %v933, %v982
  %v1032 = vmax.f32 %v934, %v983
  %v1033 = vmax.f32 %v935, %v984
  %v1034 = vmax.f32 %v936, %v985
  %v1035 = vmax.f32 %v937, %v986
  %v1036 = vmax.f32 %v938, %v987
  %v1037 = vmax.f32 %v939, %v988
  %v1038 = vmax.f32 %v940, %v989
  %v1039 = vmax.f32 %v941, %v990
  %v1040 = vmax.f32 %v942, %v991
  %v1041 = vmax.f32 %v943, %v992
  %v1042 = vmax.f32 %v944, %v993
  %v1043 = vmax.f32 %v945, %v994
  %v1044 = vmax.f32 %v946, %v995
  %v1045 = vmax.f32 %v947, %v996
  %v1046 = vmax.f32 %v948, %v997
  %v1047 = vmax.f32 %v949, %v998
  %v1048 = vmax.f32 %v950, %v999
  %v1049 = vmax.f32 %v951, %v1000
  %v1050 = vmax.f32 %v952, %v1001
  %v1051 = vmax.f32 %v953, %v1002
  %v1052 = vld [vmem:[%s2] sm:$0x1]
  %v1054 = vperm.slane %v1052, 0
  %v1056 = vadd.f32 %v1003, %v1054
  %v1057 = vadd.f32 %v1004, %v1054
  %v1058 = vadd.f32 %v1005, %v1054
  %v1059 = vadd.f32 %v1006, %v1054
  %v1060 = vadd.f32 %v1007, %v1054
  %v1061 = vadd.f32 %v1008, %v1054
  %v1062 = vadd.f32 %v1009, %v1054
  %v1063 = vadd.f32 %v1010, %v1054
  %v1064 = vadd.f32 %v1011, %v1054
  %v1065 = vadd.f32 %v1012, %v1054
  %v1066 = vadd.f32 %v1013, %v1054
  %v1067 = vadd.f32 %v1014, %v1054
  %v1068 = vadd.f32 %v1015, %v1054
  %v1069 = vadd.f32 %v1016, %v1054
  %v1070 = vadd.f32 %v1017, %v1054
  %v1071 = vadd.f32 %v1018, %v1054
  %v1072 = vadd.f32 %v1019, %v1054
  %v1073 = vadd.f32 %v1020, %v1054
  %v1074 = vadd.f32 %v1021, %v1054
  %v1075 = vadd.f32 %v1022, %v1054
  %v1076 = vadd.f32 %v1023, %v1054
  %v1077 = vadd.f32 %v1024, %v1054
  %v1078 = vadd.f32 %v1025, %v1054
  %v1079 = vadd.f32 %v1026, %v1054
  %v1080 = vadd.f32 %v1027, %v1054
  %v1081 = vadd.f32 %v1028, %v1054
  %v1082 = vadd.f32 %v1029, %v1054
  %v1083 = vadd.f32 %v1030, %v1054
  %v1084 = vadd.f32 %v1031, %v1054
  %v1085 = vadd.f32 %v1032, %v1054
  %v1086 = vadd.f32 %v1033, %v1054
  %v1087 = vadd.f32 %v1034, %v1054
  %v1088 = vadd.f32 %v1035, %v1054
  %v1089 = vadd.f32 %v1036, %v1054
  %v1090 = vadd.f32 %v1037, %v1054
  %v1091 = vadd.f32 %v1038, %v1054
  %v1092 = vadd.f32 %v1039, %v1054
  %v1093 = vadd.f32 %v1040, %v1054
  %v1094 = vadd.f32 %v1041, %v1054
  %v1095 = vadd.f32 %v1042, %v1054
  %v1096 = vadd.f32 %v1043, %v1054
  %v1097 = vadd.f32 %v1044, %v1054
  %v1098 = vadd.f32 %v1045, %v1054
  %v1099 = vadd.f32 %v1046, %v1054
  %v1100 = vadd.f32 %v1047, %v1054
  %v1101 = vadd.f32 %v1048, %v1054
  %v1102 = vadd.f32 %v1049, %v1054
  %v1103 = vadd.f32 %v1050, %v1054
  %v1104 = vadd.f32 %v1051, %v1054
  %v1105 = vmax.f32 %v1056, 0.0
  %v1106 = vmax.f32 %v1057, 0.0
  %v1107 = vmax.f32 %v1058, 0.0
  %v1108 = vmax.f32 %v1059, 0.0
  %v1109 = vmax.f32 %v1060, 0.0
  %v1110 = vmax.f32 %v1061, 0.0
  %v1111 = vmax.f32 %v1062, 0.0
  %v1112 = vmax.f32 %v1063, 0.0
  %v1113 = vmax.f32 %v1064, 0.0
  %v1114 = vmax.f32 %v1065, 0.0
  %v1115 = vmax.f32 %v1066, 0.0
  %v1116 = vmax.f32 %v1067, 0.0
  %v1117 = vmax.f32 %v1068, 0.0
  %v1118 = vmax.f32 %v1069, 0.0
  %v1119 = vmax.f32 %v1070, 0.0
  %v1120 = vmax.f32 %v1071, 0.0
  %v1121 = vmax.f32 %v1072, 0.0
  %v1122 = vmax.f32 %v1073, 0.0
  %v1123 = vmax.f32 %v1074, 0.0
  %v1124 = vmax.f32 %v1075, 0.0
  %v1125 = vmax.f32 %v1076, 0.0
  %v1126 = vmax.f32 %v1077, 0.0
  %v1127 = vmax.f32 %v1078, 0.0
  %v1128 = vmax.f32 %v1079, 0.0
  %v1129 = vmax.f32 %v1080, 0.0
  %v1130 = vmax.f32 %v1081, 0.0
  %v1131 = vmax.f32 %v1082, 0.0
  %v1132 = vmax.f32 %v1083, 0.0
  %v1133 = vmax.f32 %v1084, 0.0
  %v1134 = vmax.f32 %v1085, 0.0
  %v1135 = vmax.f32 %v1086, 0.0
  %v1136 = vmax.f32 %v1087, 0.0
  %v1137 = vmax.f32 %v1088, 0.0
  %v1138 = vmax.f32 %v1089, 0.0
  %v1139 = vmax.f32 %v1090, 0.0
  %v1140 = vmax.f32 %v1091, 0.0
  %v1141 = vmax.f32 %v1092, 0.0
  %v1142 = vmax.f32 %v1093, 0.0
  %v1143 = vmax.f32 %v1094, 0.0
  %v1144 = vmax.f32 %v1095, 0.0
  %v1145 = vmax.f32 %v1096, 0.0
  %v1146 = vmax.f32 %v1097, 0.0
  %v1147 = vmax.f32 %v1098, 0.0
  %v1148 = vmax.f32 %v1099, 0.0
  %v1149 = vmax.f32 %v1100, 0.0
  %v1150 = vmax.f32 %v1101, 0.0
  %v1151 = vmax.f32 %v1102, 0.0
  %v1152 = vmax.f32 %v1103, 0.0
  %v1153 = vmax.f32 %v1104, 0.0
  %1154 = vst [vmem:[#allocation2] sm:$0xff] %v1105
  %1155 = vst [vmem:[#allocation2 + $0x8] sm:$0xff] %v1106
  %1156 = vst [vmem:[#allocation2 + $0x10] sm:$0xff] %v1107
  %1157 = vst [vmem:[#allocation2 + $0x18] sm:$0xff] %v1108
  %1158 = vst [vmem:[#allocation2 + $0x20] sm:$0xff] %v1109
  %1159 = vst [vmem:[#allocation2 + $0x28] sm:$0xff] %v1110
  %1160 = vst [vmem:[#allocation2 + $0x30] sm:$0xff] %v1111
  %1161 = vst [vmem:[#allocation2 + $0x38] sm:$0xff] %v1112
  %1162 = vst [vmem:[#allocation2 + $0x40] sm:$0xff] %v1113
  %1163 = vst [vmem:[#allocation2 + $0x48] sm:$0xff] %v1114
  %1164 = vst [vmem:[#allocation2 + $0x50] sm:$0xff] %v1115
  %1165 = vst [vmem:[#allocation2 + $0x58] sm:$0xff] %v1116
  %1166 = vst [vmem:[#allocation2 + $0x60] sm:$0xff] %v1117
  %1167 = vst [vmem:[#allocation2 + $0x68] sm:$0xff] %v1118
  %1168 = vst [vmem:[#allocation2 + $0x70] sm:$0xff] %v1119
  %1169 = vst [vmem:[#allocation2 + $0x78] sm:$0xff] %v1120
  %1170 = vst [vmem:[#allocation2 + $0x80] sm:$0xff] %v1121
  %1171 = vst [vmem:[#allocation2 + $0x88] sm:$0xff] %v1122
  %1172 = vst [vmem:[#allocation2 + $0x90] sm:$0xff] %v1123
  %1173 = vst [vmem:[#allocation2 + $0x98] sm:$0xff] %v1124
  %1174 = vst [vmem:[#allocation2 + $0xa0] sm:$0xff] %v1125
  %1175 = vst [vmem:[#allocation2 + $0xa8] sm:$0xff] %v1126
  %1176 = vst [vmem:[#allocation2 + $0xb0] sm:$0xff] %v1127
  %1177 = vst [vmem:[#allocation2 + $0xb8] sm:$0xff] %v1128
  %1178 = vst [vmem:[#allocation2 + $0xc0] sm:$0xff] %v1129
  %1179 = vst [vmem:[#allocation2 + $0xc8] sm:$0xff] %v1130
  %1180 = vst [vmem:[#allocation2 + $0xd0] sm:$0xff] %v1131
  %1181 = vst [vmem:[#allocation2 + $0xd8] sm:$0xff] %v1132
  %1182 = vst [vmem:[#allocation2 + $0xe0] sm:$0xff] %v1133
  %1183 = vst [vmem:[#allocation2 + $0xe8] sm:$0xff] %v1134
  %1184 = vst [vmem:[#allocation2 + $0xf0] sm:$0xff] %v1135
  %1185 = vst [vmem:[#allocation2 + $0xf8] sm:$0xff] %v1136
  %1186 = vst [vmem:[#allocation2 + $0x100] sm:$0xff] %v1137
  %1187 = vst [vmem:[#allocation2 + $0x108] sm:$0xff] %v1138
  %1188 = vst [vmem:[#allocation2 + $0x110] sm:$0xff] %v1139
  %1189 = vst [vmem:[#allocation2 + $0x118] sm:$0xff] %v1140
  %1190 = vst [vmem:[#allocation2 + $0x120] sm:$0xff] %v1141
  %1191 = vst [vmem:[#allocation2 + $0x128] sm:$0xff] %v1142
  %1192 = vst [vmem:[#allocation2 + $0x130] sm:$0xff] %v1143
  %1193 = vst [vmem:[#allocation2 + $0x138] sm:$0xff] %v1144
  %1194 = vst [vmem:[#allocation2 + $0x140] sm:$0xff] %v1145
  %1195 = vst [vmem:[#allocation2 + $0x148] sm:$0xff] %v1146
  %1196 = vst [vmem:[#allocation2 + $0x150] sm:$0xff] %v1147
  %1197 = vst [vmem:[#allocation2 + $0x158] sm:$0xff] %v1148
  %1198 = vst [vmem:[#allocation2 + $0x160] sm:$0xff] %v1149
  %1199 = vst [vmem:[#allocation2 + $0x168] sm:$0xff] %v1150
  %1200 = vst [vmem:[#allocation2 + $0x170] sm:$0xff] %v1151
  %1201 = vst [vmem:[#allocation2 + $0x178] sm:$0xff] %v1152
  %1202 = vst [vmem:[#allocation2 + $0x180] sm:$0xff] %v1153
  %v1203 = vld [vmem:[#allocation2] sm:$0xff]
  %v1204 = vld [vmem:[#allocation2 + $0x8] sm:$0xff]
  %v1205 = vld [vmem:[#allocation2 + $0x10] sm:$0xff]
  %v1206 = vld [vmem:[#allocation2 + $0x18] sm:$0xff]
  %v1207 = vld [vmem:[#allocation2 + $0x20] sm:$0xff]
  %v1208 = vld [vmem:[#allocation2 + $0x28] sm:$0xff]
  %v1209 = vld [vmem:[#allocation2 + $0x30] sm:$0xff]
  %v1210 = vld [vmem:[#allocation2 + $0x38] sm:$0xff]
  %v1211 = vld [vmem:[#allocation2 + $0x40] sm:$0xff]
  %v1212 = vld [vmem:[#allocation2 + $0x48] sm:$0xff]
  %v1213 = vld [vmem:[#allocation2 + $0x50] sm:$0xff]
  %v1214 = vld [vmem:[#allocation2 + $0x58] sm:$0xff]
  %v1215 = vld [vmem:[#allocation2 + $0x60] sm:$0xff]
  %v1216 = vld [vmem:[#allocation2 + $0x68] sm:$0xff]
  %v1217 = vld [vmem:[#allocation2 + $0x70] sm:$0xff]
  %v1218 = vld [vmem:[#allocation2 + $0x78] sm:$0xff]
  %v1219 = vld [vmem:[#allocation2 + $0x80] sm:$0xff]
  %v1220 = vld [vmem:[#allocation2 + $0x88] sm:$0xff]
  %v1221 = vld [vmem:[#allocation2 + $0x90] sm:$0xff]
  %v1222 = vld [vmem:[#allocation2 + $0x98] sm:$0xff]
  %v1223 = vld [vmem:[#allocation2 + $0xa0] sm:$0xff]
  %v1224 = vld [vmem:[#allocation2 + $0xa8] sm:$0xff]
  %v1225 = vld [vmem:[#allocation2 + $0xb0] sm:$0xff]
  %v1226 = vld [vmem:[#allocation2 + $0xb8] sm:$0xff]
  %v1227 = vld [vmem:[#allocation2 + $0xc0] sm:$0xff]
  %v1228 = vld [vmem:[#allocation2 + $0xc8] sm:$0xff]
  %v1229 = vld [vmem:[#allocation2 + $0xd0] sm:$0xff]
  %v1230 = vld [vmem:[#allocation2 + $0xd8] sm:$0xff]
  %v1231 = vld [vmem:[#allocation2 + $0xe0] sm:$0xff]
  %v1232 = vld [vmem:[#allocation2 + $0xe8] sm:$0xff]
  %v1233 = vld [vmem:[#allocation2 + $0xf0] sm:$0xff]
  %v1234 = vld [vmem:[#allocation2 + $0xf8] sm:$0xff]
  %v1235 = vld [vmem:[#allocation2 + $0x100] sm:$0xff]
  %v1236 = vld [vmem:[#allocation2 + $0x108] sm:$0xff]
  %v1237 = vld [vmem:[#allocation2 + $0x110] sm:$0xff]
  %v1238 = vld [vmem:[#allocation2 + $0x118] sm:$0xff]
  %v1239 = vld [vmem:[#allocation2 + $0x120] sm:$0xff]
  %v1240 = vld [vmem:[#allocation2 + $0x128] sm:$0xff]
  %v1241 = vld [vmem:[#allocation2 + $0x130] sm:$0xff]
  %v1242 = vld [vmem:[#allocation2 + $0x138] sm:$0xff]
  %v1243 = vld [vmem:[#allocation2 + $0x140] sm:$0xff]
  %v1244 = vld [vmem:[#allocation2 + $0x148] sm:$0xff]
  %v1245 = vld [vmem:[#allocation2 + $0x150] sm:$0xff]
  %v1246 = vld [vmem:[#allocation2 + $0x158] sm:$0xff]
  %v1247 = vld [vmem:[#allocation2 + $0x160] sm:$0xff]
  %v1248 = vld [vmem:[#allocation2 + $0x168] sm:$0xff]
  %v1249 = vld [vmem:[#allocation2 + $0x170] sm:$0xff]
  %v1250 = vld [vmem:[#allocation2 + $0x178] sm:$0xff]
  %v1251 = vld [vmem:[#allocation2 + $0x180] sm:$0xff]
  %v1252 = vld [vmem:[%s3] sm:$0xff]
  %v1253 = vld [vmem:[%s3 + $0x8] sm:$0xff]
  %v1254 = vld [vmem:[%s3 + $0x10] sm:$0xff]
  %v1255 = vld [vmem:[%s3 + $0x18] sm:$0xff]
  %v1256 = vld [vmem:[%s3 + $0x20] sm:$0xff]
  %v1257 = vld [vmem:[%s3 + $0x28] sm:$0xff]
  %v1258 = vld [vmem:[%s3 + $0x30] sm:$0xff]
  %v1259 = vld [vmem:[%s3 + $0x38] sm:$0xff]
  %v1260 = vld [vmem:[%s3 + $0x40] sm:$0xff]
  %v1261 = vld [vmem:[%s3 + $0x48] sm:$0xff]
  %v1262 = vld [vmem:[%s3 + $0x50] sm:$0xff]
  %v1263 = vld [vmem:[%s3 + $0x58] sm:$0xff]
  %v1264 = vld [vmem:[%s3 + $0x60] sm:$0xff]
  %v1265 = vld [vmem:[%s3 + $0x68] sm:$0xff]
  %v1266 = vld [vmem:[%s3 + $0x70] sm:$0xff]
  %v1267 = vld [vmem:[%s3 + $0x78] sm:$0xff]
  %v1268 = vld [vmem:[%s3 + $0x80] sm:$0xff]
  %v1269 = vld [vmem:[%s3 + $0x88] sm:$0xff]
  %v1270 = vld [vmem:[%s3 + $0x90] sm:$0xff]
  %v1271 = vld [vmem:[%s3 + $0x98] sm:$0xff]
  %v1272 = vld [vmem:[%s3 + $0xa0] sm:$0xff]
  %v1273 = vld [vmem:[%s3 + $0xa8] sm:$0xff]
  %v1274 = vld [vmem:[%s3 + $0xb0] sm:$0xff]
  %v1275 = vld [vmem:[%s3 + $0xb8] sm:$0xff]
  %v1276 = vld [vmem:[%s3 + $0xc0] sm:$0xff]
  %v1277 = vld [vmem:[%s3 + $0xc8] sm:$0xff]
  %v1278 = vld [vmem:[%s3 + $0xd0] sm:$0xff]
  %v1279 = vld [vmem:[%s3 + $0xd8] sm:$0xff]
  %v1280 = vld [vmem:[%s3 + $0xe0] sm:$0xff]
  %v1281 = vld [vmem:[%s3 + $0xe8] sm:$0xff]
  %v1282 = vld [vmem:[%s3 + $0xf0] sm:$0xff]
  %v1283 = vld [vmem:[%s3 + $0xf8] sm:$0xff]
  %v1284 = vld [vmem:[%s3 + $0x100] sm:$0xff]
  %v1285 = vld [vmem:[%s3 + $0x108] sm:$0xff]
  %v1286 = vld [vmem:[%s3 + $0x110] sm:$0xff]
  %v1287 = vld [vmem:[%s3 + $0x118] sm:$0xff]
  %v1288 = vld [vmem:[%s3 + $0x120] sm:$0xff]
  %v1289 = vld [vmem:[%s3 + $0x128] sm:$0xff]
  %v1290 = vld [vmem:[%s3 + $0x130] sm:$0xff]
  %v1291 = vld [vmem:[%s3 + $0x138] sm:$0xff]
  %v1292 = vld [vmem:[%s3 + $0x140] sm:$0xff]
  %v1293 = vld [vmem:[%s3 + $0x148] sm:$0xff]
  %v1294 = vld [vmem:[%s3 + $0x150] sm:$0xff]
  %v1295 = vld [vmem:[%s3 + $0x158] sm:$0xff]
  %v1296 = vld [vmem:[%s3 + $0x160] sm:$0xff]
  %v1297 = vld [vmem:[%s3 + $0x168] sm:$0xff]
  %v1298 = vld [vmem:[%s3 + $0x170] sm:$0xff]
  %v1299 = vld [vmem:[%s3 + $0x178] sm:$0xff]
  %v1300 = vld [vmem:[%s3 + $0x180] sm:$0xff]
  %v1301 = vld [vmem:[%s3 + $0x188] sm:$0xff]
  %v1302 = vld [vmem:[%s3 + $0x190] sm:$0xff]
  %v1303 = vld [vmem:[%s3 + $0x198] sm:$0xff]
  %v1304 = vld [vmem:[%s3 + $0x1a0] sm:$0xff]
  %v1305 = vld [vmem:[%s3 + $0x1a8] sm:$0xff]
  %v1306 = vld [vmem:[%s3 + $0x1b0] sm:$0xff]
  %v1307 = vld [vmem:[%s3 + $0x1b8] sm:$0xff]
  %v1308 = vld [vmem:[%s3 + $0x1c0] sm:$0xff]
  %v1309 = vld [vmem:[%s3 + $0x1c8] sm:$0xff]
  %v1310 = vld [vmem:[%s3 + $0x1d0] sm:$0xff]
  %v1311 = vld [vmem:[%s3 + $0x1d8] sm:$0xff]
  %v1312 = vld [vmem:[%s3 + $0x1e0] sm:$0xff]
  %v1313 = vld [vmem:[%s3 + $0x1e8] sm:$0xff]
  %v1314 = vld [vmem:[%s3 + $0x1f0] sm:$0xff]
  %v1315 = vld [vmem:[%s3 + $0x1f8] sm:$0xff]
  %v1316 = vld [vmem:[%s3 + $0x200] sm:$0xff]
  %v1317 = vld [vmem:[%s3 + $0x208] sm:$0xff]
  %v1318 = vld [vmem:[%s3 + $0x210] sm:$0xff]
  %v1319 = vld [vmem:[%s3 + $0x218] sm:$0xff]
  %v1320 = vld [vmem:[%s3 + $0x220] sm:$0xff]
  %v1321 = vld [vmem:[%s3 + $0x228] sm:$0xff]
  %v1322 = vld [vmem:[%s3 + $0x230] sm:$0xff]
  %v1323 = vld [vmem:[%s3 + $0x238] sm:$0xff]
  %v1324 = vld [vmem:[%s3 + $0x240] sm:$0xff]
  %v1325 = vld [vmem:[%s3 + $0x248] sm:$0xff]
  %v1326 = vld [vmem:[%s3 + $0x250] sm:$0xff]
  %v1327 = vld [vmem:[%s3 + $0x258] sm:$0xff]
  %v1328 = vld [vmem:[%s3 + $0x260] sm:$0xff]
  %v1329 = vld [vmem:[%s3 + $0x268] sm:$0xff]
  %v1330 = vld [vmem:[%s3 + $0x270] sm:$0xff]
  %v1331 = vld [vmem:[%s3 + $0x278] sm:$0xff]
  %v1332 = vld [vmem:[%s3 + $0x280] sm:$0xff]
  %v1333 = vld [vmem:[%s3 + $0x288] sm:$0xff]
  %v1334 = vld [vmem:[%s3 + $0x290] sm:$0xff]
  %v1335 = vld [vmem:[%s3 + $0x298] sm:$0xff]
  %v1336 = vld [vmem:[%s3 + $0x2a0] sm:$0xff]
  %v1337 = vld [vmem:[%s3 + $0x2a8] sm:$0xff]
  %v1338 = vld [vmem:[%s3 + $0x2b0] sm:$0xff]
  %v1339 = vld [vmem:[%s3 + $0x2b8] sm:$0xff]
  %v1340 = vld [vmem:[%s3 + $0x2c0] sm:$0xff]
  %v1341 = vld [vmem:[%s3 + $0x2c8] sm:$0xff]
  %v1342 = vld [vmem:[%s3 + $0x2d0] sm:$0xff]
  %v1343 = vld [vmem:[%s3 + $0x2d8] sm:$0xff]
  %v1344 = vld [vmem:[%s3 + $0x2e0] sm:$0xff]
  %v1345 = vld [vmem:[%s3 + $0x2e8] sm:$0xff]
  %v1346 = vld [vmem:[%s3 + $0x2f0] sm:$0xff]
  %v1347 = vld [vmem:[%s3 + $0x2f8] sm:$0xff]
  %v1348 = vld [vmem:[%s3 + $0x300] sm:$0xff]
  %v1349 = vld [vmem:[%s3 + $0x308] sm:$0xff]
  %v1350 = vld [vmem:[%s3 + $0x310] sm:$0xff]
  %v1351 = vld [vmem:[%s3 + $0x318] sm:$0xff]
  %v1352 = vld [vmem:[%s3 + $0x320] sm:$0xff]
  %v1353 = vld [vmem:[%s3 + $0x328] sm:$0xff]
  %v1354 = vld [vmem:[%s3 + $0x330] sm:$0xff]
  %v1355 = vld [vmem:[%s3 + $0x338] sm:$0xff]
  %v1356 = vld [vmem:[%s3 + $0x340] sm:$0xff]
  %v1357 = vld [vmem:[%s3 + $0x348] sm:$0xff]
  %v1358 = vld [vmem:[%s3 + $0x350] sm:$0xff]
  %v1359 = vld [vmem:[%s3 + $0x358] sm:$0xff]
  %v1360 = vld [vmem:[%s3 + $0x360] sm:$0xff]
  %v1361 = vld [vmem:[%s3 + $0x368] sm:$0xff]
  %v1362 = vld [vmem:[%s3 + $0x370] sm:$0xff]
  %v1363 = vld [vmem:[%s3 + $0x378] sm:$0xff]
  %v1364 = vld [vmem:[%s3 + $0x380] sm:$0xff]
  %v1365 = vld [vmem:[%s3 + $0x388] sm:$0xff]
  %v1366 = vld [vmem:[%s3 + $0x390] sm:$0xff]
  %v1367 = vld [vmem:[%s3 + $0x398] sm:$0xff]
  %v1368 = vld [vmem:[%s3 + $0x3a0] sm:$0xff]
  %v1369 = vld [vmem:[%s3 + $0x3a8] sm:$0xff]
  %v1370 = vld [vmem:[%s3 + $0x3b0] sm:$0xff]
  %v1371 = vld [vmem:[%s3 + $0x3b8] sm:$0xff]
  %v1372 = vld [vmem:[%s3 + $0x3c0] sm:$0xff]
  %v1373 = vld [vmem:[%s3 + $0x3c8] sm:$0xff]
  %v1374 = vld [vmem:[%s3 + $0x3d0] sm:$0xff]
  %v1375 = vld [vmem:[%s3 + $0x3d8] sm:$0xff]
  %v1376 = vld [vmem:[%s3 + $0x3e0] sm:$0xff]
  %v1377 = vld [vmem:[%s3 + $0x3e8] sm:$0xff]
  %v1378 = vld [vmem:[%s3 + $0x3f0] sm:$0xff]
  %v1379 = vld [vmem:[%s3 + $0x3f8] sm:$0xff]
  %v1380 = vld [vmem:[%s3 + $0x400] sm:$0xff]
  %v1381 = vld [vmem:[%s3 + $0x408] sm:$0xff]
  %v1382 = vld [vmem:[%s3 + $0x410] sm:$0xff]
  %v1383 = vld [vmem:[%s3 + $0x418] sm:$0xff]
  %v1384 = vld [vmem:[%s3 + $0x420] sm:$0xff]
  %v1385 = vld [vmem:[%s3 + $0x428] sm:$0xff]
  %v1386 = vld [vmem:[%s3 + $0x430] sm:$0xff]
  %v1387 = vld [vmem:[%s3 + $0x438] sm:$0xff]
  %v1388 = vld [vmem:[%s3 + $0x440] sm:$0xff]
  %v1389 = vld [vmem:[%s3 + $0x448] sm:$0xff]
  %v1390 = vld [vmem:[%s3 + $0x450] sm:$0xff]
  %v1391 = vld [vmem:[%s3 + $0x458] sm:$0xff]
  %v1392 = vld [vmem:[%s3 + $0x460] sm:$0xff]
  %v1393 = vld [vmem:[%s3 + $0x468] sm:$0xff]
  %v1394 = vld [vmem:[%s3 + $0x470] sm:$0xff]
  %v1395 = vld [vmem:[%s3 + $0x478] sm:$0xff]
  %v1396 = vld [vmem:[%s3 + $0x480] sm:$0xff]
  %v1397 = vld [vmem:[%s3 + $0x488] sm:$0xff]
  %v1398 = vld [vmem:[%s3 + $0x490] sm:$0xff]
  %v1399 = vld [vmem:[%s3 + $0x498] sm:$0xff]
  %v1400 = vld [vmem:[%s3 + $0x4a0] sm:$0xff]
  %v1401 = vld [vmem:[%s3 + $0x4a8] sm:$0xff]
  %v1402 = vld [vmem:[%s3 + $0x4b0] sm:$0xff]
  %v1403 = vld [vmem:[%s3 + $0x4b8] sm:$0xff]
  %v1404 = vld [vmem:[%s3 + $0x4c0] sm:$0xff]
  %v1405 = vld [vmem:[%s3 + $0x4c8] sm:$0xff]
  %v1406 = vld [vmem:[%s3 + $0x4d0] sm:$0xff]
  %v1407 = vld [vmem:[%s3 + $0x4d8] sm:$0xff]
  %v1408 = vld [vmem:[%s3 + $0x4e0] sm:$0xff]
  %v1409 = vld [vmem:[%s3 + $0x4e8] sm:$0xff]
  %v1410 = vld [vmem:[%s3 + $0x4f0] sm:$0xff]
  %v1411 = vld [vmem:[%s3 + $0x4f8] sm:$0xff]
  %v1412 = vld [vmem:[%s3 + $0x500] sm:$0xff]
  %v1413 = vld [vmem:[%s3 + $0x508] sm:$0xff]
  %v1414 = vld [vmem:[%s3 + $0x510] sm:$0xff]
  %v1415 = vld [vmem:[%s3 + $0x518] sm:$0xff]
  %v1416 = vld [vmem:[%s3 + $0x520] sm:$0xff]
  %v1417 = vld [vmem:[%s3 + $0x528] sm:$0xff]
  %v1418 = vld [vmem:[%s3 + $0x530] sm:$0xff]
  %v1419 = vld [vmem:[%s3 + $0x538] sm:$0xff]
  %v1420 = vld [vmem:[%s3 + $0x540] sm:$0xff]
  %v1421 = vld [vmem:[%s3 + $0x548] sm:$0xff]
  %v1422 = vld [vmem:[%s3 + $0x550] sm:$0xff]
  %v1423 = vld [vmem:[%s3 + $0x558] sm:$0xff]
  %v1424 = vld [vmem:[%s3 + $0x560] sm:$0xff]
  %v1425 = vld [vmem:[%s3 + $0x568] sm:$0xff]
  %v1426 = vld [vmem:[%s3 + $0x570] sm:$0xff]
  %v1427 = vld [vmem:[%s3 + $0x578] sm:$0xff]
  %v1428 = vld [vmem:[%s3 + $0x580] sm:$0xff]
  %v1429 = vld [vmem:[%s3 + $0x588] sm:$0xff]
  %v1430 = vld [vmem:[%s3 + $0x590] sm:$0xff]
  %v1431 = vld [vmem:[%s3 + $0x598] sm:$0xff]
  %v1432 = vld [vmem:[%s3 + $0x5a0] sm:$0xff]
  %v1433 = vld [vmem:[%s3 + $0x5a8] sm:$0xff]
  %v1434 = vld [vmem:[%s3 + $0x5b0] sm:$0xff]
  %v1435 = vld [vmem:[%s3 + $0x5b8] sm:$0xff]
  %v1436 = vld [vmem:[%s3 + $0x5c0] sm:$0xff]
  %v1437 = vld [vmem:[%s3 + $0x5c8] sm:$0xff]
  %v1438 = vld [vmem:[%s3 + $0x5d0] sm:$0xff]
  %v1439 = vld [vmem:[%s3 + $0x5d8] sm:$0xff]
  %v1440 = vld [vmem:[%s3 + $0x5e0] sm:$0xff]
  %v1441 = vld [vmem:[%s3 + $0x5e8] sm:$0xff]
  %v1442 = vld [vmem:[%s3 + $0x5f0] sm:$0xff]
  %v1443 = vld [vmem:[%s3 + $0x5f8] sm:$0xff]
  %v1444 = vld [vmem:[%s3 + $0x600] sm:$0xff]
  %v1445 = vld [vmem:[%s3 + $0x608] sm:$0xff]
  %v1446 = vld [vmem:[%s3 + $0x610] sm:$0xff]
  %v1447 = vld [vmem:[%s3 + $0x618] sm:$0xff]
  %v1448 = vld [vmem:[%s3 + $0x620] sm:$0xff]
  %v1449 = vld [vmem:[%s3 + $0x628] sm:$0xff]
  %v1450 = vld [vmem:[%s3 + $0x630] sm:$0xff]
  %v1451 = vld [vmem:[%s3 + $0x638] sm:$0xff]
  %v1452 = vld [vmem:[%s3 + $0x640] sm:$0xff]
  %v1453 = vld [vmem:[%s3 + $0x648] sm:$0xff]
  %v1454 = vld [vmem:[%s3 + $0x650] sm:$0xff]
  %v1455 = vld [vmem:[%s3 + $0x658] sm:$0xff]
  %v1456 = vld [vmem:[%s3 + $0x660] sm:$0xff]
  %v1457 = vld [vmem:[%s3 + $0x668] sm:$0xff]
  %v1458 = vld [vmem:[%s3 + $0x670] sm:$0xff]
  %v1459 = vld [vmem:[%s3 + $0x678] sm:$0xff]
  %v1460 = vld [vmem:[%s3 + $0x680] sm:$0xff]
  %v1461 = vld [vmem:[%s3 + $0x688] sm:$0xff]
  %v1462 = vld [vmem:[%s3 + $0x690] sm:$0xff]
  %v1463 = vld [vmem:[%s3 + $0x698] sm:$0xff]
  %v1464 = vld [vmem:[%s3 + $0x6a0] sm:$0xff]
  %v1465 = vld [vmem:[%s3 + $0x6a8] sm:$0xff]
  %v1466 = vld [vmem:[%s3 + $0x6b0] sm:$0xff]
  %v1467 = vld [vmem:[%s3 + $0x6b8] sm:$0xff]
  %v1468 = vld [vmem:[%s3 + $0x6c0] sm:$0xff]
  %v1469 = vld [vmem:[%s3 + $0x6c8] sm:$0xff]
  %v1470 = vld [vmem:[%s3 + $0x6d0] sm:$0xff]
  %v1471 = vld [vmem:[%s3 + $0x6d8] sm:$0xff]
  %v1472 = vld [vmem:[%s3 + $0x6e0] sm:$0xff]
  %v1473 = vld [vmem:[%s3 + $0x6e8] sm:$0xff]
  %v1474 = vld [vmem:[%s3 + $0x6f0] sm:$0xff]
  %v1475 = vld [vmem:[%s3 + $0x6f8] sm:$0xff]
  %v1476 = vld [vmem:[%s3 + $0x700] sm:$0xff]
  %v1477 = vld [vmem:[%s3 + $0x708] sm:$0xff]
  %v1478 = vld [vmem:[%s3 + $0x710] sm:$0xff]
  %v1479 = vld [vmem:[%s3 + $0x718] sm:$0xff]
  %v1480 = vld [vmem:[%s3 + $0x720] sm:$0xff]
  %v1481 = vld [vmem:[%s3 + $0x728] sm:$0xff]
  %v1482 = vld [vmem:[%s3 + $0x730] sm:$0xff]
  %v1483 = vld [vmem:[%s3 + $0x738] sm:$0xff]
  %v1484 = vld [vmem:[%s3 + $0x740] sm:$0xff]
  %v1485 = vld [vmem:[%s3 + $0x748] sm:$0xff]
  %v1486 = vld [vmem:[%s3 + $0x750] sm:$0xff]
  %v1487 = vld [vmem:[%s3 + $0x758] sm:$0xff]
  %v1488 = vld [vmem:[%s3 + $0x760] sm:$0xff]
  %v1489 = vld [vmem:[%s3 + $0x768] sm:$0xff]
  %v1490 = vld [vmem:[%s3 + $0x770] sm:$0xff]
  %v1491 = vld [vmem:[%s3 + $0x778] sm:$0xff]
  %v1492 = vld [vmem:[%s3 + $0x780] sm:$0xff]
  %v1493 = vld [vmem:[%s3 + $0x788] sm:$0xff]
  %v1494 = vld [vmem:[%s3 + $0x790] sm:$0xff]
  %v1495 = vld [vmem:[%s3 + $0x798] sm:$0xff]
  %v1496 = vld [vmem:[%s3 + $0x7a0] sm:$0xff]
  %v1497 = vld [vmem:[%s3 + $0x7a8] sm:$0xff]
  %v1498 = vld [vmem:[%s3 + $0x7b0] sm:$0xff]
  %v1499 = vld [vmem:[%s3 + $0x7b8] sm:$0xff]
  %v1500 = vld [vmem:[%s3 + $0x7c0] sm:$0xff]
  %v1501 = vld [vmem:[%s3 + $0x7c8] sm:$0xff]
  %v1502 = vld [vmem:[%s3 + $0x7d0] sm:$0xff]
  %v1503 = vld [vmem:[%s3 + $0x7d8] sm:$0xff]
  %v1504 = vld [vmem:[%s3 + $0x7e0] sm:$0xff]
  %v1505 = vld [vmem:[%s3 + $0x7e8] sm:$0xff]
  %v1506 = vld [vmem:[%s3 + $0x7f0] sm:$0xff]
  %v1507 = vld [vmem:[%s3 + $0x7f8] sm:$0xff]
  %v1508 = vld [vmem:[%s3 + $0x800] sm:$0xff]
  %v1509 = vld [vmem:[%s3 + $0x808] sm:$0xff]
  %v1510 = vld [vmem:[%s3 + $0x810] sm:$0xff]
  %v1511 = vld [vmem:[%s3 + $0x818] sm:$0xff]
  %v1512 = vld [vmem:[%s3 + $0x820] sm:$0xff]
  %v1513 = vld [vmem:[%s3 + $0x828] sm:$0xff]
  %v1514 = vld [vmem:[%s3 + $0x830] sm:$0xff]
  %v1515 = vld [vmem:[%s3 + $0x838] sm:$0xff]
  %v1516 = vld [vmem:[%s3 + $0x840] sm:$0xff]
  %v1517 = vld [vmem:[%s3 + $0x848] sm:$0xff]
  %v1518 = vld [vmem:[%s3 + $0x850] sm:$0xff]
  %v1519 = vld [vmem:[%s3 + $0x858] sm:$0xff]
  %v1520 = vld [vmem:[%s3 + $0x860] sm:$0xff]
  %v1521 = vld [vmem:[%s3 + $0x868] sm:$0xff]
  %v1522 = vld [vmem:[%s3 + $0x870] sm:$0xff]
  %v1523 = vld [vmem:[%s3 + $0x878] sm:$0xff]
  %v1524 = vld [vmem:[%s3 + $0x880] sm:$0xff]
  %v1525 = vld [vmem:[%s3 + $0x888] sm:$0xff]
  %v1526 = vld [vmem:[%s3 + $0x890] sm:$0xff]
  %v1527 = vld [vmem:[%s3 + $0x898] sm:$0xff]
  %v1528 = vld [vmem:[%s3 + $0x8a0] sm:$0xff]
  %v1529 = vld [vmem:[%s3 + $0x8a8] sm:$0xff]
  %v1530 = vld [vmem:[%s3 + $0x8b0] sm:$0xff]
  %v1531 = vld [vmem:[%s3 + $0x8b8] sm:$0xff]
  %v1532 = vld [vmem:[%s3 + $0x8c0] sm:$0xff]
  %v1533 = vld [vmem:[%s3 + $0x8c8] sm:$0xff]
  %v1534 = vld [vmem:[%s3 + $0x8d0] sm:$0xff]
  %v1535 = vld [vmem:[%s3 + $0x8d8] sm:$0xff]
  %v1536 = vld [vmem:[%s3 + $0x8e0] sm:$0xff]
  %v1537 = vld [vmem:[%s3 + $0x8e8] sm:$0xff]
  %v1538 = vld [vmem:[%s3 + $0x8f0] sm:$0xff]
  %v1539 = vld [vmem:[%s3 + $0x8f8] sm:$0xff]
  %v1540 = vld [vmem:[%s3 + $0x900] sm:$0xff]
  %v1541 = vld [vmem:[%s3 + $0x908] sm:$0xff]
  %v1542 = vld [vmem:[%s3 + $0x910] sm:$0xff]
  %v1543 = vld [vmem:[%s3 + $0x918] sm:$0xff]
  %v1544 = vld [vmem:[%s3 + $0x920] sm:$0xff]
  %v1545 = vld [vmem:[%s3 + $0x928] sm:$0xff]
  %v1546 = vld [vmem:[%s3 + $0x930] sm:$0xff]
  %v1547 = vld [vmem:[%s3 + $0x938] sm:$0xff]
  %v1548 = vld [vmem:[%s3 + $0x940] sm:$0xff]
  %v1549 = vld [vmem:[%s3 + $0x948] sm:$0xff]
  %v1550 = vld [vmem:[%s3 + $0x950] sm:$0xff]
  %v1551 = vld [vmem:[%s3 + $0x958] sm:$0xff]
  %v1552 = vld [vmem:[%s3 + $0x960] sm:$0xff]
  %v1553 = vld [vmem:[%s3 + $0x968] sm:$0xff]
  %v1554 = vld [vmem:[%s3 + $0x970] sm:$0xff]
  %v1555 = vld [vmem:[%s3 + $0x978] sm:$0xff]
  %v1556 = vld [vmem:[%s3 + $0x980] sm:$0xff]
  %v1557 = vld [vmem:[%s3 + $0x988] sm:$0xff]
  %v1558 = vld [vmem:[%s3 + $0x990] sm:$0xff]
  %v1559 = vld [vmem:[%s3 + $0x998] sm:$0xff]
  %v1560 = vld [vmem:[%s3 + $0x9a0] sm:$0xff]
  %v1561 = vld [vmem:[%s3 + $0x9a8] sm:$0xff]
  %v1562 = vld [vmem:[%s3 + $0x9b0] sm:$0xff]
  %v1563 = vld [vmem:[%s3 + $0x9b8] sm:$0xff]
  %v1564 = vld [vmem:[%s3 + $0x9c0] sm:$0xff]
  %v1565 = vld [vmem:[%s3 + $0x9c8] sm:$0xff]
  %v1566 = vld [vmem:[%s3 + $0x9d0] sm:$0xff]
  %v1567 = vld [vmem:[%s3 + $0x9d8] sm:$0xff]
  %v1568 = vld [vmem:[%s3 + $0x9e0] sm:$0xff]
  %v1569 = vld [vmem:[%s3 + $0x9e8] sm:$0xff]
  %v1570 = vld [vmem:[%s3 + $0x9f0] sm:$0xff]
  %v1571 = vld [vmem:[%s3 + $0x9f8] sm:$0xff]
  %v1572 = vld [vmem:[%s3 + $0xa00] sm:$0xff]
  %v1573 = vld [vmem:[%s3 + $0xa08] sm:$0xff]
  %v1574 = vld [vmem:[%s3 + $0xa10] sm:$0xff]
  %v1575 = vld [vmem:[%s3 + $0xa18] sm:$0xff]
  %v1576 = vld [vmem:[%s3 + $0xa20] sm:$0xff]
  %v1577 = vld [vmem:[%s3 + $0xa28] sm:$0xff]
  %v1578 = vld [vmem:[%s3 + $0xa30] sm:$0xff]
  %v1579 = vld [vmem:[%s3 + $0xa38] sm:$0xff]
  %v1580 = vld [vmem:[%s3 + $0xa40] sm:$0xff]
  %v1581 = vld [vmem:[%s3 + $0xa48] sm:$0xff]
  %v1582 = vld [vmem:[%s3 + $0xa50] sm:$0xff]
  %v1583 = vld [vmem:[%s3 + $0xa58] sm:$0xff]
  %v1584 = vld [vmem:[%s3 + $0xa60] sm:$0xff]
  %v1585 = vld [vmem:[%s3 + $0xa68] sm:$0xff]
  %v1586 = vld [vmem:[%s3 + $0xa70] sm:$0xff]
  %v1587 = vld [vmem:[%s3 + $0xa78] sm:$0xff]
  %v1588 = vld [vmem:[%s3 + $0xa80] sm:$0xff]
  %v1589 = vld [vmem:[%s3 + $0xa88] sm:$0xff]
  %v1590 = vld [vmem:[%s3 + $0xa90] sm:$0xff]
  %v1591 = vld [vmem:[%s3 + $0xa98] sm:$0xff]
  %v1592 = vld [vmem:[%s3 + $0xaa0] sm:$0xff]
  %v1593 = vld [vmem:[%s3 + $0xaa8] sm:$0xff]
  %v1594 = vld [vmem:[%s3 + $0xab0] sm:$0xff]
  %v1595 = vld [vmem:[%s3 + $0xab8] sm:$0xff]
  %v1596 = vld [vmem:[%s3 + $0xac0] sm:$0xff]
  %v1597 = vld [vmem:[%s3 + $0xac8] sm:$0xff]
  %v1598 = vld [vmem:[%s3 + $0xad0] sm:$0xff]
  %v1599 = vld [vmem:[%s3 + $0xad8] sm:$0xff]
  %v1600 = vld [vmem:[%s3 + $0xae0] sm:$0xff]
  %v1601 = vld [vmem:[%s3 + $0xae8] sm:$0xff]
  %v1602 = vld [vmem:[%s3 + $0xaf0] sm:$0xff]
  %v1603 = vld [vmem:[%s3 + $0xaf8] sm:$0xff]
  %v1604 = vld [vmem:[%s3 + $0xb00] sm:$0xff]
  %v1605 = vld [vmem:[%s3 + $0xb08] sm:$0xff]
  %v1606 = vld [vmem:[%s3 + $0xb10] sm:$0xff]
  %v1607 = vld [vmem:[%s3 + $0xb18] sm:$0xff]
  %v1608 = vld [vmem:[%s3 + $0xb20] sm:$0xff]
  %v1609 = vld [vmem:[%s3 + $0xb28] sm:$0xff]
  %v1610 = vld [vmem:[%s3 + $0xb30] sm:$0xff]
  %v1611 = vld [vmem:[%s3 + $0xb38] sm:$0xff]
  %v1612 = vld [vmem:[%s3 + $0xb40] sm:$0xff]
  %v1613 = vld [vmem:[%s3 + $0xb48] sm:$0xff]
  %v1614 = vld [vmem:[%s3 + $0xb50] sm:$0xff]
  %v1615 = vld [vmem:[%s3 + $0xb58] sm:$0xff]
  %v1616 = vld [vmem:[%s3 + $0xb60] sm:$0xff]
  %v1617 = vld [vmem:[%s3 + $0xb68] sm:$0xff]
  %v1618 = vld [vmem:[%s3 + $0xb70] sm:$0xff]
  %v1619 = vld [vmem:[%s3 + $0xb78] sm:$0xff]
  %v1620 = vld [vmem:[%s3 + $0xb80] sm:$0xff]
  %v1621 = vld [vmem:[%s3 + $0xb88] sm:$0xff]
  %v1622 = vld [vmem:[%s3 + $0xb90] sm:$0xff]
  %v1623 = vld [vmem:[%s3 + $0xb98] sm:$0xff]
  %v1624 = vld [vmem:[%s3 + $0xba0] sm:$0xff]
  %v1625 = vld [vmem:[%s3 + $0xba8] sm:$0xff]
  %v1626 = vld [vmem:[%s3 + $0xbb0] sm:$0xff]
  %v1627 = vld [vmem:[%s3 + $0xbb8] sm:$0xff]
  %v1628 = vld [vmem:[%s3 + $0xbc0] sm:$0xff]
  %v1629 = vld [vmem:[%s3 + $0xbc8] sm:$0xff]
  %v1630 = vld [vmem:[%s3 + $0xbd0] sm:$0xff]
  %v1631 = vld [vmem:[%s3 + $0xbd8] sm:$0xff]
  %v1632 = vld [vmem:[%s3 + $0xbe0] sm:$0xff]
  %v1633 = vld [vmem:[%s3 + $0xbe8] sm:$0xff]
  %v1634 = vld [vmem:[%s3 + $0xbf0] sm:$0xff]
  %v1635 = vld [vmem:[%s3 + $0xbf8] sm:$0xff]
  %v1636 = vld [vmem:[%s3 + $0xc00] sm:$0xff]
  %v1637 = vld [vmem:[%s3 + $0xc08] sm:$0xff]
  %v1638 = vld [vmem:[%s3 + $0xc10] sm:$0xff]
  %v1639 = vld [vmem:[%s3 + $0xc18] sm:$0xff]
  %v1640 = vld [vmem:[%s3 + $0xc20] sm:$0xff]
  %v1641 = vld [vmem:[%s3 + $0xc28] sm:$0xff]
  %v1642 = vld [vmem:[%s3 + $0xc30] sm:$0xff]
  %v1643 = vld [vmem:[%s3 + $0xc38] sm:$0xff]
  %v1644 = vld [vmem:[%s3 + $0xc40] sm:$0xff]
  %v1645 = vld [vmem:[%s3 + $0xc48] sm:$0xff]
  %v1646 = vld [vmem:[%s3 + $0xc50] sm:$0xff]
  %v1647 = vld [vmem:[%s3 + $0xc58] sm:$0xff]
  %v1648 = vld [vmem:[%s3 + $0xc60] sm:$0xff]
  %v1649 = vld [vmem:[%s3 + $0xc68] sm:$0xff]
  %v1650 = vld [vmem:[%s3 + $0xc70] sm:$0xff]
  %v1651 = vld [vmem:[%s3 + $0xc78] sm:$0xff]
  %v1652 = vld [vmem:[%s3 + $0xc80] sm:$0xff]
  %v1653 = vld [vmem:[%s3 + $0xc88] sm:$0xff]
  %v1654 = vld [vmem:[%s3 + $0xc90] sm:$0xff]
  %v1655 = vld [vmem:[%s3 + $0xc98] sm:$0xff]
  %v1656 = vld [vmem:[%s3 + $0xca0] sm:$0xff]
  %v1657 = vld [vmem:[%s3 + $0xca8] sm:$0xff]
  %v1658 = vld [vmem:[%s3 + $0xcb0] sm:$0xff]
  %v1659 = vld [vmem:[%s3 + $0xcb8] sm:$0xff]
  %v1660 = vld [vmem:[%s3 + $0xcc0] sm:$0xff]
  %v1661 = vld [vmem:[%s3 + $0xcc8] sm:$0xff]
  %v1662 = vld [vmem:[%s3 + $0xcd0] sm:$0xff]
  %v1663 = vld [vmem:[%s3 + $0xcd8] sm:$0xff]
  %v1664 = vld [vmem:[%s3 + $0xce0] sm:$0xff]
  %v1665 = vld [vmem:[%s3 + $0xce8] sm:$0xff]
  %v1666 = vld [vmem:[%s3 + $0xcf0] sm:$0xff]
  %v1667 = vld [vmem:[%s3 + $0xcf8] sm:$0xff]
  %v1668 = vld [vmem:[%s3 + $0xd00] sm:$0xff]
  %v1669 = vld [vmem:[%s3 + $0xd08] sm:$0xff]
  %v1670 = vld [vmem:[%s3 + $0xd10] sm:$0xff]
  %v1671 = vld [vmem:[%s3 + $0xd18] sm:$0xff]
  %v1672 = vld [vmem:[%s3 + $0xd20] sm:$0xff]
  %v1673 = vld [vmem:[%s3 + $0xd28] sm:$0xff]
  %v1674 = vld [vmem:[%s3 + $0xd30] sm:$0xff]
  %v1675 = vld [vmem:[%s3 + $0xd38] sm:$0xff]
  %v1676 = vld [vmem:[%s3 + $0xd40] sm:$0xff]
  %v1677 = vld [vmem:[%s3 + $0xd48] sm:$0xff]
  %v1678 = vld [vmem:[%s3 + $0xd50] sm:$0xff]
  %v1679 = vld [vmem:[%s3 + $0xd58] sm:$0xff]
  %v1680 = vld [vmem:[%s3 + $0xd60] sm:$0xff]
  %v1681 = vld [vmem:[%s3 + $0xd68] sm:$0xff]
  %v1682 = vld [vmem:[%s3 + $0xd70] sm:$0xff]
  %v1683 = vld [vmem:[%s3 + $0xd78] sm:$0xff]
  %v1684 = vld [vmem:[%s3 + $0xd80] sm:$0xff]
  %v1685 = vld [vmem:[%s3 + $0xd88] sm:$0xff]
  %v1686 = vld [vmem:[%s3 + $0xd90] sm:$0xff]
  %v1687 = vld [vmem:[%s3 + $0xd98] sm:$0xff]
  %v1688 = vld [vmem:[%s3 + $0xda0] sm:$0xff]
  %v1689 = vld [vmem:[%s3 + $0xda8] sm:$0xff]
  %v1690 = vld [vmem:[%s3 + $0xdb0] sm:$0xff]
  %v1691 = vld [vmem:[%s3 + $0xdb8] sm:$0xff]
  %v1692 = vld [vmem:[%s3 + $0xdc0] sm:$0xff]
  %v1693 = vld [vmem:[%s3 + $0xdc8] sm:$0xff]
  %v1694 = vld [vmem:[%s3 + $0xdd0] sm:$0xff]
  %v1695 = vld [vmem:[%s3 + $0xdd8] sm:$0xff]
  %v1696 = vld [vmem:[%s3 + $0xde0] sm:$0xff]
  %v1697 = vld [vmem:[%s3 + $0xde8] sm:$0xff]
  %v1698 = vld [vmem:[%s3 + $0xdf0] sm:$0xff]
  %v1699 = vld [vmem:[%s3 + $0xdf8] sm:$0xff]
  %v1700 = vld [vmem:[%s3 + $0xe00] sm:$0xff]
  %v1701 = vld [vmem:[%s3 + $0xe08] sm:$0xff]
  %v1702 = vld [vmem:[%s3 + $0xe10] sm:$0xff]
  %v1703 = vld [vmem:[%s3 + $0xe18] sm:$0xff]
  %v1704 = vld [vmem:[%s3 + $0xe20] sm:$0xff]
  %v1705 = vld [vmem:[%s3 + $0xe28] sm:$0xff]
  %v1706 = vld [vmem:[%s3 + $0xe30] sm:$0xff]
  %v1707 = vld [vmem:[%s3 + $0xe38] sm:$0xff]
  %v1708 = vld [vmem:[%s3 + $0xe40] sm:$0xff]
  %v1709 = vld [vmem:[%s3 + $0xe48] sm:$0xff]
  %v1710 = vld [vmem:[%s3 + $0xe50] sm:$0xff]
  %v1711 = vld [vmem:[%s3 + $0xe58] sm:$0xff]
  %v1712 = vld [vmem:[%s3 + $0xe60] sm:$0xff]
  %v1713 = vld [vmem:[%s3 + $0xe68] sm:$0xff]
  %v1714 = vld [vmem:[%s3 + $0xe70] sm:$0xff]
  %v1715 = vld [vmem:[%s3 + $0xe78] sm:$0xff]
  %v1716 = vld [vmem:[%s3 + $0xe80] sm:$0xff]
  %v1717 = vld [vmem:[%s3 + $0xe88] sm:$0xff]
  %v1718 = vld [vmem:[%s3 + $0xe90] sm:$0xff]
  %v1719 = vld [vmem:[%s3 + $0xe98] sm:$0xff]
  %v1720 = vld [vmem:[%s3 + $0xea0] sm:$0xff]
  %v1721 = vld [vmem:[%s3 + $0xea8] sm:$0xff]
  %v1722 = vld [vmem:[%s3 + $0xeb0] sm:$0xff]
  %v1723 = vld [vmem:[%s3 + $0xeb8] sm:$0xff]
  %v1724 = vld [vmem:[%s3 + $0xec0] sm:$0xff]
  %v1725 = vld [vmem:[%s3 + $0xec8] sm:$0xff]
  %v1726 = vld [vmem:[%s3 + $0xed0] sm:$0xff]
  %v1727 = vld [vmem:[%s3 + $0xed8] sm:$0xff]
  %v1728 = vld [vmem:[%s3 + $0xee0] sm:$0xff]
  %v1729 = vld [vmem:[%s3 + $0xee8] sm:$0xff]
  %v1730 = vld [vmem:[%s3 + $0xef0] sm:$0xff]
  %v1731 = vld [vmem:[%s3 + $0xef8] sm:$0xff]
  %v1732 = vld [vmem:[%s3 + $0xf00] sm:$0xff]
  %v1733 = vld [vmem:[%s3 + $0xf08] sm:$0xff]
  %v1734 = vld [vmem:[%s3 + $0xf10] sm:$0xff]
  %v1735 = vld [vmem:[%s3 + $0xf18] sm:$0xff]
  %v1736 = vld [vmem:[%s3 + $0xf20] sm:$0xff]
  %v1737 = vld [vmem:[%s3 + $0xf28] sm:$0xff]
  %v1738 = vld [vmem:[%s3 + $0xf30] sm:$0xff]
  %v1739 = vld [vmem:[%s3 + $0xf38] sm:$0xff]
  %v1740 = vld [vmem:[%s3 + $0xf40] sm:$0xff]
  %v1741 = vld [vmem:[%s3 + $0xf48] sm:$0xff]
  %v1742 = vld [vmem:[%s3 + $0xf50] sm:$0xff]
  %v1743 = vld [vmem:[%s3 + $0xf58] sm:$0xff]
  %v1744 = vld [vmem:[%s3 + $0xf60] sm:$0xff]
  %v1745 = vld [vmem:[%s3 + $0xf68] sm:$0xff]
  %v1746 = vld [vmem:[%s3 + $0xf70] sm:$0xff]
  %v1747 = vld [vmem:[%s3 + $0xf78] sm:$0xff]
  %v1748 = vld [vmem:[%s3 + $0xf80] sm:$0xff]
  %v1749 = vld [vmem:[%s3 + $0xf88] sm:$0xff]
  %v1750 = vld [vmem:[%s3 + $0xf90] sm:$0xff]
  %v1751 = vld [vmem:[%s3 + $0xf98] sm:$0xff]
  %v1752 = vld [vmem:[%s3 + $0xfa0] sm:$0xff]
  %v1753 = vld [vmem:[%s3 + $0xfa8] sm:$0xff]
  %v1754 = vld [vmem:[%s3 + $0xfb0] sm:$0xff]
  %v1755 = vld [vmem:[%s3 + $0xfb8] sm:$0xff]
  %v1756 = vld [vmem:[%s3 + $0xfc0] sm:$0xff]
  %v1757 = vld [vmem:[%s3 + $0xfc8] sm:$0xff]
  %v1758 = vld [vmem:[%s3 + $0xfd0] sm:$0xff]
  %v1759 = vld [vmem:[%s3 + $0xfd8] sm:$0xff]
  %v1760 = vld [vmem:[%s3 + $0xfe0] sm:$0xff]
  %v1761 = vld [vmem:[%s3 + $0xfe8] sm:$0xff]
  %v1762 = vld [vmem:[%s3 + $0xff0] sm:$0xff]
  %v1763 = vld [vmem:[%s3 + $0xff8] sm:$0xff]
  %v1764 = vld [vmem:[%s3 + $0x1000] sm:$0xff]
  %v1765 = vld [vmem:[%s3 + $0x1008] sm:$0xff]
  %v1766 = vld [vmem:[%s3 + $0x1010] sm:$0xff]
  %v1767 = vld [vmem:[%s3 + $0x1018] sm:$0xff]
  %v1768 = vld [vmem:[%s3 + $0x1020] sm:$0xff]
  %v1769 = vld [vmem:[%s3 + $0x1028] sm:$0xff]
  %v1770 = vld [vmem:[%s3 + $0x1030] sm:$0xff]
  %v1771 = vld [vmem:[%s3 + $0x1038] sm:$0xff]
  %v1772 = vld [vmem:[%s3 + $0x1040] sm:$0xff]
  %v1773 = vld [vmem:[%s3 + $0x1048] sm:$0xff]
  %v1774 = vld [vmem:[%s3 + $0x1050] sm:$0xff]
  %v1775 = vld [vmem:[%s3 + $0x1058] sm:$0xff]
  %v1776 = vld [vmem:[%s3 + $0x1060] sm:$0xff]
  %v1777 = vld [vmem:[%s3 + $0x1068] sm:$0xff]
  %v1778 = vld [vmem:[%s3 + $0x1070] sm:$0xff]
  %v1779 = vld [vmem:[%s3 + $0x1078] sm:$0xff]
  %v1780 = vld [vmem:[%s3 + $0x1080] sm:$0xff]
  %v1781 = vld [vmem:[%s3 + $0x1088] sm:$0xff]
  %v1782 = vld [vmem:[%s3 + $0x1090] sm:$0xff]
  %v1783 = vld [vmem:[%s3 + $0x1098] sm:$0xff]
  %v1784 = vld [vmem:[%s3 + $0x10a0] sm:$0xff]
  %v1785 = vld [vmem:[%s3 + $0x10a8] sm:$0xff]
  %v1786 = vld [vmem:[%s3 + $0x10b0] sm:$0xff]
  %v1787 = vld [vmem:[%s3 + $0x10b8] sm:$0xff]
  %v1788 = vld [vmem:[%s3 + $0x10c0] sm:$0xff]
  %v1789 = vld [vmem:[%s3 + $0x10c8] sm:$0xff]
  %v1790 = vld [vmem:[%s3 + $0x10d0] sm:$0xff]
  %v1791 = vld [vmem:[%s3 + $0x10d8] sm:$0xff]
  %v1792 = vld [vmem:[%s3 + $0x10e0] sm:$0xff]
  %v1793 = vld [vmem:[%s3 + $0x10e8] sm:$0xff]
  %v1794 = vld [vmem:[%s3 + $0x10f0] sm:$0xff]
  %v1795 = vld [vmem:[%s3 + $0x10f8] sm:$0xff]
  %v1796 = vld [vmem:[%s3 + $0x1100] sm:$0xff]
  %v1797 = vld [vmem:[%s3 + $0x1108] sm:$0xff]
  %v1798 = vld [vmem:[%s3 + $0x1110] sm:$0xff]
  %v1799 = vld [vmem:[%s3 + $0x1118] sm:$0xff]
  %v1800 = vld [vmem:[%s3 + $0x1120] sm:$0xff]
  %v1801 = vld [vmem:[%s3 + $0x1128] sm:$0xff]
  %v1802 = vld [vmem:[%s3 + $0x1130] sm:$0xff]
  %v1803 = vld [vmem:[%s3 + $0x1138] sm:$0xff]
  %v1804 = vld [vmem:[%s3 + $0x1140] sm:$0xff]
  %v1805 = vld [vmem:[%s3 + $0x1148] sm:$0xff]
  %v1806 = vld [vmem:[%s3 + $0x1150] sm:$0xff]
  %v1807 = vld [vmem:[%s3 + $0x1158] sm:$0xff]
  %v1808 = vld [vmem:[%s3 + $0x1160] sm:$0xff]
  %v1809 = vld [vmem:[%s3 + $0x1168] sm:$0xff]
  %v1810 = vld [vmem:[%s3 + $0x1170] sm:$0xff]
  %v1811 = vld [vmem:[%s3 + $0x1178] sm:$0xff]
  %v1812 = vld [vmem:[%s3 + $0x1180] sm:$0xff]
  %v1813 = vld [vmem:[%s3 + $0x1188] sm:$0xff]
  %v1814 = vld [vmem:[%s3 + $0x1190] sm:$0xff]
  %v1815 = vld [vmem:[%s3 + $0x1198] sm:$0xff]
  %v1816 = vld [vmem:[%s3 + $0x11a0] sm:$0xff]
  %v1817 = vld [vmem:[%s3 + $0x11a8] sm:$0xff]
  %v1818 = vld [vmem:[%s3 + $0x11b0] sm:$0xff]
  %v1819 = vld [vmem:[%s3 + $0x11b8] sm:$0xff]
  %v1820 = vld [vmem:[%s3 + $0x11c0] sm:$0xff]
  %v1821 = vld [vmem:[%s3 + $0x11c8] sm:$0xff]
  %v1822 = vld [vmem:[%s3 + $0x11d0] sm:$0xff]
  %v1823 = vld [vmem:[%s3 + $0x11d8] sm:$0xff]
  %v1824 = vld [vmem:[%s3 + $0x11e0] sm:$0xff]
  %v1825 = vld [vmem:[%s3 + $0x11e8] sm:$0xff]
  %v1826 = vld [vmem:[%s3 + $0x11f0] sm:$0xff]
  %v1827 = vld [vmem:[%s3 + $0x11f8] sm:$0xff]
  %v1828 = vld [vmem:[%s3 + $0x1200] sm:$0xff]
  %v1829 = vld [vmem:[%s3 + $0x1208] sm:$0xff]
  %v1830 = vld [vmem:[%s3 + $0x1210] sm:$0xff]
  %v1831 = vld [vmem:[%s3 + $0x1218] sm:$0xff]
  %v1832 = vld [vmem:[%s3 + $0x1220] sm:$0xff]
  %v1833 = vld [vmem:[%s3 + $0x1228] sm:$0xff]
  %v1834 = vld [vmem:[%s3 + $0x1230] sm:$0xff]
  %v1835 = vld [vmem:[%s3 + $0x1238] sm:$0xff]
  %v1836 = vld [vmem:[%s3 + $0x1240] sm:$0xff]
  %v1837 = vld [vmem:[%s3 + $0x1248] sm:$0xff]
  %v1838 = vld [vmem:[%s3 + $0x1250] sm:$0xff]
  %v1839 = vld [vmem:[%s3 + $0x1258] sm:$0xff]
  %v1840 = vld [vmem:[%s3 + $0x1260] sm:$0xff]
  %v1841 = vld [vmem:[%s3 + $0x1268] sm:$0xff]
  %v1842 = vld [vmem:[%s3 + $0x1270] sm:$0xff]
  %v1843 = vld [vmem:[%s3 + $0x1278] sm:$0xff]
  %v1844 = vld [vmem:[%s3 + $0x1280] sm:$0xff]
  %v1845 = vld [vmem:[%s3 + $0x1288] sm:$0xff]
  %v1846 = vld [vmem:[%s3 + $0x1290] sm:$0xff]
  %v1847 = vld [vmem:[%s3 + $0x1298] sm:$0xff]
  %v1848 = vld [vmem:[%s3 + $0x12a0] sm:$0xff]
  %v1849 = vld [vmem:[%s3 + $0x12a8] sm:$0xff]
  %v1850 = vld [vmem:[%s3 + $0x12b0] sm:$0xff]
  %v1851 = vld [vmem:[%s3 + $0x12b8] sm:$0xff]
  %v1852 = vld [vmem:[%s3 + $0x12c0] sm:$0xff]
  %v1853 = vld [vmem:[%s3 + $0x12c8] sm:$0xff]
  %v1854 = vld [vmem:[%s3 + $0x12d0] sm:$0xff]
  %v1855 = vld [vmem:[%s3 + $0x12d8] sm:$0xff]
  %v1856 = vld [vmem:[%s3 + $0x12e0] sm:$0xff]
  %v1857 = vld [vmem:[%s3 + $0x12e8] sm:$0xff]
  %v1858 = vld [vmem:[%s3 + $0x12f0] sm:$0xff]
  %v1859 = vld [vmem:[%s3 + $0x12f8] sm:$0xff]
  %v1860 = vld [vmem:[%s3 + $0x1300] sm:$0xff]
  %v1861 = vld [vmem:[%s3 + $0x1308] sm:$0xff]
  %v1862 = vld [vmem:[%s3 + $0x1310] sm:$0xff]
  %v1863 = vld [vmem:[%s3 + $0x1318] sm:$0xff]
  %v1864 = vld [vmem:[%s3 + $0x1320] sm:$0xff]
  %v1865 = vld [vmem:[%s3 + $0x1328] sm:$0xff]
  %v1866 = vld [vmem:[%s3 + $0x1330] sm:$0xff]
  %v1867 = vld [vmem:[%s3 + $0x1338] sm:$0xff]
  %v1868 = vld [vmem:[%s3 + $0x1340] sm:$0xff]
  %v1869 = vld [vmem:[%s3 + $0x1348] sm:$0xff]
  %v1870 = vld [vmem:[%s3 + $0x1350] sm:$0xff]
  %v1871 = vld [vmem:[%s3 + $0x1358] sm:$0xff]
  %v1872 = vld [vmem:[%s3 + $0x1360] sm:$0xff]
  %v1873 = vld [vmem:[%s3 + $0x1368] sm:$0xff]
  %v1874 = vld [vmem:[%s3 + $0x1370] sm:$0xff]
  %v1875 = vld [vmem:[%s3 + $0x1378] sm:$0xff]
  %v1876 = vld [vmem:[%s3 + $0x1380] sm:$0xff]
  %v1877 = vld [vmem:[%s3 + $0x1388] sm:$0xff]
  %v1878 = vld [vmem:[%s3 + $0x1390] sm:$0xff]
  %v1879 = vld [vmem:[%s3 + $0x1398] sm:$0xff]
  %v1880 = vld [vmem:[%s3 + $0x13a0] sm:$0xff]
  %v1881 = vld [vmem:[%s3 + $0x13a8] sm:$0xff]
  %v1882 = vld [vmem:[%s3 + $0x13b0] sm:$0xff]
  %v1883 = vld [vmem:[%s3 + $0x13b8] sm:$0xff]
  %v1884 = vld [vmem:[%s3 + $0x13c0] sm:$0xff]
  %v1885 = vld [vmem:[%s3 + $0x13c8] sm:$0xff]
  %v1886 = vld [vmem:[%s3 + $0x13d0] sm:$0xff]
  %v1887 = vld [vmem:[%s3 + $0x13d8] sm:$0xff]
  %v1888 = vld [vmem:[%s3 + $0x13e0] sm:$0xff]
  %v1889 = vld [vmem:[%s3 + $0x13e8] sm:$0xff]
  %v1890 = vld [vmem:[%s3 + $0x13f0] sm:$0xff]
  %v1891 = vld [vmem:[%s3 + $0x13f8] sm:$0xff]
  %v1892 = vld [vmem:[%s3 + $0x1400] sm:$0xff]
  %v1893 = vld [vmem:[%s3 + $0x1408] sm:$0xff]
  %v1894 = vld [vmem:[%s3 + $0x1410] sm:$0xff]
  %v1895 = vld [vmem:[%s3 + $0x1418] sm:$0xff]
  %v1896 = vld [vmem:[%s3 + $0x1420] sm:$0xff]
  %v1897 = vld [vmem:[%s3 + $0x1428] sm:$0xff]
  %v1898 = vld [vmem:[%s3 + $0x1430] sm:$0xff]
  %v1899 = vld [vmem:[%s3 + $0x1438] sm:$0xff]
  %v1900 = vld [vmem:[%s3 + $0x1440] sm:$0xff]
  %v1901 = vld [vmem:[%s3 + $0x1448] sm:$0xff]
  %v1902 = vld [vmem:[%s3 + $0x1450] sm:$0xff]
  %v1903 = vld [vmem:[%s3 + $0x1458] sm:$0xff]
  %v1904 = vld [vmem:[%s3 + $0x1460] sm:$0xff]
  %v1905 = vld [vmem:[%s3 + $0x1468] sm:$0xff]
  %v1906 = vld [vmem:[%s3 + $0x1470] sm:$0xff]
  %v1907 = vld [vmem:[%s3 + $0x1478] sm:$0xff]
  %v1908 = vld [vmem:[%s3 + $0x1480] sm:$0xff]
  %v1909 = vld [vmem:[%s3 + $0x1488] sm:$0xff]
  %v1910 = vld [vmem:[%s3 + $0x1490] sm:$0xff]
  %v1911 = vld [vmem:[%s3 + $0x1498] sm:$0xff]
  %v1912 = vld [vmem:[%s3 + $0x14a0] sm:$0xff]
  %v1913 = vld [vmem:[%s3 + $0x14a8] sm:$0xff]
  %v1914 = vld [vmem:[%s3 + $0x14b0] sm:$0xff]
  %v1915 = vld [vmem:[%s3 + $0x14b8] sm:$0xff]
  %v1916 = vld [vmem:[%s3 + $0x14c0] sm:$0xff]
  %v1917 = vld [vmem:[%s3 + $0x14c8] sm:$0xff]
  %v1918 = vld [vmem:[%s3 + $0x14d0] sm:$0xff]
  %v1919 = vld [vmem:[%s3 + $0x14d8] sm:$0xff]
  %v1920 = vld [vmem:[%s3 + $0x14e0] sm:$0xff]
  %v1921 = vld [vmem:[%s3 + $0x14e8] sm:$0xff]
  %v1922 = vld [vmem:[%s3 + $0x14f0] sm:$0xff]
  %v1923 = vld [vmem:[%s3 + $0x14f8] sm:$0xff]
  %v1924 = vld [vmem:[%s3 + $0x1500] sm:$0xff]
  %v1925 = vld [vmem:[%s3 + $0x1508] sm:$0xff]
  %v1926 = vld [vmem:[%s3 + $0x1510] sm:$0xff]
  %v1927 = vld [vmem:[%s3 + $0x1518] sm:$0xff]
  %v1928 = vld [vmem:[%s3 + $0x1520] sm:$0xff]
  %v1929 = vld [vmem:[%s3 + $0x1528] sm:$0xff]
  %v1930 = vld [vmem:[%s3 + $0x1530] sm:$0xff]
  %v1931 = vld [vmem:[%s3 + $0x1538] sm:$0xff]
  %v1932 = vld [vmem:[%s3 + $0x1540] sm:$0xff]
  %v1933 = vld [vmem:[%s3 + $0x1548] sm:$0xff]
  %v1934 = vld [vmem:[%s3 + $0x1550] sm:$0xff]
  %v1935 = vld [vmem:[%s3 + $0x1558] sm:$0xff]
  %v1936 = vld [vmem:[%s3 + $0x1560] sm:$0xff]
  %v1937 = vld [vmem:[%s3 + $0x1568] sm:$0xff]
  %v1938 = vld [vmem:[%s3 + $0x1570] sm:$0xff]
  %v1939 = vld [vmem:[%s3 + $0x1578] sm:$0xff]
  %v1940 = vld [vmem:[%s3 + $0x1580] sm:$0xff]
  %v1941 = vld [vmem:[%s3 + $0x1588] sm:$0xff]
  %v1942 = vld [vmem:[%s3 + $0x1590] sm:$0xff]
  %v1943 = vld [vmem:[%s3 + $0x1598] sm:$0xff]
  %v1944 = vld [vmem:[%s3 + $0x15a0] sm:$0xff]
  %v1945 = vld [vmem:[%s3 + $0x15a8] sm:$0xff]
  %v1946 = vld [vmem:[%s3 + $0x15b0] sm:$0xff]
  %v1947 = vld [vmem:[%s3 + $0x15b8] sm:$0xff]
  %v1948 = vld [vmem:[%s3 + $0x15c0] sm:$0xff]
  %v1949 = vld [vmem:[%s3 + $0x15c8] sm:$0xff]
  %v1950 = vld [vmem:[%s3 + $0x15d0] sm:$0xff]
  %v1951 = vld [vmem:[%s3 + $0x15d8] sm:$0xff]
  %v1952 = vld [vmem:[%s3 + $0x15e0] sm:$0xff]
  %v1953 = vld [vmem:[%s3 + $0x15e8] sm:$0xff]
  %v1954 = vld [vmem:[%s3 + $0x15f0] sm:$0xff]
  %v1955 = vld [vmem:[%s3 + $0x15f8] sm:$0xff]
  %v1956 = vld [vmem:[%s3 + $0x1600] sm:$0xff]
  %v1957 = vld [vmem:[%s3 + $0x1608] sm:$0xff]
  %v1958 = vld [vmem:[%s3 + $0x1610] sm:$0xff]
  %v1959 = vld [vmem:[%s3 + $0x1618] sm:$0xff]
  %v1960 = vld [vmem:[%s3 + $0x1620] sm:$0xff]
  %v1961 = vld [vmem:[%s3 + $0x1628] sm:$0xff]
  %v1962 = vld [vmem:[%s3 + $0x1630] sm:$0xff]
  %v1963 = vld [vmem:[%s3 + $0x1638] sm:$0xff]
  %v1964 = vld [vmem:[%s3 + $0x1640] sm:$0xff]
  %v1965 = vld [vmem:[%s3 + $0x1648] sm:$0xff]
  %v1966 = vld [vmem:[%s3 + $0x1650] sm:$0xff]
  %v1967 = vld [vmem:[%s3 + $0x1658] sm:$0xff]
  %v1968 = vld [vmem:[%s3 + $0x1660] sm:$0xff]
  %v1969 = vld [vmem:[%s3 + $0x1668] sm:$0xff]
  %v1970 = vld [vmem:[%s3 + $0x1670] sm:$0xff]
  %v1971 = vld [vmem:[%s3 + $0x1678] sm:$0xff]
  %v1972 = vld [vmem:[%s3 + $0x1680] sm:$0xff]
  %v1973 = vld [vmem:[%s3 + $0x1688] sm:$0xff]
  %v1974 = vld [vmem:[%s3 + $0x1690] sm:$0xff]
  %v1975 = vld [vmem:[%s3 + $0x1698] sm:$0xff]
  %v1976 = vld [vmem:[%s3 + $0x16a0] sm:$0xff]
  %v1977 = vld [vmem:[%s3 + $0x16a8] sm:$0xff]
  %v1978 = vld [vmem:[%s3 + $0x16b0] sm:$0xff]
  %v1979 = vld [vmem:[%s3 + $0x16b8] sm:$0xff]
  %v1980 = vld [vmem:[%s3 + $0x16c0] sm:$0xff]
  %v1981 = vld [vmem:[%s3 + $0x16c8] sm:$0xff]
  %v1982 = vld [vmem:[%s3 + $0x16d0] sm:$0xff]
  %v1983 = vld [vmem:[%s3 + $0x16d8] sm:$0xff]
  %v1984 = vld [vmem:[%s3 + $0x16e0] sm:$0xff]
  %v1985 = vld [vmem:[%s3 + $0x16e8] sm:$0xff]
  %v1986 = vld [vmem:[%s3 + $0x16f0] sm:$0xff]
  %v1987 = vld [vmem:[%s3 + $0x16f8] sm:$0xff]
  %v1988 = vld [vmem:[%s3 + $0x1700] sm:$0xff]
  %v1989 = vld [vmem:[%s3 + $0x1708] sm:$0xff]
  %v1990 = vld [vmem:[%s3 + $0x1710] sm:$0xff]
  %v1991 = vld [vmem:[%s3 + $0x1718] sm:$0xff]
  %v1992 = vld [vmem:[%s3 + $0x1720] sm:$0xff]
  %v1993 = vld [vmem:[%s3 + $0x1728] sm:$0xff]
  %v1994 = vld [vmem:[%s3 + $0x1730] sm:$0xff]
  %v1995 = vld [vmem:[%s3 + $0x1738] sm:$0xff]
  %v1996 = vld [vmem:[%s3 + $0x1740] sm:$0xff]
  %v1997 = vld [vmem:[%s3 + $0x1748] sm:$0xff]
  %v1998 = vld [vmem:[%s3 + $0x1750] sm:$0xff]
  %v1999 = vld [vmem:[%s3 + $0x1758] sm:$0xff]
  %v2000 = vld [vmem:[%s3 + $0x1760] sm:$0xff]
  %v2001 = vld [vmem:[%s3 + $0x1768] sm:$0xff]
  %v2002 = vld [vmem:[%s3 + $0x1770] sm:$0xff]
  %v2003 = vld [vmem:[%s3 + $0x1778] sm:$0xff]
  %v2004 = vld [vmem:[%s3 + $0x1780] sm:$0xff]
  %v2005 = vld [vmem:[%s3 + $0x1788] sm:$0xff]
  %v2006 = vld [vmem:[%s3 + $0x1790] sm:$0xff]
  %v2007 = vld [vmem:[%s3 + $0x1798] sm:$0xff]
  %v2008 = vld [vmem:[%s3 + $0x17a0] sm:$0xff]
  %v2009 = vld [vmem:[%s3 + $0x17a8] sm:$0xff]
  %v2010 = vld [vmem:[%s3 + $0x17b0] sm:$0xff]
  %v2011 = vld [vmem:[%s3 + $0x17b8] sm:$0xff]
  %v2012 = vld [vmem:[%s3 + $0x17c0] sm:$0xff]
  %v2013 = vld [vmem:[%s3 + $0x17c8] sm:$0xff]
  %v2014 = vld [vmem:[%s3 + $0x17d0] sm:$0xff]
  %v2015 = vld [vmem:[%s3 + $0x17d8] sm:$0xff]
  %v2016 = vld [vmem:[%s3 + $0x17e0] sm:$0xff]
  %v2017 = vld [vmem:[%s3 + $0x17e8] sm:$0xff]
  %v2018 = vld [vmem:[%s3 + $0x17f0] sm:$0xff]
  %v2019 = vld [vmem:[%s3 + $0x17f8] sm:$0xff]
  %v2020 = vld [vmem:[%s3 + $0x1800] sm:$0xff]
  %v2021 = vld [vmem:[%s3 + $0x1808] sm:$0xff]
  %v2022 = vld [vmem:[%s3 + $0x1810] sm:$0xff]
  %v2023 = vld [vmem:[%s3 + $0x1818] sm:$0xff]
  %v2024 = vld [vmem:[%s3 + $0x1820] sm:$0xff]
  %v2025 = vld [vmem:[%s3 + $0x1828] sm:$0xff]
  %v2026 = vld [vmem:[%s3 + $0x1830] sm:$0xff]
  %v2027 = vld [vmem:[%s3 + $0x1838] sm:$0xff]
  %v2028 = vld [vmem:[%s3 + $0x1840] sm:$0xff]
  %v2029 = vld [vmem:[%s3 + $0x1848] sm:$0xff]
  %v2030 = vld [vmem:[%s3 + $0x1850] sm:$0xff]
  %v2031 = vld [vmem:[%s3 + $0x1858] sm:$0xff]
  %v2032 = vld [vmem:[%s3 + $0x1860] sm:$0xff]
  %v2033 = vld [vmem:[%s3 + $0x1868] sm:$0xff]
  %v2034 = vld [vmem:[%s3 + $0x1870] sm:$0xff]
  %v2035 = vld [vmem:[%s3 + $0x1878] sm:$0xff]
  %v2036 = vld [vmem:[%s4] sm:$0x1]
  %v2038 = vperm.slane %v2036, 0
  %2040 = vmatpush.msra.mxu0 %v1267
  %2041 = vmatpush.msra.mxu0 %v1266
  %2042 = vmatpush.msra.mxu0 %v1265
  %2043 = vmatpush.msra.mxu0 %v1264
  %2044 = vmatpush.msra.mxu0 %v1263
  %2045 = vmatpush.msra.mxu0 %v1262
  %2046 = vmatpush.msra.mxu0 %v1261
  %2047 = vmatpush.msra.mxu0 %v1260
  %2048 = vmatpush.msra.mxu0 %v1259
  %2049 = vmatpush.msra.mxu0 %v1258
  %2050 = vmatpush.msra.mxu0 %v1257
  %2051 = vmatpush.msra.mxu0 %v1256
  %2052 = vmatpush.msra.mxu0 %v1255
  %2053 = vmatpush.msra.mxu0 %v1254
  %2054 = vmatpush.msra.mxu0 %v1253
  %2055 = vmatpush.msra.mxu0 %v1252
  %2056 = vmatmul.f32.gmra.mxu0 %v1203
  %v2057 = vpop.f32.mrf.mxu0
  %v2058 = vadd.f32 %v2038, %v2057
  %2059 = vdwg.mxu0
  %2060 = vmatpush.msra.mxu0 %v1283
  %2061 = vmatpush.msra.mxu0 %v1282
  %2062 = vmatpush.msra.mxu0 %v1281
  %2063 = vmatpush.msra.mxu0 %v1280
  %2064 = vmatpush.msra.mxu0 %v1279
  %2065 = vmatpush.msra.mxu0 %v1278
  %2066 = vmatpush.msra.mxu0 %v1277
  %2067 = vmatpush.msra.mxu0 %v1276
  %2068 = vmatpush.msra.mxu0 %v1275
  %2069 = vmatpush.msra.mxu0 %v1274
  %2070 = vmatpush.msra.mxu0 %v1273
  %2071 = vmatpush.msra.mxu0 %v1272
  %2072 = vmatpush.msra.mxu0 %v1271
  %2073 = vmatpush.msra.mxu0 %v1270
  %2074 = vmatpush.msra.mxu0 %v1269
  %2075 = vmatpush.msra.mxu0 %v1268
  %2076 = vmatmul.f32.gmra.mxu0 %v1204
  %v2077 = vpop.f32.mrf.mxu0
  %v2078 = vadd.f32 %v2058, %v2077
  %2079 = vdwg.mxu0
  %2080 = vmatpush.msra.mxu0 %v1299
  %2081 = vmatpush.msra.mxu0 %v1298
  %2082 = vmatpush.msra.mxu0 %v1297
  %2083 = vmatpush.msra.mxu0 %v1296
  %2084 = vmatpush.msra.mxu0 %v1295
  %2085 = vmatpush.msra.mxu0 %v1294
  %2086 = vmatpush.msra.mxu0 %v1293
  %2087 = vmatpush.msra.mxu0 %v1292
  %2088 = vmatpush.msra.mxu0 %v1291
  %2089 = vmatpush.msra.mxu0 %v1290
  %2090 = vmatpush.msra.mxu0 %v1289
  %2091 = vmatpush.msra.mxu0 %v1288
  %2092 = vmatpush.msra.mxu0 %v1287
  %2093 = vmatpush.msra.mxu0 %v1286
  %2094 = vmatpush.msra.mxu0 %v1285
  %2095 = vmatpush.msra.mxu0 %v1284
  %2096 = vmatmul.f32.gmra.mxu0 %v1205
  %v2097 = vpop.f32.mrf.mxu0
  %v2098 = vadd.f32 %v2078, %v2097
  %2099 = vdwg.mxu0
  %2100 = vmatpush.msra.mxu0 %v1315
  %2101 = vmatpush.msra.mxu0 %v1314
  %2102 = vmatpush.msra.mxu0 %v1313
  %2103 = vmatpush.msra.mxu0 %v1312
  %2104 = vmatpush.msra.mxu0 %v1311
  %2105 = vmatpush.msra.mxu0 %v1310
  %2106 = vmatpush.msra.mxu0 %v1309
  %2107 = vmatpush.msra.mxu0 %v1308
  %2108 = vmatpush.msra.mxu0 %v1307
  %2109 = vmatpush.msra.mxu0 %v1306
  %2110 = vmatpush.msra.mxu0 %v1305
  %2111 = vmatpush.msra.mxu0 %v1304
  %2112 = vmatpush.msra.mxu0 %v1303
  %2113 = vmatpush.msra.mxu0 %v1302
  %2114 = vmatpush.msra.mxu0 %v1301
  %2115 = vmatpush.msra.mxu0 %v1300
  %2116 = vmatmul.f32.gmra.mxu0 %v1206
  %v2117 = vpop.f32.mrf.mxu0
  %v2118 = vadd.f32 %v2098, %v2117
  %2119 = vdwg.mxu0
  %2120 = vmatpush.msra.mxu0 %v1331
  %2121 = vmatpush.msra.mxu0 %v1330
  %2122 = vmatpush.msra.mxu0 %v1329
  %2123 = vmatpush.msra.mxu0 %v1328
  %2124 = vmatpush.msra.mxu0 %v1327
  %2125 = vmatpush.msra.mxu0 %v1326
  %2126 = vmatpush.msra.mxu0 %v1325
  %2127 = vmatpush.msra.mxu0 %v1324
  %2128 = vmatpush.msra.mxu0 %v1323
  %2129 = vmatpush.msra.mxu0 %v1322
  %2130 = vmatpush.msra.mxu0 %v1321
  %2131 = vmatpush.msra.mxu0 %v1320
  %2132 = vmatpush.msra.mxu0 %v1319
  %2133 = vmatpush.msra.mxu0 %v1318
  %2134 = vmatpush.msra.mxu0 %v1317
  %2135 = vmatpush.msra.mxu0 %v1316
  %2136 = vmatmul.f32.gmra.mxu0 %v1207
  %v2137 = vpop.f32.mrf.mxu0
  %v2138 = vadd.f32 %v2118, %v2137
  %2139 = vdwg.mxu0
  %2140 = vmatpush.msra.mxu0 %v1347
  %2141 = vmatpush.msra.mxu0 %v1346
  %2142 = vmatpush.msra.mxu0 %v1345
  %2143 = vmatpush.msra.mxu0 %v1344
  %2144 = vmatpush.msra.mxu0 %v1343
  %2145 = vmatpush.msra.mxu0 %v1342
  %2146 = vmatpush.msra.mxu0 %v1341
  %2147 = vmatpush.msra.mxu0 %v1340
  %2148 = vmatpush.msra.mxu0 %v1339
  %2149 = vmatpush.msra.mxu0 %v1338
  %2150 = vmatpush.msra.mxu0 %v1337
  %2151 = vmatpush.msra.mxu0 %v1336
  %2152 = vmatpush.msra.mxu0 %v1335
  %2153 = vmatpush.msra.mxu0 %v1334
  %2154 = vmatpush.msra.mxu0 %v1333
  %2155 = vmatpush.msra.mxu0 %v1332
  %2156 = vmatmul.f32.gmra.mxu0 %v1208
  %v2157 = vpop.f32.mrf.mxu0
  %v2158 = vadd.f32 %v2138, %v2157
  %2159 = vdwg.mxu0
  %2160 = vmatpush.msra.mxu0 %v1363
  %2161 = vmatpush.msra.mxu0 %v1362
  %2162 = vmatpush.msra.mxu0 %v1361
  %2163 = vmatpush.msra.mxu0 %v1360
  %2164 = vmatpush.msra.mxu0 %v1359
  %2165 = vmatpush.msra.mxu0 %v1358
  %2166 = vmatpush.msra.mxu0 %v1357
  %2167 = vmatpush.msra.mxu0 %v1356
  %2168 = vmatpush.msra.mxu0 %v1355
  %2169 = vmatpush.msra.mxu0 %v1354
  %2170 = vmatpush.msra.mxu0 %v1353
  %2171 = vmatpush.msra.mxu0 %v1352
  %2172 = vmatpush.msra.mxu0 %v1351
  %2173 = vmatpush.msra.mxu0 %v1350
  %2174 = vmatpush.msra.mxu0 %v1349
  %2175 = vmatpush.msra.mxu0 %v1348
  %2176 = vmatmul.f32.gmra.mxu0 %v1209
  %v2177 = vpop.f32.mrf.mxu0
  %v2178 = vadd.f32 %v2158, %v2177
  %2179 = vdwg.mxu0
  %2180 = vmatpush.msra.mxu0 %v1379
  %2181 = vmatpush.msra.mxu0 %v1378
  %2182 = vmatpush.msra.mxu0 %v1377
  %2183 = vmatpush.msra.mxu0 %v1376
  %2184 = vmatpush.msra.mxu0 %v1375
  %2185 = vmatpush.msra.mxu0 %v1374
  %2186 = vmatpush.msra.mxu0 %v1373
  %2187 = vmatpush.msra.mxu0 %v1372
  %2188 = vmatpush.msra.mxu0 %v1371
  %2189 = vmatpush.msra.mxu0 %v1370
  %2190 = vmatpush.msra.mxu0 %v1369
  %2191 = vmatpush.msra.mxu0 %v1368
  %2192 = vmatpush.msra.mxu0 %v1367
  %2193 = vmatpush.msra.mxu0 %v1366
  %2194 = vmatpush.msra.mxu0 %v1365
  %2195 = vmatpush.msra.mxu0 %v1364
  %2196 = vmatmul.f32.gmra.mxu0 %v1210
  %v2197 = vpop.f32.mrf.mxu0
  %v2198 = vadd.f32 %v2178, %v2197
  %2199 = vdwg.mxu0
  %2200 = vmatpush.msra.mxu0 %v1395
  %2201 = vmatpush.msra.mxu0 %v1394
  %2202 = vmatpush.msra.mxu0 %v1393
  %2203 = vmatpush.msra.mxu0 %v1392
  %2204 = vmatpush.msra.mxu0 %v1391
  %2205 = vmatpush.msra.mxu0 %v1390
  %2206 = vmatpush.msra.mxu0 %v1389
  %2207 = vmatpush.msra.mxu0 %v1388
  %2208 = vmatpush.msra.mxu0 %v1387
  %2209 = vmatpush.msra.mxu0 %v1386
  %2210 = vmatpush.msra.mxu0 %v1385
  %2211 = vmatpush.msra.mxu0 %v1384
  %2212 = vmatpush.msra.mxu0 %v1383
  %2213 = vmatpush.msra.mxu0 %v1382
  %2214 = vmatpush.msra.mxu0 %v1381
  %2215 = vmatpush.msra.mxu0 %v1380
  %2216 = vmatmul.f32.gmra.mxu0 %v1211
  %v2217 = vpop.f32.mrf.mxu0
  %v2218 = vadd.f32 %v2198, %v2217
  %2219 = vdwg.mxu0
  %2220 = vmatpush.msra.mxu0 %v1411
  %2221 = vmatpush.msra.mxu0 %v1410
  %2222 = vmatpush.msra.mxu0 %v1409
  %2223 = vmatpush.msra.mxu0 %v1408
  %2224 = vmatpush.msra.mxu0 %v1407
  %2225 = vmatpush.msra.mxu0 %v1406
  %2226 = vmatpush.msra.mxu0 %v1405
  %2227 = vmatpush.msra.mxu0 %v1404
  %2228 = vmatpush.msra.mxu0 %v1403
  %2229 = vmatpush.msra.mxu0 %v1402
  %2230 = vmatpush.msra.mxu0 %v1401
  %2231 = vmatpush.msra.mxu0 %v1400
  %2232 = vmatpush.msra.mxu0 %v1399
  %2233 = vmatpush.msra.mxu0 %v1398
  %2234 = vmatpush.msra.mxu0 %v1397
  %2235 = vmatpush.msra.mxu0 %v1396
  %2236 = vmatmul.f32.gmra.mxu0 %v1212
  %v2237 = vpop.f32.mrf.mxu0
  %v2238 = vadd.f32 %v2218, %v2237
  %2239 = vdwg.mxu0
  %2240 = vmatpush.msra.mxu0 %v1427
  %2241 = vmatpush.msra.mxu0 %v1426
  %2242 = vmatpush.msra.mxu0 %v1425
  %2243 = vmatpush.msra.mxu0 %v1424
  %2244 = vmatpush.msra.mxu0 %v1423
  %2245 = vmatpush.msra.mxu0 %v1422
  %2246 = vmatpush.msra.mxu0 %v1421
  %2247 = vmatpush.msra.mxu0 %v1420
  %2248 = vmatpush.msra.mxu0 %v1419
  %2249 = vmatpush.msra.mxu0 %v1418
  %2250 = vmatpush.msra.mxu0 %v1417
  %2251 = vmatpush.msra.mxu0 %v1416
  %2252 = vmatpush.msra.mxu0 %v1415
  %2253 = vmatpush.msra.mxu0 %v1414
  %2254 = vmatpush.msra.mxu0 %v1413
  %2255 = vmatpush.msra.mxu0 %v1412
  %2256 = vmatmul.f32.gmra.mxu0 %v1213
  %v2257 = vpop.f32.mrf.mxu0
  %v2258 = vadd.f32 %v2238, %v2257
  %2259 = vdwg.mxu0
  %2260 = vmatpush.msra.mxu0 %v1443
  %2261 = vmatpush.msra.mxu0 %v1442
  %2262 = vmatpush.msra.mxu0 %v1441
  %2263 = vmatpush.msra.mxu0 %v1440
  %2264 = vmatpush.msra.mxu0 %v1439
  %2265 = vmatpush.msra.mxu0 %v1438
  %2266 = vmatpush.msra.mxu0 %v1437
  %2267 = vmatpush.msra.mxu0 %v1436
  %2268 = vmatpush.msra.mxu0 %v1435
  %2269 = vmatpush.msra.mxu0 %v1434
  %2270 = vmatpush.msra.mxu0 %v1433
  %2271 = vmatpush.msra.mxu0 %v1432
  %2272 = vmatpush.msra.mxu0 %v1431
  %2273 = vmatpush.msra.mxu0 %v1430
  %2274 = vmatpush.msra.mxu0 %v1429
  %2275 = vmatpush.msra.mxu0 %v1428
  %2276 = vmatmul.f32.gmra.mxu0 %v1214
  %v2277 = vpop.f32.mrf.mxu0
  %v2278 = vadd.f32 %v2258, %v2277
  %2279 = vdwg.mxu0
  %2280 = vmatpush.msra.mxu0 %v1459
  %2281 = vmatpush.msra.mxu0 %v1458
  %2282 = vmatpush.msra.mxu0 %v1457
  %2283 = vmatpush.msra.mxu0 %v1456
  %2284 = vmatpush.msra.mxu0 %v1455
  %2285 = vmatpush.msra.mxu0 %v1454
  %2286 = vmatpush.msra.mxu0 %v1453
  %2287 = vmatpush.msra.mxu0 %v1452
  %2288 = vmatpush.msra.mxu0 %v1451
  %2289 = vmatpush.msra.mxu0 %v1450
  %2290 = vmatpush.msra.mxu0 %v1449
  %2291 = vmatpush.msra.mxu0 %v1448
  %2292 = vmatpush.msra.mxu0 %v1447
  %2293 = vmatpush.msra.mxu0 %v1446
  %2294 = vmatpush.msra.mxu0 %v1445
  %2295 = vmatpush.msra.mxu0 %v1444
  %2296 = vmatmul.f32.gmra.mxu0 %v1215
  %v2297 = vpop.f32.mrf.mxu0
  %v2298 = vadd.f32 %v2278, %v2297
  %2299 = vdwg.mxu0
  %2300 = vmatpush.msra.mxu0 %v1475
  %2301 = vmatpush.msra.mxu0 %v1474
  %2302 = vmatpush.msra.mxu0 %v1473
  %2303 = vmatpush.msra.mxu0 %v1472
  %2304 = vmatpush.msra.mxu0 %v1471
  %2305 = vmatpush.msra.mxu0 %v1470
  %2306 = vmatpush.msra.mxu0 %v1469
  %2307 = vmatpush.msra.mxu0 %v1468
  %2308 = vmatpush.msra.mxu0 %v1467
  %2309 = vmatpush.msra.mxu0 %v1466
  %2310 = vmatpush.msra.mxu0 %v1465
  %2311 = vmatpush.msra.mxu0 %v1464
  %2312 = vmatpush.msra.mxu0 %v1463
  %2313 = vmatpush.msra.mxu0 %v1462
  %2314 = vmatpush.msra.mxu0 %v1461
  %2315 = vmatpush.msra.mxu0 %v1460
  %2316 = vmatmul.f32.gmra.mxu0 %v1216
  %v2317 = vpop.f32.mrf.mxu0
  %v2318 = vadd.f32 %v2298, %v2317
  %2319 = vdwg.mxu0
  %2320 = vmatpush.msra.mxu0 %v1491
  %2321 = vmatpush.msra.mxu0 %v1490
  %2322 = vmatpush.msra.mxu0 %v1489
  %2323 = vmatpush.msra.mxu0 %v1488
  %2324 = vmatpush.msra.mxu0 %v1487
  %2325 = vmatpush.msra.mxu0 %v1486
  %2326 = vmatpush.msra.mxu0 %v1485
  %2327 = vmatpush.msra.mxu0 %v1484
  %2328 = vmatpush.msra.mxu0 %v1483
  %2329 = vmatpush.msra.mxu0 %v1482
  %2330 = vmatpush.msra.mxu0 %v1481
  %2331 = vmatpush.msra.mxu0 %v1480
  %2332 = vmatpush.msra.mxu0 %v1479
  %2333 = vmatpush.msra.mxu0 %v1478
  %2334 = vmatpush.msra.mxu0 %v1477
  %2335 = vmatpush.msra.mxu0 %v1476
  %2336 = vmatmul.f32.gmra.mxu0 %v1217
  %v2337 = vpop.f32.mrf.mxu0
  %v2338 = vadd.f32 %v2318, %v2337
  %2339 = vdwg.mxu0
  %2340 = vmatpush.msra.mxu0 %v1507
  %2341 = vmatpush.msra.mxu0 %v1506
  %2342 = vmatpush.msra.mxu0 %v1505
  %2343 = vmatpush.msra.mxu0 %v1504
  %2344 = vmatpush.msra.mxu0 %v1503
  %2345 = vmatpush.msra.mxu0 %v1502
  %2346 = vmatpush.msra.mxu0 %v1501
  %2347 = vmatpush.msra.mxu0 %v1500
  %2348 = vmatpush.msra.mxu0 %v1499
  %2349 = vmatpush.msra.mxu0 %v1498
  %2350 = vmatpush.msra.mxu0 %v1497
  %2351 = vmatpush.msra.mxu0 %v1496
  %2352 = vmatpush.msra.mxu0 %v1495
  %2353 = vmatpush.msra.mxu0 %v1494
  %2354 = vmatpush.msra.mxu0 %v1493
  %2355 = vmatpush.msra.mxu0 %v1492
  %2356 = vmatmul.f32.gmra.mxu0 %v1218
  %v2357 = vpop.f32.mrf.mxu0
  %v2358 = vadd.f32 %v2338, %v2357
  %2359 = vdwg.mxu0
  %2360 = vmatpush.msra.mxu0 %v1523
  %2361 = vmatpush.msra.mxu0 %v1522
  %2362 = vmatpush.msra.mxu0 %v1521
  %2363 = vmatpush.msra.mxu0 %v1520
  %2364 = vmatpush.msra.mxu0 %v1519
  %2365 = vmatpush.msra.mxu0 %v1518
  %2366 = vmatpush.msra.mxu0 %v1517
  %2367 = vmatpush.msra.mxu0 %v1516
  %2368 = vmatpush.msra.mxu0 %v1515
  %2369 = vmatpush.msra.mxu0 %v1514
  %2370 = vmatpush.msra.mxu0 %v1513
  %2371 = vmatpush.msra.mxu0 %v1512
  %2372 = vmatpush.msra.mxu0 %v1511
  %2373 = vmatpush.msra.mxu0 %v1510
  %2374 = vmatpush.msra.mxu0 %v1509
  %2375 = vmatpush.msra.mxu0 %v1508
  %2376 = vmatmul.f32.gmra.mxu0 %v1219
  %v2377 = vpop.f32.mrf.mxu0
  %v2378 = vadd.f32 %v2358, %v2377
  %2379 = vdwg.mxu0
  %2380 = vmatpush.msra.mxu0 %v1539
  %2381 = vmatpush.msra.mxu0 %v1538
  %2382 = vmatpush.msra.mxu0 %v1537
  %2383 = vmatpush.msra.mxu0 %v1536
  %2384 = vmatpush.msra.mxu0 %v1535
  %2385 = vmatpush.msra.mxu0 %v1534
  %2386 = vmatpush.msra.mxu0 %v1533
  %2387 = vmatpush.msra.mxu0 %v1532
  %2388 = vmatpush.msra.mxu0 %v1531
  %2389 = vmatpush.msra.mxu0 %v1530
  %2390 = vmatpush.msra.mxu0 %v1529
  %2391 = vmatpush.msra.mxu0 %v1528
  %2392 = vmatpush.msra.mxu0 %v1527
  %2393 = vmatpush.msra.mxu0 %v1526
  %2394 = vmatpush.msra.mxu0 %v1525
  %2395 = vmatpush.msra.mxu0 %v1524
  %2396 = vmatmul.f32.gmra.mxu0 %v1220
  %v2397 = vpop.f32.mrf.mxu0
  %v2398 = vadd.f32 %v2378, %v2397
  %2399 = vdwg.mxu0
  %2400 = vmatpush.msra.mxu0 %v1555
  %2401 = vmatpush.msra.mxu0 %v1554
  %2402 = vmatpush.msra.mxu0 %v1553
  %2403 = vmatpush.msra.mxu0 %v1552
  %2404 = vmatpush.msra.mxu0 %v1551
  %2405 = vmatpush.msra.mxu0 %v1550
  %2406 = vmatpush.msra.mxu0 %v1549
  %2407 = vmatpush.msra.mxu0 %v1548
  %2408 = vmatpush.msra.mxu0 %v1547
  %2409 = vmatpush.msra.mxu0 %v1546
  %2410 = vmatpush.msra.mxu0 %v1545
  %2411 = vmatpush.msra.mxu0 %v1544
  %2412 = vmatpush.msra.mxu0 %v1543
  %2413 = vmatpush.msra.mxu0 %v1542
  %2414 = vmatpush.msra.mxu0 %v1541
  %2415 = vmatpush.msra.mxu0 %v1540
  %2416 = vmatmul.f32.gmra.mxu0 %v1221
  %v2417 = vpop.f32.mrf.mxu0
  %v2418 = vadd.f32 %v2398, %v2417
  %2419 = vdwg.mxu0
  %2420 = vmatpush.msra.mxu0 %v1571
  %2421 = vmatpush.msra.mxu0 %v1570
  %2422 = vmatpush.msra.mxu0 %v1569
  %2423 = vmatpush.msra.mxu0 %v1568
  %2424 = vmatpush.msra.mxu0 %v1567
  %2425 = vmatpush.msra.mxu0 %v1566
  %2426 = vmatpush.msra.mxu0 %v1565
  %2427 = vmatpush.msra.mxu0 %v1564
  %2428 = vmatpush.msra.mxu0 %v1563
  %2429 = vmatpush.msra.mxu0 %v1562
  %2430 = vmatpush.msra.mxu0 %v1561
  %2431 = vmatpush.msra.mxu0 %v1560
  %2432 = vmatpush.msra.mxu0 %v1559
  %2433 = vmatpush.msra.mxu0 %v1558
  %2434 = vmatpush.msra.mxu0 %v1557
  %2435 = vmatpush.msra.mxu0 %v1556
  %2436 = vmatmul.f32.gmra.mxu0 %v1222
  %v2437 = vpop.f32.mrf.mxu0
  %v2438 = vadd.f32 %v2418, %v2437
  %2439 = vdwg.mxu0
  %2440 = vmatpush.msra.mxu0 %v1587
  %2441 = vmatpush.msra.mxu0 %v1586
  %2442 = vmatpush.msra.mxu0 %v1585
  %2443 = vmatpush.msra.mxu0 %v1584
  %2444 = vmatpush.msra.mxu0 %v1583
  %2445 = vmatpush.msra.mxu0 %v1582
  %2446 = vmatpush.msra.mxu0 %v1581
  %2447 = vmatpush.msra.mxu0 %v1580
  %2448 = vmatpush.msra.mxu0 %v1579
  %2449 = vmatpush.msra.mxu0 %v1578
  %2450 = vmatpush.msra.mxu0 %v1577
  %2451 = vmatpush.msra.mxu0 %v1576
  %2452 = vmatpush.msra.mxu0 %v1575
  %2453 = vmatpush.msra.mxu0 %v1574
  %2454 = vmatpush.msra.mxu0 %v1573
  %2455 = vmatpush.msra.mxu0 %v1572
  %2456 = vmatmul.f32.gmra.mxu0 %v1223
  %v2457 = vpop.f32.mrf.mxu0
  %v2458 = vadd.f32 %v2438, %v2457
  %2459 = vdwg.mxu0
  %2460 = vmatpush.msra.mxu0 %v1603
  %2461 = vmatpush.msra.mxu0 %v1602
  %2462 = vmatpush.msra.mxu0 %v1601
  %2463 = vmatpush.msra.mxu0 %v1600
  %2464 = vmatpush.msra.mxu0 %v1599
  %2465 = vmatpush.msra.mxu0 %v1598
  %2466 = vmatpush.msra.mxu0 %v1597
  %2467 = vmatpush.msra.mxu0 %v1596
  %2468 = vmatpush.msra.mxu0 %v1595
  %2469 = vmatpush.msra.mxu0 %v1594
  %2470 = vmatpush.msra.mxu0 %v1593
  %2471 = vmatpush.msra.mxu0 %v1592
  %2472 = vmatpush.msra.mxu0 %v1591
  %2473 = vmatpush.msra.mxu0 %v1590
  %2474 = vmatpush.msra.mxu0 %v1589
  %2475 = vmatpush.msra.mxu0 %v1588
  %2476 = vmatmul.f32.gmra.mxu0 %v1224
  %v2477 = vpop.f32.mrf.mxu0
  %v2478 = vadd.f32 %v2458, %v2477
  %2479 = vdwg.mxu0
  %2480 = vmatpush.msra.mxu0 %v1619
  %2481 = vmatpush.msra.mxu0 %v1618
  %2482 = vmatpush.msra.mxu0 %v1617
  %2483 = vmatpush.msra.mxu0 %v1616
  %2484 = vmatpush.msra.mxu0 %v1615
  %2485 = vmatpush.msra.mxu0 %v1614
  %2486 = vmatpush.msra.mxu0 %v1613
  %2487 = vmatpush.msra.mxu0 %v1612
  %2488 = vmatpush.msra.mxu0 %v1611
  %2489 = vmatpush.msra.mxu0 %v1610
  %2490 = vmatpush.msra.mxu0 %v1609
  %2491 = vmatpush.msra.mxu0 %v1608
  %2492 = vmatpush.msra.mxu0 %v1607
  %2493 = vmatpush.msra.mxu0 %v1606
  %2494 = vmatpush.msra.mxu0 %v1605
  %2495 = vmatpush.msra.mxu0 %v1604
  %2496 = vmatmul.f32.gmra.mxu0 %v1225
  %v2497 = vpop.f32.mrf.mxu0
  %v2498 = vadd.f32 %v2478, %v2497
  %2499 = vdwg.mxu0
  %2500 = vmatpush.msra.mxu0 %v1635
  %2501 = vmatpush.msra.mxu0 %v1634
  %2502 = vmatpush.msra.mxu0 %v1633
  %2503 = vmatpush.msra.mxu0 %v1632
  %2504 = vmatpush.msra.mxu0 %v1631
  %2505 = vmatpush.msra.mxu0 %v1630
  %2506 = vmatpush.msra.mxu0 %v1629
  %2507 = vmatpush.msra.mxu0 %v1628
  %2508 = vmatpush.msra.mxu0 %v1627
  %2509 = vmatpush.msra.mxu0 %v1626
  %2510 = vmatpush.msra.mxu0 %v1625
  %2511 = vmatpush.msra.mxu0 %v1624
  %2512 = vmatpush.msra.mxu0 %v1623
  %2513 = vmatpush.msra.mxu0 %v1622
  %2514 = vmatpush.msra.mxu0 %v1621
  %2515 = vmatpush.msra.mxu0 %v1620
  %2516 = vmatmul.f32.gmra.mxu0 %v1226
  %v2517 = vpop.f32.mrf.mxu0
  %v2518 = vadd.f32 %v2498, %v2517
  %2519 = vdwg.mxu0
  %2520 = vmatpush.msra.mxu0 %v1651
  %2521 = vmatpush.msra.mxu0 %v1650
  %2522 = vmatpush.msra.mxu0 %v1649
  %2523 = vmatpush.msra.mxu0 %v1648
  %2524 = vmatpush.msra.mxu0 %v1647
  %2525 = vmatpush.msra.mxu0 %v1646
  %2526 = vmatpush.msra.mxu0 %v1645
  %2527 = vmatpush.msra.mxu0 %v1644
  %2528 = vmatpush.msra.mxu0 %v1643
  %2529 = vmatpush.msra.mxu0 %v1642
  %2530 = vmatpush.msra.mxu0 %v1641
  %2531 = vmatpush.msra.mxu0 %v1640
  %2532 = vmatpush.msra.mxu0 %v1639
  %2533 = vmatpush.msra.mxu0 %v1638
  %2534 = vmatpush.msra.mxu0 %v1637
  %2535 = vmatpush.msra.mxu0 %v1636
  %2536 = vmatmul.f32.gmra.mxu0 %v1227
  %v2537 = vpop.f32.mrf.mxu0
  %v2538 = vadd.f32 %v2518, %v2537
  %2539 = vdwg.mxu0
  %2540 = vmatpush.msra.mxu0 %v1667
  %2541 = vmatpush.msra.mxu0 %v1666
  %2542 = vmatpush.msra.mxu0 %v1665
  %2543 = vmatpush.msra.mxu0 %v1664
  %2544 = vmatpush.msra.mxu0 %v1663
  %2545 = vmatpush.msra.mxu0 %v1662
  %2546 = vmatpush.msra.mxu0 %v1661
  %2547 = vmatpush.msra.mxu0 %v1660
  %2548 = vmatpush.msra.mxu0 %v1659
  %2549 = vmatpush.msra.mxu0 %v1658
  %2550 = vmatpush.msra.mxu0 %v1657
  %2551 = vmatpush.msra.mxu0 %v1656
  %2552 = vmatpush.msra.mxu0 %v1655
  %2553 = vmatpush.msra.mxu0 %v1654
  %2554 = vmatpush.msra.mxu0 %v1653
  %2555 = vmatpush.msra.mxu0 %v1652
  %2556 = vmatmul.f32.gmra.mxu0 %v1228
  %v2557 = vpop.f32.mrf.mxu0
  %v2558 = vadd.f32 %v2538, %v2557
  %2559 = vdwg.mxu0
  %2560 = vmatpush.msra.mxu0 %v1683
  %2561 = vmatpush.msra.mxu0 %v1682
  %2562 = vmatpush.msra.mxu0 %v1681
  %2563 = vmatpush.msra.mxu0 %v1680
  %2564 = vmatpush.msra.mxu0 %v1679
  %2565 = vmatpush.msra.mxu0 %v1678
  %2566 = vmatpush.msra.mxu0 %v1677
  %2567 = vmatpush.msra.mxu0 %v1676
  %2568 = vmatpush.msra.mxu0 %v1675
  %2569 = vmatpush.msra.mxu0 %v1674
  %2570 = vmatpush.msra.mxu0 %v1673
  %2571 = vmatpush.msra.mxu0 %v1672
  %2572 = vmatpush.msra.mxu0 %v1671
  %2573 = vmatpush.msra.mxu0 %v1670
  %2574 = vmatpush.msra.mxu0 %v1669
  %2575 = vmatpush.msra.mxu0 %v1668
  %2576 = vmatmul.f32.gmra.mxu0 %v1229
  %v2577 = vpop.f32.mrf.mxu0
  %v2578 = vadd.f32 %v2558, %v2577
  %2579 = vdwg.mxu0
  %2580 = vmatpush.msra.mxu0 %v1699
  %2581 = vmatpush.msra.mxu0 %v1698
  %2582 = vmatpush.msra.mxu0 %v1697
  %2583 = vmatpush.msra.mxu0 %v1696
  %2584 = vmatpush.msra.mxu0 %v1695
  %2585 = vmatpush.msra.mxu0 %v1694
  %2586 = vmatpush.msra.mxu0 %v1693
  %2587 = vmatpush.msra.mxu0 %v1692
  %2588 = vmatpush.msra.mxu0 %v1691
  %2589 = vmatpush.msra.mxu0 %v1690
  %2590 = vmatpush.msra.mxu0 %v1689
  %2591 = vmatpush.msra.mxu0 %v1688
  %2592 = vmatpush.msra.mxu0 %v1687
  %2593 = vmatpush.msra.mxu0 %v1686
  %2594 = vmatpush.msra.mxu0 %v1685
  %2595 = vmatpush.msra.mxu0 %v1684
  %2596 = vmatmul.f32.gmra.mxu0 %v1230
  %v2597 = vpop.f32.mrf.mxu0
  %v2598 = vadd.f32 %v2578, %v2597
  %2599 = vdwg.mxu0
  %2600 = vmatpush.msra.mxu0 %v1715
  %2601 = vmatpush.msra.mxu0 %v1714
  %2602 = vmatpush.msra.mxu0 %v1713
  %2603 = vmatpush.msra.mxu0 %v1712
  %2604 = vmatpush.msra.mxu0 %v1711
  %2605 = vmatpush.msra.mxu0 %v1710
  %2606 = vmatpush.msra.mxu0 %v1709
  %2607 = vmatpush.msra.mxu0 %v1708
  %2608 = vmatpush.msra.mxu0 %v1707
  %2609 = vmatpush.msra.mxu0 %v1706
  %2610 = vmatpush.msra.mxu0 %v1705
  %2611 = vmatpush.msra.mxu0 %v1704
  %2612 = vmatpush.msra.mxu0 %v1703
  %2613 = vmatpush.msra.mxu0 %v1702
  %2614 = vmatpush.msra.mxu0 %v1701
  %2615 = vmatpush.msra.mxu0 %v1700
  %2616 = vmatmul.f32.gmra.mxu0 %v1231
  %v2617 = vpop.f32.mrf.mxu0
  %v2618 = vadd.f32 %v2598, %v2617
  %2619 = vdwg.mxu0
  %2620 = vmatpush.msra.mxu0 %v1731
  %2621 = vmatpush.msra.mxu0 %v1730
  %2622 = vmatpush.msra.mxu0 %v1729
  %2623 = vmatpush.msra.mxu0 %v1728
  %2624 = vmatpush.msra.mxu0 %v1727
  %2625 = vmatpush.msra.mxu0 %v1726
  %2626 = vmatpush.msra.mxu0 %v1725
  %2627 = vmatpush.msra.mxu0 %v1724
  %2628 = vmatpush.msra.mxu0 %v1723
  %2629 = vmatpush.msra.mxu0 %v1722
  %2630 = vmatpush.msra.mxu0 %v1721
  %2631 = vmatpush.msra.mxu0 %v1720
  %2632 = vmatpush.msra.mxu0 %v1719
  %2633 = vmatpush.msra.mxu0 %v1718
  %2634 = vmatpush.msra.mxu0 %v1717
  %2635 = vmatpush.msra.mxu0 %v1716
  %2636 = vmatmul.f32.gmra.mxu0 %v1232
  %v2637 = vpop.f32.mrf.mxu0
  %v2638 = vadd.f32 %v2618, %v2637
  %2639 = vdwg.mxu0
  %2640 = vmatpush.msra.mxu0 %v1747
  %2641 = vmatpush.msra.mxu0 %v1746
  %2642 = vmatpush.msra.mxu0 %v1745
  %2643 = vmatpush.msra.mxu0 %v1744
  %2644 = vmatpush.msra.mxu0 %v1743
  %2645 = vmatpush.msra.mxu0 %v1742
  %2646 = vmatpush.msra.mxu0 %v1741
  %2647 = vmatpush.msra.mxu0 %v1740
  %2648 = vmatpush.msra.mxu0 %v1739
  %2649 = vmatpush.msra.mxu0 %v1738
  %2650 = vmatpush.msra.mxu0 %v1737
  %2651 = vmatpush.msra.mxu0 %v1736
  %2652 = vmatpush.msra.mxu0 %v1735
  %2653 = vmatpush.msra.mxu0 %v1734
  %2654 = vmatpush.msra.mxu0 %v1733
  %2655 = vmatpush.msra.mxu0 %v1732
  %2656 = vmatmul.f32.gmra.mxu0 %v1233
  %v2657 = vpop.f32.mrf.mxu0
  %v2658 = vadd.f32 %v2638, %v2657
  %2659 = vdwg.mxu0
  %2660 = vmatpush.msra.mxu0 %v1763
  %2661 = vmatpush.msra.mxu0 %v1762
  %2662 = vmatpush.msra.mxu0 %v1761
  %2663 = vmatpush.msra.mxu0 %v1760
  %2664 = vmatpush.msra.mxu0 %v1759
  %2665 = vmatpush.msra.mxu0 %v1758
  %2666 = vmatpush.msra.mxu0 %v1757
  %2667 = vmatpush.msra.mxu0 %v1756
  %2668 = vmatpush.msra.mxu0 %v1755
  %2669 = vmatpush.msra.mxu0 %v1754
  %2670 = vmatpush.msra.mxu0 %v1753
  %2671 = vmatpush.msra.mxu0 %v1752
  %2672 = vmatpush.msra.mxu0 %v1751
  %2673 = vmatpush.msra.mxu0 %v1750
  %2674 = vmatpush.msra.mxu0 %v1749
  %2675 = vmatpush.msra.mxu0 %v1748
  %2676 = vmatmul.f32.gmra.mxu0 %v1234
  %v2677 = vpop.f32.mrf.mxu0
  %v2678 = vadd.f32 %v2658, %v2677
  %2679 = vdwg.mxu0
  %2680 = vmatpush.msra.mxu0 %v1779
  %2681 = vmatpush.msra.mxu0 %v1778
  %2682 = vmatpush.msra.mxu0 %v1777
  %2683 = vmatpush.msra.mxu0 %v1776
  %2684 = vmatpush.msra.mxu0 %v1775
  %2685 = vmatpush.msra.mxu0 %v1774
  %2686 = vmatpush.msra.mxu0 %v1773
  %2687 = vmatpush.msra.mxu0 %v1772
  %2688 = vmatpush.msra.mxu0 %v1771
  %2689 = vmatpush.msra.mxu0 %v1770
  %2690 = vmatpush.msra.mxu0 %v1769
  %2691 = vmatpush.msra.mxu0 %v1768
  %2692 = vmatpush.msra.mxu0 %v1767
  %2693 = vmatpush.msra.mxu0 %v1766
  %2694 = vmatpush.msra.mxu0 %v1765
  %2695 = vmatpush.msra.mxu0 %v1764
  %2696 = vmatmul.f32.gmra.mxu0 %v1235
  %v2697 = vpop.f32.mrf.mxu0
  %v2698 = vadd.f32 %v2678, %v2697
  %2699 = vdwg.mxu0
  %2700 = vmatpush.msra.mxu0 %v1795
  %2701 = vmatpush.msra.mxu0 %v1794
  %2702 = vmatpush.msra.mxu0 %v1793
  %2703 = vmatpush.msra.mxu0 %v1792
  %2704 = vmatpush.msra.mxu0 %v1791
  %2705 = vmatpush.msra.mxu0 %v1790
  %2706 = vmatpush.msra.mxu0 %v1789
  %2707 = vmatpush.msra.mxu0 %v1788
  %2708 = vmatpush.msra.mxu0 %v1787
  %2709 = vmatpush.msra.mxu0 %v1786
  %2710 = vmatpush.msra.mxu0 %v1785
  %2711 = vmatpush.msra.mxu0 %v1784
  %2712 = vmatpush.msra.mxu0 %v1783
  %2713 = vmatpush.msra.mxu0 %v1782
  %2714 = vmatpush.msra.mxu0 %v1781
  %2715 = vmatpush.msra.mxu0 %v1780
  %2716 = vmatmul.f32.gmra.mxu0 %v1236
  %v2717 = vpop.f32.mrf.mxu0
  %v2718 = vadd.f32 %v2698, %v2717
  %2719 = vdwg.mxu0
  %2720 = vmatpush.msra.mxu0 %v1811
  %2721 = vmatpush.msra.mxu0 %v1810
  %2722 = vmatpush.msra.mxu0 %v1809
  %2723 = vmatpush.msra.mxu0 %v1808
  %2724 = vmatpush.msra.mxu0 %v1807
  %2725 = vmatpush.msra.mxu0 %v1806
  %2726 = vmatpush.msra.mxu0 %v1805
  %2727 = vmatpush.msra.mxu0 %v1804
  %2728 = vmatpush.msra.mxu0 %v1803
  %2729 = vmatpush.msra.mxu0 %v1802
  %2730 = vmatpush.msra.mxu0 %v1801
  %2731 = vmatpush.msra.mxu0 %v1800
  %2732 = vmatpush.msra.mxu0 %v1799
  %2733 = vmatpush.msra.mxu0 %v1798
  %2734 = vmatpush.msra.mxu0 %v1797
  %2735 = vmatpush.msra.mxu0 %v1796
  %2736 = vmatmul.f32.gmra.mxu0 %v1237
  %v2737 = vpop.f32.mrf.mxu0
  %v2738 = vadd.f32 %v2718, %v2737
  %2739 = vdwg.mxu0
  %2740 = vmatpush.msra.mxu0 %v1827
  %2741 = vmatpush.msra.mxu0 %v1826
  %2742 = vmatpush.msra.mxu0 %v1825
  %2743 = vmatpush.msra.mxu0 %v1824
  %2744 = vmatpush.msra.mxu0 %v1823
  %2745 = vmatpush.msra.mxu0 %v1822
  %2746 = vmatpush.msra.mxu0 %v1821
  %2747 = vmatpush.msra.mxu0 %v1820
  %2748 = vmatpush.msra.mxu0 %v1819
  %2749 = vmatpush.msra.mxu0 %v1818
  %2750 = vmatpush.msra.mxu0 %v1817
  %2751 = vmatpush.msra.mxu0 %v1816
  %2752 = vmatpush.msra.mxu0 %v1815
  %2753 = vmatpush.msra.mxu0 %v1814
  %2754 = vmatpush.msra.mxu0 %v1813
  %2755 = vmatpush.msra.mxu0 %v1812
  %2756 = vmatmul.f32.gmra.mxu0 %v1238
  %v2757 = vpop.f32.mrf.mxu0
  %v2758 = vadd.f32 %v2738, %v2757
  %2759 = vdwg.mxu0
  %2760 = vmatpush.msra.mxu0 %v1843
  %2761 = vmatpush.msra.mxu0 %v1842
  %2762 = vmatpush.msra.mxu0 %v1841
  %2763 = vmatpush.msra.mxu0 %v1840
  %2764 = vmatpush.msra.mxu0 %v1839
  %2765 = vmatpush.msra.mxu0 %v1838
  %2766 = vmatpush.msra.mxu0 %v1837
  %2767 = vmatpush.msra.mxu0 %v1836
  %2768 = vmatpush.msra.mxu0 %v1835
  %2769 = vmatpush.msra.mxu0 %v1834
  %2770 = vmatpush.msra.mxu0 %v1833
  %2771 = vmatpush.msra.mxu0 %v1832
  %2772 = vmatpush.msra.mxu0 %v1831
  %2773 = vmatpush.msra.mxu0 %v1830
  %2774 = vmatpush.msra.mxu0 %v1829
  %2775 = vmatpush.msra.mxu0 %v1828
  %2776 = vmatmul.f32.gmra.mxu0 %v1239
  %v2777 = vpop.f32.mrf.mxu0
  %v2778 = vadd.f32 %v2758, %v2777
  %2779 = vdwg.mxu0
  %2780 = vmatpush.msra.mxu0 %v1859
  %2781 = vmatpush.msra.mxu0 %v1858
  %2782 = vmatpush.msra.mxu0 %v1857
  %2783 = vmatpush.msra.mxu0 %v1856
  %2784 = vmatpush.msra.mxu0 %v1855
  %2785 = vmatpush.msra.mxu0 %v1854
  %2786 = vmatpush.msra.mxu0 %v1853
  %2787 = vmatpush.msra.mxu0 %v1852
  %2788 = vmatpush.msra.mxu0 %v1851
  %2789 = vmatpush.msra.mxu0 %v1850
  %2790 = vmatpush.msra.mxu0 %v1849
  %2791 = vmatpush.msra.mxu0 %v1848
  %2792 = vmatpush.msra.mxu0 %v1847
  %2793 = vmatpush.msra.mxu0 %v1846
  %2794 = vmatpush.msra.mxu0 %v1845
  %2795 = vmatpush.msra.mxu0 %v1844
  %2796 = vmatmul.f32.gmra.mxu0 %v1240
  %v2797 = vpop.f32.mrf.mxu0
  %v2798 = vadd.f32 %v2778, %v2797
  %2799 = vdwg.mxu0
  %2800 = vmatpush.msra.mxu0 %v1875
  %2801 = vmatpush.msra.mxu0 %v1874
  %2802 = vmatpush.msra.mxu0 %v1873
  %2803 = vmatpush.msra.mxu0 %v1872
  %2804 = vmatpush.msra.mxu0 %v1871
  %2805 = vmatpush.msra.mxu0 %v1870
  %2806 = vmatpush.msra.mxu0 %v1869
  %2807 = vmatpush.msra.mxu0 %v1868
  %2808 = vmatpush.msra.mxu0 %v1867
  %2809 = vmatpush.msra.mxu0 %v1866
  %2810 = vmatpush.msra.mxu0 %v1865
  %2811 = vmatpush.msra.mxu0 %v1864
  %2812 = vmatpush.msra.mxu0 %v1863
  %2813 = vmatpush.msra.mxu0 %v1862
  %2814 = vmatpush.msra.mxu0 %v1861
  %2815 = vmatpush.msra.mxu0 %v1860
  %2816 = vmatmul.f32.gmra.mxu0 %v1241
  %v2817 = vpop.f32.mrf.mxu0
  %v2818 = vadd.f32 %v2798, %v2817
  %2819 = vdwg.mxu0
  %2820 = vmatpush.msra.mxu0 %v1891
  %2821 = vmatpush.msra.mxu0 %v1890
  %2822 = vmatpush.msra.mxu0 %v1889
  %2823 = vmatpush.msra.mxu0 %v1888
  %2824 = vmatpush.msra.mxu0 %v1887
  %2825 = vmatpush.msra.mxu0 %v1886
  %2826 = vmatpush.msra.mxu0 %v1885
  %2827 = vmatpush.msra.mxu0 %v1884
  %2828 = vmatpush.msra.mxu0 %v1883
  %2829 = vmatpush.msra.mxu0 %v1882
  %2830 = vmatpush.msra.mxu0 %v1881
  %2831 = vmatpush.msra.mxu0 %v1880
  %2832 = vmatpush.msra.mxu0 %v1879
  %2833 = vmatpush.msra.mxu0 %v1878
  %2834 = vmatpush.msra.mxu0 %v1877
  %2835 = vmatpush.msra.mxu0 %v1876
  %2836 = vmatmul.f32.gmra.mxu0 %v1242
  %v2837 = vpop.f32.mrf.mxu0
  %v2838 = vadd.f32 %v2818, %v2837
  %2839 = vdwg.mxu0
  %2840 = vmatpush.msra.mxu0 %v1907
  %2841 = vmatpush.msra.mxu0 %v1906
  %2842 = vmatpush.msra.mxu0 %v1905
  %2843 = vmatpush.msra.mxu0 %v1904
  %2844 = vmatpush.msra.mxu0 %v1903
  %2845 = vmatpush.msra.mxu0 %v1902
  %2846 = vmatpush.msra.mxu0 %v1901
  %2847 = vmatpush.msra.mxu0 %v1900
  %2848 = vmatpush.msra.mxu0 %v1899
  %2849 = vmatpush.msra.mxu0 %v1898
  %2850 = vmatpush.msra.mxu0 %v1897
  %2851 = vmatpush.msra.mxu0 %v1896
  %2852 = vmatpush.msra.mxu0 %v1895
  %2853 = vmatpush.msra.mxu0 %v1894
  %2854 = vmatpush.msra.mxu0 %v1893
  %2855 = vmatpush.msra.mxu0 %v1892
  %2856 = vmatmul.f32.gmra.mxu0 %v1243
  %v2857 = vpop.f32.mrf.mxu0
  %v2858 = vadd.f32 %v2838, %v2857
  %2859 = vdwg.mxu0
  %2860 = vmatpush.msra.mxu0 %v1923
  %2861 = vmatpush.msra.mxu0 %v1922
  %2862 = vmatpush.msra.mxu0 %v1921
  %2863 = vmatpush.msra.mxu0 %v1920
  %2864 = vmatpush.msra.mxu0 %v1919
  %2865 = vmatpush.msra.mxu0 %v1918
  %2866 = vmatpush.msra.mxu0 %v1917
  %2867 = vmatpush.msra.mxu0 %v1916
  %2868 = vmatpush.msra.mxu0 %v1915
  %2869 = vmatpush.msra.mxu0 %v1914
  %2870 = vmatpush.msra.mxu0 %v1913
  %2871 = vmatpush.msra.mxu0 %v1912
  %2872 = vmatpush.msra.mxu0 %v1911
  %2873 = vmatpush.msra.mxu0 %v1910
  %2874 = vmatpush.msra.mxu0 %v1909
  %2875 = vmatpush.msra.mxu0 %v1908
  %2876 = vmatmul.f32.gmra.mxu0 %v1244
  %v2877 = vpop.f32.mrf.mxu0
  %v2878 = vadd.f32 %v2858, %v2877
  %2879 = vdwg.mxu0
  %2880 = vmatpush.msra.mxu0 %v1939
  %2881 = vmatpush.msra.mxu0 %v1938
  %2882 = vmatpush.msra.mxu0 %v1937
  %2883 = vmatpush.msra.mxu0 %v1936
  %2884 = vmatpush.msra.mxu0 %v1935
  %2885 = vmatpush.msra.mxu0 %v1934
  %2886 = vmatpush.msra.mxu0 %v1933
  %2887 = vmatpush.msra.mxu0 %v1932
  %2888 = vmatpush.msra.mxu0 %v1931
  %2889 = vmatpush.msra.mxu0 %v1930
  %2890 = vmatpush.msra.mxu0 %v1929
  %2891 = vmatpush.msra.mxu0 %v1928
  %2892 = vmatpush.msra.mxu0 %v1927
  %2893 = vmatpush.msra.mxu0 %v1926
  %2894 = vmatpush.msra.mxu0 %v1925
  %2895 = vmatpush.msra.mxu0 %v1924
  %2896 = vmatmul.f32.gmra.mxu0 %v1245
  %v2897 = vpop.f32.mrf.mxu0
  %v2898 = vadd.f32 %v2878, %v2897
  %2899 = vdwg.mxu0
  %2900 = vmatpush.msra.mxu0 %v1955
  %2901 = vmatpush.msra.mxu0 %v1954
  %2902 = vmatpush.msra.mxu0 %v1953
  %2903 = vmatpush.msra.mxu0 %v1952
  %2904 = vmatpush.msra.mxu0 %v1951
  %2905 = vmatpush.msra.mxu0 %v1950
  %2906 = vmatpush.msra.mxu0 %v1949
  %2907 = vmatpush.msra.mxu0 %v1948
  %2908 = vmatpush.msra.mxu0 %v1947
  %2909 = vmatpush.msra.mxu0 %v1946
  %2910 = vmatpush.msra.mxu0 %v1945
  %2911 = vmatpush.msra.mxu0 %v1944
  %2912 = vmatpush.msra.mxu0 %v1943
  %2913 = vmatpush.msra.mxu0 %v1942
  %2914 = vmatpush.msra.mxu0 %v1941
  %2915 = vmatpush.msra.mxu0 %v1940
  %2916 = vmatmul.f32.gmra.mxu0 %v1246
  %v2917 = vpop.f32.mrf.mxu0
  %v2918 = vadd.f32 %v2898, %v2917
  %2919 = vdwg.mxu0
  %2920 = vmatpush.msra.mxu0 %v1971
  %2921 = vmatpush.msra.mxu0 %v1970
  %2922 = vmatpush.msra.mxu0 %v1969
  %2923 = vmatpush.msra.mxu0 %v1968
  %2924 = vmatpush.msra.mxu0 %v1967
  %2925 = vmatpush.msra.mxu0 %v1966
  %2926 = vmatpush.msra.mxu0 %v1965
  %2927 = vmatpush.msra.mxu0 %v1964
  %2928 = vmatpush.msra.mxu0 %v1963
  %2929 = vmatpush.msra.mxu0 %v1962
  %2930 = vmatpush.msra.mxu0 %v1961
  %2931 = vmatpush.msra.mxu0 %v1960
  %2932 = vmatpush.msra.mxu0 %v1959
  %2933 = vmatpush.msra.mxu0 %v1958
  %2934 = vmatpush.msra.mxu0 %v1957
  %2935 = vmatpush.msra.mxu0 %v1956
  %2936 = vmatmul.f32.gmra.mxu0 %v1247
  %v2937 = vpop.f32.mrf.mxu0
  %v2938 = vadd.f32 %v2918, %v2937
  %2939 = vdwg.mxu0
  %2940 = vmatpush.msra.mxu0 %v1987
  %2941 = vmatpush.msra.mxu0 %v1986
  %2942 = vmatpush.msra.mxu0 %v1985
  %2943 = vmatpush.msra.mxu0 %v1984
  %2944 = vmatpush.msra.mxu0 %v1983
  %2945 = vmatpush.msra.mxu0 %v1982
  %2946 = vmatpush.msra.mxu0 %v1981
  %2947 = vmatpush.msra.mxu0 %v1980
  %2948 = vmatpush.msra.mxu0 %v1979
  %2949 = vmatpush.msra.mxu0 %v1978
  %2950 = vmatpush.msra.mxu0 %v1977
  %2951 = vmatpush.msra.mxu0 %v1976
  %2952 = vmatpush.msra.mxu0 %v1975
  %2953 = vmatpush.msra.mxu0 %v1974
  %2954 = vmatpush.msra.mxu0 %v1973
  %2955 = vmatpush.msra.mxu0 %v1972
  %2956 = vmatmul.f32.gmra.mxu0 %v1248
  %v2957 = vpop.f32.mrf.mxu0
  %v2958 = vadd.f32 %v2938, %v2957
  %2959 = vdwg.mxu0
  %2960 = vmatpush.msra.mxu0 %v2003
  %2961 = vmatpush.msra.mxu0 %v2002
  %2962 = vmatpush.msra.mxu0 %v2001
  %2963 = vmatpush.msra.mxu0 %v2000
  %2964 = vmatpush.msra.mxu0 %v1999
  %2965 = vmatpush.msra.mxu0 %v1998
  %2966 = vmatpush.msra.mxu0 %v1997
  %2967 = vmatpush.msra.mxu0 %v1996
  %2968 = vmatpush.msra.mxu0 %v1995
  %2969 = vmatpush.msra.mxu0 %v1994
  %2970 = vmatpush.msra.mxu0 %v1993
  %2971 = vmatpush.msra.mxu0 %v1992
  %2972 = vmatpush.msra.mxu0 %v1991
  %2973 = vmatpush.msra.mxu0 %v1990
  %2974 = vmatpush.msra.mxu0 %v1989
  %2975 = vmatpush.msra.mxu0 %v1988
  %2976 = vmatmul.f32.gmra.mxu0 %v1249
  %v2977 = vpop.f32.mrf.mxu0
  %v2978 = vadd.f32 %v2958, %v2977
  %2979 = vdwg.mxu0
  %2980 = vmatpush.msra.mxu0 %v2019
  %2981 = vmatpush.msra.mxu0 %v2018
  %2982 = vmatpush.msra.mxu0 %v2017
  %2983 = vmatpush.msra.mxu0 %v2016
  %2984 = vmatpush.msra.mxu0 %v2015
  %2985 = vmatpush.msra.mxu0 %v2014
  %2986 = vmatpush.msra.mxu0 %v2013
  %2987 = vmatpush.msra.mxu0 %v2012
  %2988 = vmatpush.msra.mxu0 %v2011
  %2989 = vmatpush.msra.mxu0 %v2010
  %2990 = vmatpush.msra.mxu0 %v2009
  %2991 = vmatpush.msra.mxu0 %v2008
  %2992 = vmatpush.msra.mxu0 %v2007
  %2993 = vmatpush.msra.mxu0 %v2006
  %2994 = vmatpush.msra.mxu0 %v2005
  %2995 = vmatpush.msra.mxu0 %v2004
  %2996 = vmatmul.f32.gmra.mxu0 %v1250
  %v2997 = vpop.f32.mrf.mxu0
  %v2998 = vadd.f32 %v2978, %v2997
  %2999 = vdwg.mxu0
  %3000 = vmatpush.msra.mxu0 %v2035
  %3001 = vmatpush.msra.mxu0 %v2034
  %3002 = vmatpush.msra.mxu0 %v2033
  %3003 = vmatpush.msra.mxu0 %v2032
  %3004 = vmatpush.msra.mxu0 %v2031
  %3005 = vmatpush.msra.mxu0 %v2030
  %3006 = vmatpush.msra.mxu0 %v2029
  %3007 = vmatpush.msra.mxu0 %v2028
  %3008 = vmatpush.msra.mxu0 %v2027
  %3009 = vmatpush.msra.mxu0 %v2026
  %3010 = vmatpush.msra.mxu0 %v2025
  %3011 = vmatpush.msra.mxu0 %v2024
  %3012 = vmatpush.msra.mxu0 %v2023
  %3013 = vmatpush.msra.mxu0 %v2022
  %3014 = vmatpush.msra.mxu0 %v2021
  %3015 = vmatpush.msra.mxu0 %v2020
  %3016 = vmatmul.f32.gmra.mxu0 %v1251
  %v3017 = vpop.f32.mrf.mxu0
  %v3018 = vadd.f32 %v2998, %v3017
  %3019 = vdwg.mxu0
  %vm3020 = vcmask 80896
  %3021 = vst.msk [vmem:[%s5] sm:$0xff] %vm3020, %v3018
  // Predicated region
  $region22: #{basic_cnn_forward.1} parent=0 // pred_check
    _
  $region23: #{basic_cnn_forward.1} parent=0 // pred_check_branch
    %3023 = sbr.rel (0) target = $region25
  $region24: #{basic_cnn_forward.1} parent=0 // pred_region
    _
  $region25: #{basic_cnn_forward.1} parent=0 // pred_fallthru
    _
  // Predicated region
  $region26: #{basic_cnn_forward.1} parent=0 // pred_check
    _
  $region27: #{basic_cnn_forward.1} parent=0 // pred_check_branch
    %3025 = sbr.rel (0) target = $region29
  $region28: #{basic_cnn_forward.1} parent=0 // pred_region
    _
  $region29: #{basic_cnn_forward.1} parent=0 // pred_fallthru
    _

</llo_original>
